<compile_context>
chip_gen: v5e
topology: v5e:2x2
jax: 0.10.0
libtpu: 0.0.40
codegen_flags: <defaults>
</compile_context>

<pallas_src>
import functools

import jax
import jax.numpy as jnp
from jax.experimental import pallas as pl
from jax.experimental.pallas import tpu as pltpu

RESNET_FEAT = 512   # torchvision resnet34 fc.in_features
LANE = 128
EPS = 1e-12


def _round_up(x, m):
    return (x + m - 1) // m * m


# --------------------------------------------------------------------------
# Fused kernel.
# Grid = (batch_tiles [parallel], hw_tiles [arbitrary/reduction]).
#   step 0      : zero GAP accumulator + full question path -> qfeat scratch
#   every step  : conv3x3-as-matmul (bf16 MXU) + ReLU + masked spatial sum
#   last step   : GAP finalize + img fc + L2 norm + fusion head -> out
# --------------------------------------------------------------------------
def fused_vqa_kernel(patches_ref, conv_wt_ref, conv_b_ref,
                     img_fc_wt_ref, img_fc_b_ref,
                     embeds_ref, w_ih_ref, w_hh_ref, lstm_b_ref,
                     q_fc_wt_ref, q_fc_b_ref,
                     fc1_wt_ref, fc1_b_ref, fc2_wt_ref, fc2_b_ref,
                     out_ref, acc_ref, qfeat_ref, *, true_hw, hw_pad):
    hw_step = pl.program_id(1)
    n_hw = pl.num_programs(1)
    Bt, HW_TILE, KP = patches_ref.shape

    # ---- step 0: init accumulator + question path (independent of image,
    #      hidden under the pipelined conv / DMA steps) ----------------------
    @pl.when(hw_step == 0)
    def _init():
        acc_ref[...] = jnp.zeros_like(acc_ref)

        embeds = embeds_ref[...]                          # (T, Bt, H) f32
        T, Bq, H = embeds.shape
        L = w_ih_ref.shape[0]
        w_ih = w_ih_ref[...]                              # (L, H, 4H) bf16
        w_hh = w_hh_ref[...]                              # (L, H, 4H) bf16
        lb = lstm_b_ref[...]                              # (L, 1, 4H) f32 = b_ih+b_hh

        # hoisted layer-0 input projection: one (T*B, H) x (H, 4H) bf16 matmul
        x0 = jnp.dot(embeds.reshape(T * Bq, H).astype(jnp.bfloat16), w_ih[0],
                     preferred_element_type=jnp.float32) + lb[0]
        x0 = x0.reshape(T, Bq, 4 * H)

        # per-layer (B, H) carries kept as plain values (no .at[].set copies)
        h = [jnp.zeros((Bq, H), jnp.float32) for _ in range(L)]
        c = [jnp.zeros((Bq, H), jnp.float32) for _ in range(L)]

        for t in range(T):                    # static unroll (T small, fixed)
            x = None
            for l in range(L):
                if l == 0:
                    gates = x0[t] + jnp.dot(h[0].astype(jnp.bfloat16), w_hh[0],
                                            preferred_element_type=jnp.float32)
                else:
                    gates = (jnp.dot(x.astype(jnp.bfloat16), w_ih[l],
                                     preferred_element_type=jnp.float32)
                             + jnp.dot(h[l].astype(jnp.bfloat16), w_hh[l],
                                       preferred_element_type=jnp.float32)
                             + lb[l])                      # (B, 4H)
                # activations once on the full 4H-wide vreg, then cheap slices
                sg = jax.nn.sigmoid(gates)
                tg = jnp.tanh(gates)
                i_g = sg[:, 0 * H:1 * H]
                f_g = sg[:, 1 * H:2 * H]
                g_g = tg[:, 2 * H:3 * H]
                o_g = sg[:, 3 * H:4 * H]
                c[l] = f_g * c[l] + i_g * g_g
                h[l] = o_g * jnp.tanh(c[l])
                x = h[l]

        # cat((hidden, cell), dim=2).permute(1,0,2).reshape(B,-1) -> tanh -> fc
        # implemented as a sum of per-segment matmuls (no lane concat).
        wq = q_fc_wt_ref[...]                              # (2LH, E_PAD) bf16
        q_feat = jnp.broadcast_to(q_fc_b_ref[...], (Bq, q_fc_b_ref.shape[1]))
        for l in range(L):
            q_feat = q_feat + jnp.dot(jnp.tanh(h[l]).astype(jnp.bfloat16),
                                      wq[(2 * l) * H:(2 * l + 1) * H],
                                      preferred_element_type=jnp.float32)
            q_feat = q_feat + jnp.dot(jnp.tanh(c[l]).astype(jnp.bfloat16),
                                      wq[(2 * l + 1) * H:(2 * l + 2) * H],
                                      preferred_element_type=jnp.float32)
        qfeat_ref[...] = q_feat

    # ---- every step: image path (conv-as-matmul, ReLU, masked GAP sum) -----
    p = patches_ref[...].reshape(Bt * HW_TILE, KP)                     # bf16
    conv = jnp.dot(p, conv_wt_ref[...], preferred_element_type=jnp.float32)
    conv = jnp.maximum(conv + conv_b_ref[...], 0.0)
    conv = conv.reshape(Bt, HW_TILE, RESNET_FEAT)
    if hw_pad != true_hw:   # static: only traced when the HW axis was padded
        row = (hw_step * HW_TILE
               + jax.lax.broadcasted_iota(jnp.int32, (1, HW_TILE, 1), 1))
        conv = jnp.where(row < true_hw, conv, 0.0)
    acc_ref[...] += conv.sum(axis=1)                                   # (Bt, 512)

    # ---- last step: GAP finalize + img fc + L2 norm + fusion head ----------
    @pl.when(hw_step == n_hw - 1)
    def _finalize():
        feat = acc_ref[...] * (1.0 / true_hw)             # global average pool
        emb = jnp.dot(feat.astype(jnp.bfloat16), img_fc_wt_ref[...],
                      preferred_element_type=jnp.float32) + img_fc_b_ref[...]
        inv_norm = jax.lax.rsqrt(jnp.sum(emb * emb, axis=1, keepdims=True) + EPS)
        img_feat = emb * inv_norm                                      # (Bt, E_PAD)

        # mul -> tanh -> fc1 -> tanh -> fc2   (dropout = inference identity)
        combined = jnp.tanh(img_feat * qfeat_ref[...])
        h1 = jnp.tanh(jnp.dot(combined.astype(jnp.bfloat16), fc1_wt_ref[...],
                              preferred_element_type=jnp.float32) + fc1_b_ref[...])
        out_ref[...] = (jnp.dot(h1.astype(jnp.bfloat16), fc2_wt_ref[...],
                                preferred_element_type=jnp.float32) + fc2_b_ref[...])


# --------------------------------------------------------------------------
# Glue
# --------------------------------------------------------------------------
def im2col_3x3(x, k_pad, hw_pad):
    """x: (B, C, H, W), 3x3 / stride 1 / pad 1 -> (B, hw_pad, k_pad) bf16."""
    B, C, H, W = x.shape
    xp = jnp.pad(x, ((0, 0), (0, 0), (1, 1), (1, 1)))
    taps = [xp[:, :, di:di + H, dj:dj + W] for di in range(3) for dj in range(3)]
    patches = jnp.stack(taps, axis=2)                                  # (B, C, 9, H, W)
    patches = patches.transpose(0, 3, 4, 1, 2).reshape(B, H * W, C * 9)
    patches = jnp.pad(patches, ((0, 0), (0, hw_pad - H * W), (0, k_pad - C * 9)))
    return patches.astype(jnp.bfloat16)


def init_params(key, *, vocab_size, word_embedding_dim, answer_vocab_size,
                hidden_dim, num_layers, embedding_dim, in_channels):
    assert word_embedding_dim == hidden_dim, \
        "kernel stacks per-layer LSTM weights: word_embedding_dim must equal hidden_dim"
    E, H, L, A = embedding_dim, hidden_dim, num_layers, answer_vocab_size
    K = in_channels * 9
    K_PAD = _round_up(K, 8)           # 27 -> 32 (NOT 128: keeps the patch stream lean)
    E_PAD = _round_up(E, LANE)
    A_PAD = _round_up(A, LANE)

    ks = jax.random.split(key, 16)
    s = 0.05
    n = lambda k, shape: s * jax.random.normal(k, shape, jnp.float32)
    bf = lambda x: x.astype(jnp.bfloat16)

    def pad2(w, rows, cols):
        return jnp.pad(w, ((0, rows - w.shape[0]), (0, cols - w.shape[1])))

    return {
        # frozen pretrained word embeddings (synthetic)
        "word_embeddings": n(ks[0], (vocab_size, word_embedding_dim)),
        # backbone stand-in: conv3x3 (C*9 -> 512), K padded to 32 with zeros
        "conv_wt": bf(pad2(n(ks[1], (K, RESNET_FEAT)), K_PAD, RESNET_FEAT)),
        "conv_b": n(ks[2], (1, RESNET_FEAT)),
        # ImageEncoder.model.fc : Linear(512, E), output padded to 128 lanes
        "img_fc_wt": bf(pad2(n(ks[3], (RESNET_FEAT, E)), RESNET_FEAT, E_PAD)),
        "img_fc_b": pad2(n(ks[4], (1, E)), 1, E_PAD),
        # LSTM (L layers, input H, hidden H); pre-transposed; b = b_ih + b_hh
        "lstm_w_ih_t": bf(n(ks[5], (L, H, 4 * H))),
        "lstm_w_hh_t": bf(n(ks[6], (L, H, 4 * H))),
        "lstm_b": n(ks[7], (L, 1, 4 * H)),
        # QuestionEncoder.fc : Linear(2*L*H, E), output padded to 128 lanes
        "q_fc_wt": bf(pad2(n(ks[8], (2 * L * H, E)), 2 * L * H, E_PAD)),
        "q_fc_b": pad2(n(ks[9], (1, E)), 1, E_PAD),
        # VisualQAModel.fc1 / fc2, padded to 128-lane in/out (zero padding)
        "fc1_wt": bf(pad2(n(ks[10], (E, A)), E_PAD, A_PAD)),
        "fc1_b": pad2(n(ks[11], (1, A)), 1, A_PAD),
        "fc2_wt": bf(pad2(n(ks[12], (A, A)), A_PAD, A_PAD)),
        "fc2_b": pad2(n(ks[13], (1, A)), 1, A_PAD),
    }


@functools.partial(jax.jit, static_argnames=("answer_vocab_size",))
def visual_qa_forward(params, image, question, *, answer_vocab_size):
    K_PAD = params["conv_wt"].shape[0]
    E_PAD = params["img_fc_wt"].shape[1]
    A_PAD = params["fc1_wt"].shape[1]
    L, H, _ = params["lstm_w_ih_t"].shape

    B, C, HI, WI = image.shape
    HW = HI * WI

    # ---- batch tiling: leading "parallel" axis (2 tiles feed both v7x TCs) --
    B_TILE = B // 2 if (B % 16 == 0) else B
    n_b = B // B_TILE

    # ---- HW tiling: fat 16-aligned tiles, padded + masked when needed -------
    MAX_ROWS = 2048                                  # B_TILE*HW_TILE rows / step
    hw_cap = max(16, (MAX_ROWS // max(B_TILE, 1)) // 16 * 16)
    HW_PAD = _round_up(HW, 16)
    if HW_PAD <= hw_cap:
        HW_TILE = HW_PAD
    else:
        HW_TILE = hw_cap
        HW_PAD = _round_up(HW_PAD, HW_TILE)
    n_hw = HW_PAD // HW_TILE

    patches = im2col_3x3(image, K_PAD, HW_PAD)       # (B, HW_PAD, K_PAD) bf16

    embeds = params["word_embeddings"][question]     # embedding gather (XLA glue)
    embeds = jnp.transpose(embeds, (1, 0, 2))        # time-major (T, B, H)
    T = embeds.shape[0]
    assert embeds.shape[2] == H, "word_embedding_dim must equal hidden_dim"

    # advisory cost estimate so XLA can overlap the gather / im2col around us
    flops = (2 * B * HW_PAD * K_PAD * RESNET_FEAT
             + 2 * B * RESNET_FEAT * E_PAD
             + 2 * 2 * T * L * B * H * 4 * H
             + 2 * B * 2 * L * H * E_PAD
             + 2 * B * E_PAD * A_PAD + 2 * B * A_PAD * A_PAD)
    transcendentals = T * L * B * 9 * H + 3 * B * E_PAD + B * A_PAD
    param_bytes = sum(int(v.size) * v.dtype.itemsize
                      for k_, v in params.items() if k_ != "word_embeddings")
    bytes_accessed = (int(patches.size) * 2 + int(embeds.size) * 4
                      + param_bytes + B * A_PAD * 4)

    grid_spec = pltpu.PrefetchScalarGridSpec(
        num_scalar_prefetch=0,
        grid=(n_b, n_hw),
        in_specs=[
            pl.BlockSpec((B_TILE, HW_TILE, K_PAD), lambda b, i: (b, i, 0)),  # patches
            pl.BlockSpec((K_PAD, RESNET_FEAT), lambda b, i: (0, 0)),         # conv_wt
            pl.BlockSpec((1, RESNET_FEAT), lambda b, i: (0, 0)),             # conv_b
            pl.BlockSpec((RESNET_FEAT, E_PAD), lambda b, i: (0, 0)),         # img_fc_wt
            pl.BlockSpec((1, E_PAD), lambda b, i: (0, 0)),                   # img_fc_b
            pl.BlockSpec((T, B_TILE, H), lambda b, i: (0, b, 0)),            # embeds
            pl.BlockSpec((L, H, 4 * H), lambda b, i: (0, 0, 0)),             # lstm w_ih^T
            pl.BlockSpec((L, H, 4 * H), lambda b, i: (0, 0, 0)),             # lstm w_hh^T
            pl.BlockSpec((L, 1, 4 * H), lambda b, i: (0, 0, 0)),             # lstm bias
            pl.BlockSpec((2 * L * H, E_PAD), lambda b, i: (0, 0)),           # q_fc_wt
            pl.BlockSpec((1, E_PAD), lambda b, i: (0, 0)),                   # q_fc_b
            pl.BlockSpec((E_PAD, A_PAD), lambda b, i: (0, 0)),               # fc1_wt
            pl.BlockSpec((1, A_PAD), lambda b, i: (0, 0)),                   # fc1_b
            pl.BlockSpec((A_PAD, A_PAD), lambda b, i: (0, 0)),               # fc2_wt
            pl.BlockSpec((1, A_PAD), lambda b, i: (0, 0)),                   # fc2_b
        ],
        out_specs=pl.BlockSpec((B_TILE, A_PAD), lambda b, i: (b, 0)),
        scratch_shapes=[pltpu.VMEM((B_TILE, RESNET_FEAT), jnp.float32),      # GAP acc
                        pltpu.VMEM((B_TILE, E_PAD), jnp.float32)],           # q_feat
    )

    logits_pad = pl.pallas_call(
        functools.partial(fused_vqa_kernel, true_hw=HW, hw_pad=HW_PAD),
        out_shape=jax.ShapeDtypeStruct((B, A_PAD), jnp.float32),
        grid_spec=grid_spec,
        compiler_params=pltpu.CompilerParams(
            dimension_semantics=("parallel", "arbitrary"),  # batch || , HW reduction
            vmem_limit_bytes=32 * 1024 * 1024),             # safe on v5e/v6e/v7x
        cost_estimate=pl.CostEstimate(flops=flops,
                                      transcendentals=transcendentals,
                                      bytes_accessed=bytes_accessed),
    )(patches, params["conv_wt"], params["conv_b"],
      params["img_fc_wt"], params["img_fc_b"],
      embeds, params["lstm_w_ih_t"], params["lstm_w_hh_t"], params["lstm_b"],
      params["q_fc_wt"], params["q_fc_b"],
      params["fc1_wt"], params["fc1_b"], params["fc2_wt"], params["fc2_b"])

    return logits_pad[:, :answer_vocab_size]


# --------------------------------------------------------------------------
# Pure-JAX reference with identical math (for the correctness check).
# --------------------------------------------------------------------------
def reference_forward(params, image, question, answer_vocab_size):
    K_PAD = params["conv_wt"].shape[0]
    B, C, HI, WI = image.shape
    HW = HI * WI
    patches = im2col_3x3(image, K_PAD, HW)                      # bf16, no HW pad
    conv = jnp.dot(patches.reshape(B * HW, K_PAD), params["conv_wt"],
                   preferred_element_type=jnp.float32) + params["conv_b"]
    conv = jnp.maximum(conv, 0.0)
    feat = conv.reshape(B, HW, RESNET_FEAT).mean(axis=1)
    emb = jnp.dot(feat.astype(jnp.bfloat16), params["img_fc_wt"],
                  preferred_element_type=jnp.float32) + params["img_fc_b"]
    img_feat = emb * jax.lax.rsqrt(jnp.sum(emb * emb, axis=1, keepdims=True) + EPS)

    embeds = params["word_embeddings"][question]                # (B, T, H)
    L, H = params["lstm_w_ih_t"].shape[0], params["lstm_w_ih_t"].shape[1]
    T = embeds.shape[1]
    h = jnp.zeros((L, B, H), jnp.float32)
    c = jnp.zeros((L, B, H), jnp.float32)
    for t in range(T):
        x = embeds[:, t, :]
        for l in range(L):
            gates = (jnp.dot(x.astype(jnp.bfloat16), params["lstm_w_ih_t"][l],
                             preferred_element_type=jnp.float32)
                     + jnp.dot(h[l].astype(jnp.bfloat16), params["lstm_w_hh_t"][l],
                               preferred_element_type=jnp.float32)
                     + params["lstm_b"][l])
            i = jax.nn.sigmoid(gates[:, :H])
            f = jax.nn.sigmoid(gates[:, H:2 * H])
            g = jnp.tanh(gates[:, 2 * H:3 * H])
            o = jax.nn.sigmoid(gates[:, 3 * H:])
            c = c.at[l].set(f * c[l] + i * g)
            h = h.at[l].set(o * jnp.tanh(c[l]))
            x = h[l]
    feats = jnp.tanh(jnp.concatenate(
        [jnp.concatenate([h[l], c[l]], axis=-1) for l in range(L)], axis=-1))
    q_feat = jnp.dot(feats.astype(jnp.bfloat16), params["q_fc_wt"],
                     preferred_element_type=jnp.float32) + params["q_fc_b"]

    combined = jnp.tanh(img_feat * q_feat)
    h1 = jnp.tanh(jnp.dot(combined.astype(jnp.bfloat16), params["fc1_wt"],
                          preferred_element_type=jnp.float32) + params["fc1_b"])
    logits = jnp.dot(h1.astype(jnp.bfloat16), params["fc2_wt"],
                     preferred_element_type=jnp.float32) + params["fc2_b"]
    return logits[:, :answer_vocab_size]


if __name__ == "__main__":
    B, C, HI, WI = 2, 3, 16, 16
    T = 8
    vocab_size = 50
    word_embedding_dim = 32
    hidden_dim = 32
    num_layers = 2
    embedding_dim = 32
    answer_vocab_size = 64

    root = jax.random.PRNGKey(0)
    k_params, k_img, k_q = jax.random.split(root, 3)

    params = init_params(
        k_params, vocab_size=vocab_size, word_embedding_dim=word_embedding_dim,
        answer_vocab_size=answer_vocab_size, hidden_dim=hidden_dim,
        num_layers=num_layers, embedding_dim=embedding_dim, in_channels=C)

    image = jax.random.normal(k_img, (B, C, HI, WI), jnp.float32)
    question = jax.random.randint(k_q, (B, T), 0, vocab_size, dtype=jnp.int32)

    out = jax.block_until_ready(
        visual_qa_forward(params, image, question,
                          answer_vocab_size=answer_vocab_size))
    assert out.shape == (B, answer_vocab_size), out.shape
    assert bool(jnp.all(jnp.isfinite(out)))

    ref = reference_forward(params, image, question, answer_vocab_size)
    if not bool(jnp.allclose(out, ref, atol=2e-2, rtol=2e-2)):
        raise AssertionError(
            f"Pallas output mismatch vs reference: max abs diff "
            f"{float(jnp.max(jnp.abs(out - ref)))}")

    print("KERNEL_OK")
</pallas_src>

<mosaic_0001>
module attributes {stable_mosaic.version = 11 : i64} {
  func.func @fused_vqa_kernel(%arg0: i32, %arg1: i32, %arg2: memref<2x256x32xbf16, #tpu.memory_space<vmem>>, %arg3: memref<32x512xbf16, #tpu.memory_space<vmem>>, %arg4: memref<1x512xf32, #tpu.memory_space<vmem>>, %arg5: memref<512x128xbf16, #tpu.memory_space<vmem>>, %arg6: memref<1x128xf32, #tpu.memory_space<vmem>>, %arg7: memref<8x2x32xf32, #tpu.memory_space<vmem>>, %arg8: memref<2x32x128xbf16, #tpu.memory_space<vmem>>, %arg9: memref<2x32x128xbf16, #tpu.memory_space<vmem>>, %arg10: memref<2x1x128xf32, #tpu.memory_space<vmem>>, %arg11: memref<128x128xbf16, #tpu.memory_space<vmem>>, %arg12: memref<1x128xf32, #tpu.memory_space<vmem>>, %arg13: memref<128x128xbf16, #tpu.memory_space<vmem>>, %arg14: memref<1x128xf32, #tpu.memory_space<vmem>>, %arg15: memref<128x128xbf16, #tpu.memory_space<vmem>>, %arg16: memref<1x128xf32, #tpu.memory_space<vmem>>, %arg17: memref<2x128xf32, #tpu.memory_space<vmem>>, %arg18: memref<2x512xf32, #tpu.memory_space<vmem>>, %arg19: memref<2x128xf32, #tpu.memory_space<vmem>>) attributes {dimension_semantics = [#tpu.dimension_semantics<parallel>, #tpu.dimension_semantics<arbitrary>], iteration_bounds = array<i64: 1, 1>, scalar_prefetch = 0 : i64, scratch_operands = 2 : i64, tpu.core_type = #tpu.core_type<tc>, window_params = [{transform_indices = @transform_0, window_bounds = array<i64: 2, 256, 32>}, {pipeline_mode = #tpu.pipeline_mode<synchronous>, transform_indices = @transform_1, window_bounds = array<i64: 32, 512>}, {pipeline_mode = #tpu.pipeline_mode<synchronous>, transform_indices = @transform_2, window_bounds = array<i64: 1, 512>}, {pipeline_mode = #tpu.pipeline_mode<synchronous>, transform_indices = @transform_3, window_bounds = array<i64: 512, 128>}, {pipeline_mode = #tpu.pipeline_mode<synchronous>, transform_indices = @transform_4, window_bounds = array<i64: 1, 128>}, {transform_indices = @transform_5, window_bounds = array<i64: 8, 2, 32>}, {pipeline_mode = #tpu.pipeline_mode<synchronous>, transform_indices = @transform_6, window_bounds = array<i64: 2, 32, 128>}, {pipeline_mode = #tpu.pipeline_mode<synchronous>, transform_indices = @transform_7, window_bounds = array<i64: 2, 32, 128>}, {pipeline_mode = #tpu.pipeline_mode<synchronous>, transform_indices = @transform_8, window_bounds = array<i64: 2, 1, 128>}, {pipeline_mode = #tpu.pipeline_mode<synchronous>, transform_indices = @transform_9, window_bounds = array<i64: 128, 128>}, {pipeline_mode = #tpu.pipeline_mode<synchronous>, transform_indices = @transform_10, window_bounds = array<i64: 1, 128>}, {pipeline_mode = #tpu.pipeline_mode<synchronous>, transform_indices = @transform_11, window_bounds = array<i64: 128, 128>}, {pipeline_mode = #tpu.pipeline_mode<synchronous>, transform_indices = @transform_12, window_bounds = array<i64: 1, 128>}, {pipeline_mode = #tpu.pipeline_mode<synchronous>, transform_indices = @transform_13, window_bounds = array<i64: 128, 128>}, {pipeline_mode = #tpu.pipeline_mode<synchronous>, transform_indices = @transform_14, window_bounds = array<i64: 1, 128>}, {transform_indices = @transform_15, window_bounds = array<i64: 2, 128>}]} {
    %c0_i32 = arith.constant 0 : i32
    %0 = arith.cmpi eq, %arg1, %c0_i32 : i32
    %1 = arith.extui %0 : i1 to i32
    %c0_i32_0 = arith.constant 0 : i32
    %2 = arith.cmpi ne, %1, %c0_i32_0 : i32
    scf.if %2 {
      %cst_15 = arith.constant 0.000000e+00 : f32
      %20 = vector.broadcast %cst_15 : f32 to vector<2x512xf32>
      %c0_16 = arith.constant 0 : index
      %c0_17 = arith.constant 0 : index
      %21 = vector.load %arg18[%c0_16, %c0_17] : memref<2x512xf32, #tpu.memory_space<vmem>>, vector<2x512xf32>
      tpu.vector_store %arg18[%c0_16, %c0_17], %20 {strides = array<i32>} : memref<2x512xf32, #tpu.memory_space<vmem>>, vector<2x512xf32>,
      %c0_18 = arith.constant 0 : index
      %c0_19 = arith.constant 0 : index
      %c0_20 = arith.constant 0 : index
      %22 = vector.load %arg7[%c0_18, %c0_19, %c0_20] : memref<8x2x32xf32, #tpu.memory_space<vmem>>, vector<8x2x32xf32>
      %c0_21 = arith.constant 0 : index
      %c0_22 = arith.constant 0 : index
      %c0_23 = arith.constant 0 : index
      %23 = vector.load %arg8[%c0_21, %c0_22, %c0_23] : memref<2x32x128xbf16, #tpu.memory_space<vmem>>, vector<2x32x128xbf16>
      %c0_24 = arith.constant 0 : index
      %c0_25 = arith.constant 0 : index
      %c0_26 = arith.constant 0 : index
      %24 = vector.load %arg9[%c0_24, %c0_25, %c0_26] : memref<2x32x128xbf16, #tpu.memory_space<vmem>>, vector<2x32x128xbf16>
      %c0_27 = arith.constant 0 : index
      %c0_28 = arith.constant 0 : index
      %c0_29 = arith.constant 0 : index
      %25 = vector.load %arg10[%c0_27, %c0_28, %c0_29] : memref<2x1x128xf32, #tpu.memory_space<vmem>>, vector<2x1x128xf32>
      %26 = vector.shape_cast %22 : vector<8x2x32xf32> to vector<16x32xf32>
      %27 = arith.truncf %26 : vector<16x32xf32> to vector<16x32xbf16>
      %28 = vector.extract_strided_slice %23 {offsets = [0, 0, 0], sizes = [1, 32, 128], strides = [1, 1, 1]} : vector<2x32x128xbf16> to vector<1x32x128xbf16>
      %29 = vector.shape_cast %28 : vector<1x32x128xbf16> to vector<32x128xbf16>
      %cst_30 = arith.constant dense<0.000000e+00> : vector<16x128xf32>
      %30 = tpu.matmul %27, %29, %cst_30 {dimension_numbers = #tpu.dot_dimension_numbers<[1], [0], [0], [1], [0, 0, 1, 1], [], []>} : vector<16x32xbf16>, vector<32x128xbf16>, vector<16x128xf32> -> vector<16x128xf32>
      %31 = vector.extract_strided_slice %25 {offsets = [0, 0, 0], sizes = [1, 1, 128], strides = [1, 1, 1]} : vector<2x1x128xf32> to vector<1x1x128xf32>
      %32 = vector.shape_cast %31 : vector<1x1x128xf32> to vector<1x128xf32>
      %33 = vector.broadcast %32 : vector<1x128xf32> to vector<16x128xf32>
      %34 = arith.addf %30, %33 : vector<16x128xf32>
      %35 = vector.shape_cast %34 : vector<16x128xf32> to vector<8x2x128xf32>
      %cst_31 = arith.constant 0.000000e+00 : f32
      %36 = vector.broadcast %cst_31 : f32 to vector<2x32xf32>
      %cst_32 = arith.constant 0.000000e+00 : f32
      %37 = vector.broadcast %cst_32 : f32 to vector<2x32xf32>
      %cst_33 = arith.constant 0.000000e+00 : f32
      %38 = vector.broadcast %cst_33 : f32 to vector<2x32xf32>
      %cst_34 = arith.constant 0.000000e+00 : f32
      %39 = vector.broadcast %cst_34 : f32 to vector<2x32xf32>
      %40 = vector.extract_strided_slice %35 {offsets = [0, 0, 0], sizes = [1, 2, 128], strides = [1, 1, 1]} : vector<8x2x128xf32> to vector<1x2x128xf32>
      %41 = vector.shape_cast %40 : vector<1x2x128xf32> to vector<2x128xf32>
      %42 = arith.truncf %36 : vector<2x32xf32> to vector<2x32xbf16>
      %43 = vector.extract_strided_slice %24 {offsets = [0, 0, 0], sizes = [1, 32, 128], strides = [1, 1, 1]} : vector<2x32x128xbf16> to vector<1x32x128xbf16>
      %44 = vector.shape_cast %43 : vector<1x32x128xbf16> to vector<32x128xbf16>
      %cst_35 = arith.constant dense<0.000000e+00> : vector<2x128xf32>
      %45 = tpu.matmul %42, %44, %cst_35 {dimension_numbers = #tpu.dot_dimension_numbers<[1], [0], [0], [1], [0, 0, 1, 1], [], []>} : vector<2x32xbf16>, vector<32x128xbf16>, vector<2x128xf32> -> vector<2x128xf32>
      %46 = arith.addf %41, %45 : vector<2x128xf32>
      %47 = arith.negf %46 : vector<2x128xf32>
      %48 = math.exp %47 : vector<2x128xf32>
      %cst_36 = arith.constant 1.000000e+00 : f32
      %49 = vector.broadcast %cst_36 : f32 to vector<2x128xf32>
      %50 = arith.addf %49, %48 : vector<2x128xf32>
      %51 = arith.divf %49, %50 : vector<2x128xf32>
      %52 = math.tanh %46 : vector<2x128xf32>
      %53 = vector.extract_strided_slice %51 {offsets = [0, 0], sizes = [2, 32], strides = [1, 1]} : vector<2x128xf32> to vector<2x32xf32>
      %54 = vector.extract_strided_slice %51 {offsets = [0, 32], sizes = [2, 32], strides = [1, 1]} : vector<2x128xf32> to vector<2x32xf32>
      %55 = vector.extract_strided_slice %52 {offsets = [0, 64], sizes = [2, 32], strides = [1, 1]} : vector<2x128xf32> to vector<2x32xf32>
      %56 = vector.extract_strided_slice %51 {offsets = [0, 96], sizes = [2, 32], strides = [1, 1]} : vector<2x128xf32> to vector<2x32xf32>
      %57 = arith.mulf %54, %38 : vector<2x32xf32>
      %58 = arith.mulf %53, %55 : vector<2x32xf32>
      %59 = arith.addf %57, %58 : vector<2x32xf32>
      %60 = math.tanh %59 : vector<2x32xf32>
      %61 = arith.mulf %56, %60 : vector<2x32xf32>
      %62 = arith.truncf %61 : vector<2x32xf32> to vector<2x32xbf16>
      %63 = vector.extract_strided_slice %23 {offsets = [1, 0, 0], sizes = [1, 32, 128], strides = [1, 1, 1]} : vector<2x32x128xbf16> to vector<1x32x128xbf16>
      %64 = vector.shape_cast %63 : vector<1x32x128xbf16> to vector<32x128xbf16>
      %cst_37 = arith.constant dense<0.000000e+00> : vector<2x128xf32>
      %65 = tpu.matmul %62, %64, %cst_37 {dimension_numbers = #tpu.dot_dimension_numbers<[1], [0], [0], [1], [0, 0, 1, 1], [], []>} : vector<2x32xbf16>, vector<32x128xbf16>, vector<2x128xf32> -> vector<2x128xf32>
      %66 = arith.truncf %37 : vector<2x32xf32> to vector<2x32xbf16>
      %67 = vector.extract_strided_slice %24 {offsets = [1, 0, 0], sizes = [1, 32, 128], strides = [1, 1, 1]} : vector<2x32x128xbf16> to vector<1x32x128xbf16>
      %68 = vector.shape_cast %67 : vector<1x32x128xbf16> to vector<32x128xbf16>
      %cst_38 = arith.constant dense<0.000000e+00> : vector<2x128xf32>
      %69 = tpu.matmul %66, %68, %cst_38 {dimension_numbers = #tpu.dot_dimension_numbers<[1], [0], [0], [1], [0, 0, 1, 1], [], []>} : vector<2x32xbf16>, vector<32x128xbf16>, vector<2x128xf32> -> vector<2x128xf32>
      %70 = arith.addf %65, %69 : vector<2x128xf32>
      %71 = vector.extract_strided_slice %25 {offsets = [1, 0, 0], sizes = [1, 1, 128], strides = [1, 1, 1]} : vector<2x1x128xf32> to vector<1x1x128xf32>
      %72 = vector.shape_cast %71 : vector<1x1x128xf32> to vector<1x128xf32>
      %73 = vector.broadcast %72 : vector<1x128xf32> to vector<2x128xf32>
      %74 = arith.addf %70, %73 : vector<2x128xf32>
      %75 = arith.negf %74 : vector<2x128xf32>
      %76 = math.exp %75 : vector<2x128xf32>
      %cst_39 = arith.constant 1.000000e+00 : f32
      %77 = vector.broadcast %cst_39 : f32 to vector<2x128xf32>
      %78 = arith.addf %77, %76 : vector<2x128xf32>
      %79 = arith.divf %77, %78 : vector<2x128xf32>
      %80 = math.tanh %74 : vector<2x128xf32>
      %81 = vector.extract_strided_slice %79 {offsets = [0, 0], sizes = [2, 32], strides = [1, 1]} : vector<2x128xf32> to vector<2x32xf32>
      %82 = vector.extract_strided_slice %79 {offsets = [0, 32], sizes = [2, 32], strides = [1, 1]} : vector<2x128xf32> to vector<2x32xf32>
      %83 = vector.extract_strided_slice %80 {offsets = [0, 64], sizes = [2, 32], strides = [1, 1]} : vector<2x128xf32> to vector<2x32xf32>
      %84 = vector.extract_strided_slice %79 {offsets = [0, 96], sizes = [2, 32], strides = [1, 1]} : vector<2x128xf32> to vector<2x32xf32>
      %85 = arith.mulf %82, %39 : vector<2x32xf32>
      %86 = arith.mulf %81, %83 : vector<2x32xf32>
      %87 = arith.addf %85, %86 : vector<2x32xf32>
      %88 = math.tanh %87 : vector<2x32xf32>
      %89 = arith.mulf %84, %88 : vector<2x32xf32>
      %90 = vector.extract_strided_slice %35 {offsets = [1, 0, 0], sizes = [1, 2, 128], strides = [1, 1, 1]} : vector<8x2x128xf32> to vector<1x2x128xf32>
      %91 = vector.shape_cast %90 : vector<1x2x128xf32> to vector<2x128xf32>
      %92 = arith.truncf %61 : vector<2x32xf32> to vector<2x32xbf16>
      %93 = vector.extract_strided_slice %24 {offsets = [0, 0, 0], sizes = [1, 32, 128], strides = [1, 1, 1]} : vector<2x32x128xbf16> to vector<1x32x128xbf16>
      %94 = vector.shape_cast %93 : vector<1x32x128xbf16> to vector<32x128xbf16>
      %cst_40 = arith.constant dense<0.000000e+00> : vector<2x128xf32>
      %95 = tpu.matmul %92, %94, %cst_40 {dimension_numbers = #tpu.dot_dimension_numbers<[1], [0], [0], [1], [0, 0, 1, 1], [], []>} : vector<2x32xbf16>, vector<32x128xbf16>, vector<2x128xf32> -> vector<2x128xf32>
      %96 = arith.addf %91, %95 : vector<2x128xf32>
      %97 = arith.negf %96 : vector<2x128xf32>
      %98 = math.exp %97 : vector<2x128xf32>
      %cst_41 = arith.constant 1.000000e+00 : f32
      %99 = vector.broadcast %cst_41 : f32 to vector<2x128xf32>
      %100 = arith.addf %99, %98 : vector<2x128xf32>
      %101 = arith.divf %99, %100 : vector<2x128xf32>
      %102 = math.tanh %96 : vector<2x128xf32>
      %103 = vector.extract_strided_slice %101 {offsets = [0, 0], sizes = [2, 32], strides = [1, 1]} : vector<2x128xf32> to vector<2x32xf32>
      %104 = vector.extract_strided_slice %101 {offsets = [0, 32], sizes = [2, 32], strides = [1, 1]} : vector<2x128xf32> to vector<2x32xf32>
      %105 = vector.extract_strided_slice %102 {offsets = [0, 64], sizes = [2, 32], strides = [1, 1]} : vector<2x128xf32> to vector<2x32xf32>
      %106 = vector.extract_strided_slice %101 {offsets = [0, 96], sizes = [2, 32], strides = [1, 1]} : vector<2x128xf32> to vector<2x32xf32>
      %107 = arith.mulf %104, %59 : vector<2x32xf32>
      %108 = arith.mulf %103, %105 : vector<2x32xf32>
      %109 = arith.addf %107, %108 : vector<2x32xf32>
      %110 = math.tanh %109 : vector<2x32xf32>
      %111 = arith.mulf %106, %110 : vector<2x32xf32>
      %112 = arith.truncf %111 : vector<2x32xf32> to vector<2x32xbf16>
      %113 = vector.extract_strided_slice %23 {offsets = [1, 0, 0], sizes = [1, 32, 128], strides = [1, 1, 1]} : vector<2x32x128xbf16> to vector<1x32x128xbf16>
      %114 = vector.shape_cast %113 : vector<1x32x128xbf16> to vector<32x128xbf16>
      %cst_42 = arith.constant dense<0.000000e+00> : vector<2x128xf32>
      %115 = tpu.matmul %112, %114, %cst_42 {dimension_numbers = #tpu.dot_dimension_numbers<[1], [0], [0], [1], [0, 0, 1, 1], [], []>} : vector<2x32xbf16>, vector<32x128xbf16>, vector<2x128xf32> -> vector<2x128xf32>
      %116 = arith.truncf %89 : vector<2x32xf32> to vector<2x32xbf16>
      %117 = vector.extract_strided_slice %24 {offsets = [1, 0, 0], sizes = [1, 32, 128], strides = [1, 1, 1]} : vector<2x32x128xbf16> to vector<1x32x128xbf16>
      %118 = vector.shape_cast %117 : vector<1x32x128xbf16> to vector<32x128xbf16>
      %cst_43 = arith.constant dense<0.000000e+00> : vector<2x128xf32>
      %119 = tpu.matmul %116, %118, %cst_43 {dimension_numbers = #tpu.dot_dimension_numbers<[1], [0], [0], [1], [0, 0, 1, 1], [], []>} : vector<2x32xbf16>, vector<32x128xbf16>, vector<2x128xf32> -> vector<2x128xf32>
      %120 = arith.addf %115, %119 : vector<2x128xf32>
      %121 = vector.extract_strided_slice %25 {offsets = [1, 0, 0], sizes = [1, 1, 128], strides = [1, 1, 1]} : vector<2x1x128xf32> to vector<1x1x128xf32>
      %122 = vector.shape_cast %121 : vector<1x1x128xf32> to vector<1x128xf32>
      %123 = vector.broadcast %122 : vector<1x128xf32> to vector<2x128xf32>
      %124 = arith.addf %120, %123 : vector<2x128xf32>
      %125 = arith.negf %124 : vector<2x128xf32>
      %126 = math.exp %125 : vector<2x128xf32>
      %cst_44 = arith.constant 1.000000e+00 : f32
      %127 = vector.broadcast %cst_44 : f32 to vector<2x128xf32>
      %128 = arith.addf %127, %126 : vector<2x128xf32>
      %129 = arith.divf %127, %128 : vector<2x128xf32>
      %130 = math.tanh %124 : vector<2x128xf32>
      %131 = vector.extract_strided_slice %129 {offsets = [0, 0], sizes = [2, 32], strides = [1, 1]} : vector<2x128xf32> to vector<2x32xf32>
      %132 = vector.extract_strided_slice %129 {offsets = [0, 32], sizes = [2, 32], strides = [1, 1]} : vector<2x128xf32> to vector<2x32xf32>
      %133 = vector.extract_strided_slice %130 {offsets = [0, 64], sizes = [2, 32], strides = [1, 1]} : vector<2x128xf32> to vector<2x32xf32>
      %134 = vector.extract_strided_slice %129 {offsets = [0, 96], sizes = [2, 32], strides = [1, 1]} : vector<2x128xf32> to vector<2x32xf32>
      %135 = arith.mulf %132, %87 : vector<2x32xf32>
      %136 = arith.mulf %131, %133 : vector<2x32xf32>
      %137 = arith.addf %135, %136 : vector<2x32xf32>
      %138 = math.tanh %137 : vector<2x32xf32>
      %139 = arith.mulf %134, %138 : vector<2x32xf32>
      %140 = vector.extract_strided_slice %35 {offsets = [2, 0, 0], sizes = [1, 2, 128], strides = [1, 1, 1]} : vector<8x2x128xf32> to vector<1x2x128xf32>
      %141 = vector.shape_cast %140 : vector<1x2x128xf32> to vector<2x128xf32>
      %142 = arith.truncf %111 : vector<2x32xf32> to vector<2x32xbf16>
      %143 = vector.extract_strided_slice %24 {offsets = [0, 0, 0], sizes = [1, 32, 128], strides = [1, 1, 1]} : vector<2x32x128xbf16> to vector<1x32x128xbf16>
      %144 = vector.shape_cast %143 : vector<1x32x128xbf16> to vector<32x128xbf16>
      %cst_45 = arith.constant dense<0.000000e+00> : vector<2x128xf32>
      %145 = tpu.matmul %142, %144, %cst_45 {dimension_numbers = #tpu.dot_dimension_numbers<[1], [0], [0], [1], [0, 0, 1, 1], [], []>} : vector<2x32xbf16>, vector<32x128xbf16>, vector<2x128xf32> -> vector<2x128xf32>
      %146 = arith.addf %141, %145 : vector<2x128xf32>
      %147 = arith.negf %146 : vector<2x128xf32>
      %148 = math.exp %147 : vector<2x128xf32>
      %cst_46 = arith.constant 1.000000e+00 : f32
      %149 = vector.broadcast %cst_46 : f32 to vector<2x128xf32>
      %150 = arith.addf %149, %148 : vector<2x128xf32>
      %151 = arith.divf %149, %150 : vector<2x128xf32>
      %152 = math.tanh %146 : vector<2x128xf32>
      %153 = vector.extract_strided_slice %151 {offsets = [0, 0], sizes = [2, 32], strides = [1, 1]} : vector<2x128xf32> to vector<2x32xf32>
      %154 = vector.extract_strided_slice %151 {offsets = [0, 32], sizes = [2, 32], strides = [1, 1]} : vector<2x128xf32> to vector<2x32xf32>
      %155 = vector.extract_strided_slice %152 {offsets = [0, 64], sizes = [2, 32], strides = [1, 1]} : vector<2x128xf32> to vector<2x32xf32>
      %156 = vector.extract_strided_slice %151 {offsets = [0, 96], sizes = [2, 32], strides = [1, 1]} : vector<2x128xf32> to vector<2x32xf32>
      %157 = arith.mulf %154, %109 : vector<2x32xf32>
      %158 = arith.mulf %153, %155 : vector<2x32xf32>
      %159 = arith.addf %157, %158 : vector<2x32xf32>
      %160 = math.tanh %159 : vector<2x32xf32>
      %161 = arith.mulf %156, %160 : vector<2x32xf32>
      %162 = arith.truncf %161 : vector<2x32xf32> to vector<2x32xbf16>
      %163 = vector.extract_strided_slice %23 {offsets = [1, 0, 0], sizes = [1, 32, 128], strides = [1, 1, 1]} : vector<2x32x128xbf16> to vector<1x32x128xbf16>
      %164 = vector.shape_cast %163 : vector<1x32x128xbf16> to vector<32x128xbf16>
      %cst_47 = arith.constant dense<0.000000e+00> : vector<2x128xf32>
      %165 = tpu.matmul %162, %164, %cst_47 {dimension_numbers = #tpu.dot_dimension_numbers<[1], [0], [0], [1], [0, 0, 1, 1], [], []>} : vector<2x32xbf16>, vector<32x128xbf16>, vector<2x128xf32> -> vector<2x128xf32>
      %166 = arith.truncf %139 : vector<2x32xf32> to vector<2x32xbf16>
      %167 = vector.extract_strided_slice %24 {offsets = [1, 0, 0], sizes = [1, 32, 128], strides = [1, 1, 1]} : vector<2x32x128xbf16> to vector<1x32x128xbf16>
      %168 = vector.shape_cast %167 : vector<1x32x128xbf16> to vector<32x128xbf16>
      %cst_48 = arith.constant dense<0.000000e+00> : vector<2x128xf32>
      %169 = tpu.matmul %166, %168, %cst_48 {dimension_numbers = #tpu.dot_dimension_numbers<[1], [0], [0], [1], [0, 0, 1, 1], [], []>} : vector<2x32xbf16>, vector<32x128xbf16>, vector<2x128xf32> -> vector<2x128xf32>
      %170 = arith.addf %165, %169 : vector<2x128xf32>
      %171 = vector.extract_strided_slice %25 {offsets = [1, 0, 0], sizes = [1, 1, 128], strides = [1, 1, 1]} : vector<2x1x128xf32> to vector<1x1x128xf32>
      %172 = vector.shape_cast %171 : vector<1x1x128xf32> to vector<1x128xf32>
      %173 = vector.broadcast %172 : vector<1x128xf32> to vector<2x128xf32>
      %174 = arith.addf %170, %173 : vector<2x128xf32>
      %175 = arith.negf %174 : vector<2x128xf32>
      %176 = math.exp %175 : vector<2x128xf32>
      %cst_49 = arith.constant 1.000000e+00 : f32
      %177 = vector.broadcast %cst_49 : f32 to vector<2x128xf32>
      %178 = arith.addf %177, %176 : vector<2x128xf32>
      %179 = arith.divf %177, %178 : vector<2x128xf32>
      %180 = math.tanh %174 : vector<2x128xf32>
      %181 = vector.extract_strided_slice %179 {offsets = [0, 0], sizes = [2, 32], strides = [1, 1]} : vector<2x128xf32> to vector<2x32xf32>
      %182 = vector.extract_strided_slice %179 {offsets = [0, 32], sizes = [2, 32], strides = [1, 1]} : vector<2x128xf32> to vector<2x32xf32>
      %183 = vector.extract_strided_slice %180 {offsets = [0, 64], sizes = [2, 32], strides = [1, 1]} : vector<2x128xf32> to vector<2x32xf32>
      %184 = vector.extract_strided_slice %179 {offsets = [0, 96], sizes = [2, 32], strides = [1, 1]} : vector<2x128xf32> to vector<2x32xf32>
      %185 = arith.mulf %182, %137 : vector<2x32xf32>
      %186 = arith.mulf %181, %183 : vector<2x32xf32>
      %187 = arith.addf %185, %186 : vector<2x32xf32>
      %188 = math.tanh %187 : vector<2x32xf32>
      %189 = arith.mulf %184, %188 : vector<2x32xf32>
      %190 = vector.extract_strided_slice %35 {offsets = [3, 0, 0], sizes = [1, 2, 128], strides = [1, 1, 1]} : vector<8x2x128xf32> to vector<1x2x128xf32>
      %191 = vector.shape_cast %190 : vector<1x2x128xf32> to vector<2x128xf32>
      %192 = arith.truncf %161 : vector<2x32xf32> to vector<2x32xbf16>
      %193 = vector.extract_strided_slice %24 {offsets = [0, 0, 0], sizes = [1, 32, 128], strides = [1, 1, 1]} : vector<2x32x128xbf16> to vector<1x32x128xbf16>
      %194 = vector.shape_cast %193 : vector<1x32x128xbf16> to vector<32x128xbf16>
      %cst_50 = arith.constant dense<0.000000e+00> : vector<2x128xf32>
      %195 = tpu.matmul %192, %194, %cst_50 {dimension_numbers = #tpu.dot_dimension_numbers<[1], [0], [0], [1], [0, 0, 1, 1], [], []>} : vector<2x32xbf16>, vector<32x128xbf16>, vector<2x128xf32> -> vector<2x128xf32>
      %196 = arith.addf %191, %195 : vector<2x128xf32>
      %197 = arith.negf %196 : vector<2x128xf32>
      %198 = math.exp %197 : vector<2x128xf32>
      %cst_51 = arith.constant 1.000000e+00 : f32
      %199 = vector.broadcast %cst_51 : f32 to vector<2x128xf32>
      %200 = arith.addf %199, %198 : vector<2x128xf32>
      %201 = arith.divf %199, %200 : vector<2x128xf32>
      %202 = math.tanh %196 : vector<2x128xf32>
      %203 = vector.extract_strided_slice %201 {offsets = [0, 0], sizes = [2, 32], strides = [1, 1]} : vector<2x128xf32> to vector<2x32xf32>
      %204 = vector.extract_strided_slice %201 {offsets = [0, 32], sizes = [2, 32], strides = [1, 1]} : vector<2x128xf32> to vector<2x32xf32>
      %205 = vector.extract_strided_slice %202 {offsets = [0, 64], sizes = [2, 32], strides = [1, 1]} : vector<2x128xf32> to vector<2x32xf32>
      %206 = vector.extract_strided_slice %201 {offsets = [0, 96], sizes = [2, 32], strides = [1, 1]} : vector<2x128xf32> to vector<2x32xf32>
      %207 = arith.mulf %204, %159 : vector<2x32xf32>
      %208 = arith.mulf %203, %205 : vector<2x32xf32>
      %209 = arith.addf %207, %208 : vector<2x32xf32>
      %210 = math.tanh %209 : vector<2x32xf32>
      %211 = arith.mulf %206, %210 : vector<2x32xf32>
      %212 = arith.truncf %211 : vector<2x32xf32> to vector<2x32xbf16>
      %213 = vector.extract_strided_slice %23 {offsets = [1, 0, 0], sizes = [1, 32, 128], strides = [1, 1, 1]} : vector<2x32x128xbf16> to vector<1x32x128xbf16>
      %214 = vector.shape_cast %213 : vector<1x32x128xbf16> to vector<32x128xbf16>
      %cst_52 = arith.constant dense<0.000000e+00> : vector<2x128xf32>
      %215 = tpu.matmul %212, %214, %cst_52 {dimension_numbers = #tpu.dot_dimension_numbers<[1], [0], [0], [1], [0, 0, 1, 1], [], []>} : vector<2x32xbf16>, vector<32x128xbf16>, vector<2x128xf32> -> vector<2x128xf32>
      %216 = arith.truncf %189 : vector<2x32xf32> to vector<2x32xbf16>
      %217 = vector.extract_strided_slice %24 {offsets = [1, 0, 0], sizes = [1, 32, 128], strides = [1, 1, 1]} : vector<2x32x128xbf16> to vector<1x32x128xbf16>
      %218 = vector.shape_cast %217 : vector<1x32x128xbf16> to vector<32x128xbf16>
      %cst_53 = arith.constant dense<0.000000e+00> : vector<2x128xf32>
      %219 = tpu.matmul %216, %218, %cst_53 {dimension_numbers = #tpu.dot_dimension_numbers<[1], [0], [0], [1], [0, 0, 1, 1], [], []>} : vector<2x32xbf16>, vector<32x128xbf16>, vector<2x128xf32> -> vector<2x128xf32>
      %220 = arith.addf %215, %219 : vector<2x128xf32>
      %221 = vector.extract_strided_slice %25 {offsets = [1, 0, 0], sizes = [1, 1, 128], strides = [1, 1, 1]} : vector<2x1x128xf32> to vector<1x1x128xf32>
      %222 = vector.shape_cast %221 : vector<1x1x128xf32> to vector<1x128xf32>
      %223 = vector.broadcast %222 : vector<1x128xf32> to vector<2x128xf32>
      %224 = arith.addf %220, %223 : vector<2x128xf32>
      %225 = arith.negf %224 : vector<2x128xf32>
      %226 = math.exp %225 : vector<2x128xf32>
      %cst_54 = arith.constant 1.000000e+00 : f32
      %227 = vector.broadcast %cst_54 : f32 to vector<2x128xf32>
      %228 = arith.addf %227, %226 : vector<2x128xf32>
      %229 = arith.divf %227, %228 : vector<2x128xf32>
      %230 = math.tanh %224 : vector<2x128xf32>
      %231 = vector.extract_strided_slice %229 {offsets = [0, 0], sizes = [2, 32], strides = [1, 1]} : vector<2x128xf32> to vector<2x32xf32>
      %232 = vector.extract_strided_slice %229 {offsets = [0, 32], sizes = [2, 32], strides = [1, 1]} : vector<2x128xf32> to vector<2x32xf32>
      %233 = vector.extract_strided_slice %230 {offsets = [0, 64], sizes = [2, 32], strides = [1, 1]} : vector<2x128xf32> to vector<2x32xf32>
      %234 = vector.extract_strided_slice %229 {offsets = [0, 96], sizes = [2, 32], strides = [1, 1]} : vector<2x128xf32> to vector<2x32xf32>
      %235 = arith.mulf %232, %187 : vector<2x32xf32>
      %236 = arith.mulf %231, %233 : vector<2x32xf32>
      %237 = arith.addf %235, %236 : vector<2x32xf32>
      %238 = math.tanh %237 : vector<2x32xf32>
      %239 = arith.mulf %234, %238 : vector<2x32xf32>
      %240 = vector.extract_strided_slice %35 {offsets = [4, 0, 0], sizes = [1, 2, 128], strides = [1, 1, 1]} : vector<8x2x128xf32> to vector<1x2x128xf32>
      %241 = vector.shape_cast %240 : vector<1x2x128xf32> to vector<2x128xf32>
      %242 = arith.truncf %211 : vector<2x32xf32> to vector<2x32xbf16>
      %243 = vector.extract_strided_slice %24 {offsets = [0, 0, 0], sizes = [1, 32, 128], strides = [1, 1, 1]} : vector<2x32x128xbf16> to vector<1x32x128xbf16>
      %244 = vector.shape_cast %243 : vector<1x32x128xbf16> to vector<32x128xbf16>
      %cst_55 = arith.constant dense<0.000000e+00> : vector<2x128xf32>
      %245 = tpu.matmul %242, %244, %cst_55 {dimension_numbers = #tpu.dot_dimension_numbers<[1], [0], [0], [1], [0, 0, 1, 1], [], []>} : vector<2x32xbf16>, vector<32x128xbf16>, vector<2x128xf32> -> vector<2x128xf32>
      %246 = arith.addf %241, %245 : vector<2x128xf32>
      %247 = arith.negf %246 : vector<2x128xf32>
      %248 = math.exp %247 : vector<2x128xf32>
      %cst_56 = arith.constant 1.000000e+00 : f32
      %249 = vector.broadcast %cst_56 : f32 to vector<2x128xf32>
      %250 = arith.addf %249, %248 : vector<2x128xf32>
      %251 = arith.divf %249, %250 : vector<2x128xf32>
      %252 = math.tanh %246 : vector<2x128xf32>
      %253 = vector.extract_strided_slice %251 {offsets = [0, 0], sizes = [2, 32], strides = [1, 1]} : vector<2x128xf32> to vector<2x32xf32>
      %254 = vector.extract_strided_slice %251 {offsets = [0, 32], sizes = [2, 32], strides = [1, 1]} : vector<2x128xf32> to vector<2x32xf32>
      %255 = vector.extract_strided_slice %252 {offsets = [0, 64], sizes = [2, 32], strides = [1, 1]} : vector<2x128xf32> to vector<2x32xf32>
      %256 = vector.extract_strided_slice %251 {offsets = [0, 96], sizes = [2, 32], strides = [1, 1]} : vector<2x128xf32> to vector<2x32xf32>
      %257 = arith.mulf %254, %209 : vector<2x32xf32>
      %258 = arith.mulf %253, %255 : vector<2x32xf32>
      %259 = arith.addf %257, %258 : vector<2x32xf32>
      %260 = math.tanh %259 : vector<2x32xf32>
      %261 = arith.mulf %256, %260 : vector<2x32xf32>
      %262 = arith.truncf %261 : vector<2x32xf32> to vector<2x32xbf16>
      %263 = vector.extract_strided_slice %23 {offsets = [1, 0, 0], sizes = [1, 32, 128], strides = [1, 1, 1]} : vector<2x32x128xbf16> to vector<1x32x128xbf16>
      %264 = vector.shape_cast %263 : vector<1x32x128xbf16> to vector<32x128xbf16>
      %cst_57 = arith.constant dense<0.000000e+00> : vector<2x128xf32>
      %265 = tpu.matmul %262, %264, %cst_57 {dimension_numbers = #tpu.dot_dimension_numbers<[1], [0], [0], [1], [0, 0, 1, 1], [], []>} : vector<2x32xbf16>, vector<32x128xbf16>, vector<2x128xf32> -> vector<2x128xf32>
      %266 = arith.truncf %239 : vector<2x32xf32> to vector<2x32xbf16>
      %267 = vector.extract_strided_slice %24 {offsets = [1, 0, 0], sizes = [1, 32, 128], strides = [1, 1, 1]} : vector<2x32x128xbf16> to vector<1x32x128xbf16>
      %268 = vector.shape_cast %267 : vector<1x32x128xbf16> to vector<32x128xbf16>
      %cst_58 = arith.constant dense<0.000000e+00> : vector<2x128xf32>
      %269 = tpu.matmul %266, %268, %cst_58 {dimension_numbers = #tpu.dot_dimension_numbers<[1], [0], [0], [1], [0, 0, 1, 1], [], []>} : vector<2x32xbf16>, vector<32x128xbf16>, vector<2x128xf32> -> vector<2x128xf32>
      %270 = arith.addf %265, %269 : vector<2x128xf32>
      %271 = vector.extract_strided_slice %25 {offsets = [1, 0, 0], sizes = [1, 1, 128], strides = [1, 1, 1]} : vector<2x1x128xf32> to vector<1x1x128xf32>
      %272 = vector.shape_cast %271 : vector<1x1x128xf32> to vector<1x128xf32>
      %273 = vector.broadcast %272 : vector<1x128xf32> to vector<2x128xf32>
      %274 = arith.addf %270, %273 : vector<2x128xf32>
      %275 = arith.negf %274 : vector<2x128xf32>
      %276 = math.exp %275 : vector<2x128xf32>
      %cst_59 = arith.constant 1.000000e+00 : f32
      %277 = vector.broadcast %cst_59 : f32 to vector<2x128xf32>
      %278 = arith.addf %277, %276 : vector<2x128xf32>
      %279 = arith.divf %277, %278 : vector<2x128xf32>
      %280 = math.tanh %274 : vector<2x128xf32>
      %281 = vector.extract_strided_slice %279 {offsets = [0, 0], sizes = [2, 32], strides = [1, 1]} : vector<2x128xf32> to vector<2x32xf32>
      %282 = vector.extract_strided_slice %279 {offsets = [0, 32], sizes = [2, 32], strides = [1, 1]} : vector<2x128xf32> to vector<2x32xf32>
      %283 = vector.extract_strided_slice %280 {offsets = [0, 64], sizes = [2, 32], strides = [1, 1]} : vector<2x128xf32> to vector<2x32xf32>
      %284 = vector.extract_strided_slice %279 {offsets = [0, 96], sizes = [2, 32], strides = [1, 1]} : vector<2x128xf32> to vector<2x32xf32>
      %285 = arith.mulf %282, %237 : vector<2x32xf32>
      %286 = arith.mulf %281, %283 : vector<2x32xf32>
      %287 = arith.addf %285, %286 : vector<2x32xf32>
      %288 = math.tanh %287 : vector<2x32xf32>
      %289 = arith.mulf %284, %288 : vector<2x32xf32>
      %290 = vector.extract_strided_slice %35 {offsets = [5, 0, 0], sizes = [1, 2, 128], strides = [1, 1, 1]} : vector<8x2x128xf32> to vector<1x2x128xf32>
      %291 = vector.shape_cast %290 : vector<1x2x128xf32> to vector<2x128xf32>
      %292 = arith.truncf %261 : vector<2x32xf32> to vector<2x32xbf16>
      %293 = vector.extract_strided_slice %24 {offsets = [0, 0, 0], sizes = [1, 32, 128], strides = [1, 1, 1]} : vector<2x32x128xbf16> to vector<1x32x128xbf16>
      %294 = vector.shape_cast %293 : vector<1x32x128xbf16> to vector<32x128xbf16>
      %cst_60 = arith.constant dense<0.000000e+00> : vector<2x128xf32>
      %295 = tpu.matmul %292, %294, %cst_60 {dimension_numbers = #tpu.dot_dimension_numbers<[1], [0], [0], [1], [0, 0, 1, 1], [], []>} : vector<2x32xbf16>, vector<32x128xbf16>, vector<2x128xf32> -> vector<2x128xf32>
      %296 = arith.addf %291, %295 : vector<2x128xf32>
      %297 = arith.negf %296 : vector<2x128xf32>
      %298 = math.exp %297 : vector<2x128xf32>
      %cst_61 = arith.constant 1.000000e+00 : f32
      %299 = vector.broadcast %cst_61 : f32 to vector<2x128xf32>
      %300 = arith.addf %299, %298 : vector<2x128xf32>
      %301 = arith.divf %299, %300 : vector<2x128xf32>
      %302 = math.tanh %296 : vector<2x128xf32>
      %303 = vector.extract_strided_slice %301 {offsets = [0, 0], sizes = [2, 32], strides = [1, 1]} : vector<2x128xf32> to vector<2x32xf32>
      %304 = vector.extract_strided_slice %301 {offsets = [0, 32], sizes = [2, 32], strides = [1, 1]} : vector<2x128xf32> to vector<2x32xf32>
      %305 = vector.extract_strided_slice %302 {offsets = [0, 64], sizes = [2, 32], strides = [1, 1]} : vector<2x128xf32> to vector<2x32xf32>
      %306 = vector.extract_strided_slice %301 {offsets = [0, 96], sizes = [2, 32], strides = [1, 1]} : vector<2x128xf32> to vector<2x32xf32>
      %307 = arith.mulf %304, %259 : vector<2x32xf32>
      %308 = arith.mulf %303, %305 : vector<2x32xf32>
      %309 = arith.addf %307, %308 : vector<2x32xf32>
      %310 = math.tanh %309 : vector<2x32xf32>
      %311 = arith.mulf %306, %310 : vector<2x32xf32>
      %312 = arith.truncf %311 : vector<2x32xf32> to vector<2x32xbf16>
      %313 = vector.extract_strided_slice %23 {offsets = [1, 0, 0], sizes = [1, 32, 128], strides = [1, 1, 1]} : vector<2x32x128xbf16> to vector<1x32x128xbf16>
      %314 = vector.shape_cast %313 : vector<1x32x128xbf16> to vector<32x128xbf16>
      %cst_62 = arith.constant dense<0.000000e+00> : vector<2x128xf32>
      %315 = tpu.matmul %312, %314, %cst_62 {dimension_numbers = #tpu.dot_dimension_numbers<[1], [0], [0], [1], [0, 0, 1, 1], [], []>} : vector<2x32xbf16>, vector<32x128xbf16>, vector<2x128xf32> -> vector<2x128xf32>
      %316 = arith.truncf %289 : vector<2x32xf32> to vector<2x32xbf16>
      %317 = vector.extract_strided_slice %24 {offsets = [1, 0, 0], sizes = [1, 32, 128], strides = [1, 1, 1]} : vector<2x32x128xbf16> to vector<1x32x128xbf16>
      %318 = vector.shape_cast %317 : vector<1x32x128xbf16> to vector<32x128xbf16>
      %cst_63 = arith.constant dense<0.000000e+00> : vector<2x128xf32>
      %319 = tpu.matmul %316, %318, %cst_63 {dimension_numbers = #tpu.dot_dimension_numbers<[1], [0], [0], [1], [0, 0, 1, 1], [], []>} : vector<2x32xbf16>, vector<32x128xbf16>, vector<2x128xf32> -> vector<2x128xf32>
      %320 = arith.addf %315, %319 : vector<2x128xf32>
      %321 = vector.extract_strided_slice %25 {offsets = [1, 0, 0], sizes = [1, 1, 128], strides = [1, 1, 1]} : vector<2x1x128xf32> to vector<1x1x128xf32>
      %322 = vector.shape_cast %321 : vector<1x1x128xf32> to vector<1x128xf32>
      %323 = vector.broadcast %322 : vector<1x128xf32> to vector<2x128xf32>
      %324 = arith.addf %320, %323 : vector<2x128xf32>
      %325 = arith.negf %324 : vector<2x128xf32>
      %326 = math.exp %325 : vector<2x128xf32>
      %cst_64 = arith.constant 1.000000e+00 : f32
      %327 = vector.broadcast %cst_64 : f32 to vector<2x128xf32>
      %328 = arith.addf %327, %326 : vector<2x128xf32>
      %329 = arith.divf %327, %328 : vector<2x128xf32>
      %330 = math.tanh %324 : vector<2x128xf32>
      %331 = vector.extract_strided_slice %329 {offsets = [0, 0], sizes = [2, 32], strides = [1, 1]} : vector<2x128xf32> to vector<2x32xf32>
      %332 = vector.extract_strided_slice %329 {offsets = [0, 32], sizes = [2, 32], strides = [1, 1]} : vector<2x128xf32> to vector<2x32xf32>
      %333 = vector.extract_strided_slice %330 {offsets = [0, 64], sizes = [2, 32], strides = [1, 1]} : vector<2x128xf32> to vector<2x32xf32>
      %334 = vector.extract_strided_slice %329 {offsets = [0, 96], sizes = [2, 32], strides = [1, 1]} : vector<2x128xf32> to vector<2x32xf32>
      %335 = arith.mulf %332, %287 : vector<2x32xf32>
      %336 = arith.mulf %331, %333 : vector<2x32xf32>
      %337 = arith.addf %335, %336 : vector<2x32xf32>
      %338 = math.tanh %337 : vector<2x32xf32>
      %339 = arith.mulf %334, %338 : vector<2x32xf32>
      %340 = vector.extract_strided_slice %35 {offsets = [6, 0, 0], sizes = [1, 2, 128], strides = [1, 1, 1]} : vector<8x2x128xf32> to vector<1x2x128xf32>
      %341 = vector.shape_cast %340 : vector<1x2x128xf32> to vector<2x128xf32>
      %342 = arith.truncf %311 : vector<2x32xf32> to vector<2x32xbf16>
      %343 = vector.extract_strided_slice %24 {offsets = [0, 0, 0], sizes = [1, 32, 128], strides = [1, 1, 1]} : vector<2x32x128xbf16> to vector<1x32x128xbf16>
      %344 = vector.shape_cast %343 : vector<1x32x128xbf16> to vector<32x128xbf16>
      %cst_65 = arith.constant dense<0.000000e+00> : vector<2x128xf32>
      %345 = tpu.matmul %342, %344, %cst_65 {dimension_numbers = #tpu.dot_dimension_numbers<[1], [0], [0], [1], [0, 0, 1, 1], [], []>} : vector<2x32xbf16>, vector<32x128xbf16>, vector<2x128xf32> -> vector<2x128xf32>
      %346 = arith.addf %341, %345 : vector<2x128xf32>
      %347 = arith.negf %346 : vector<2x128xf32>
      %348 = math.exp %347 : vector<2x128xf32>
      %cst_66 = arith.constant 1.000000e+00 : f32
      %349 = vector.broadcast %cst_66 : f32 to vector<2x128xf32>
      %350 = arith.addf %349, %348 : vector<2x128xf32>
      %351 = arith.divf %349, %350 : vector<2x128xf32>
      %352 = math.tanh %346 : vector<2x128xf32>
      %353 = vector.extract_strided_slice %351 {offsets = [0, 0], sizes = [2, 32], strides = [1, 1]} : vector<2x128xf32> to vector<2x32xf32>
      %354 = vector.extract_strided_slice %351 {offsets = [0, 32], sizes = [2, 32], strides = [1, 1]} : vector<2x128xf32> to vector<2x32xf32>
      %355 = vector.extract_strided_slice %352 {offsets = [0, 64], sizes = [2, 32], strides = [1, 1]} : vector<2x128xf32> to vector<2x32xf32>
      %356 = vector.extract_strided_slice %351 {offsets = [0, 96], sizes = [2, 32], strides = [1, 1]} : vector<2x128xf32> to vector<2x32xf32>
      %357 = arith.mulf %354, %309 : vector<2x32xf32>
      %358 = arith.mulf %353, %355 : vector<2x32xf32>
      %359 = arith.addf %357, %358 : vector<2x32xf32>
      %360 = math.tanh %359 : vector<2x32xf32>
      %361 = arith.mulf %356, %360 : vector<2x32xf32>
      %362 = arith.truncf %361 : vector<2x32xf32> to vector<2x32xbf16>
      %363 = vector.extract_strided_slice %23 {offsets = [1, 0, 0], sizes = [1, 32, 128], strides = [1, 1, 1]} : vector<2x32x128xbf16> to vector<1x32x128xbf16>
      %364 = vector.shape_cast %363 : vector<1x32x128xbf16> to vector<32x128xbf16>
      %cst_67 = arith.constant dense<0.000000e+00> : vector<2x128xf32>
      %365 = tpu.matmul %362, %364, %cst_67 {dimension_numbers = #tpu.dot_dimension_numbers<[1], [0], [0], [1], [0, 0, 1, 1], [], []>} : vector<2x32xbf16>, vector<32x128xbf16>, vector<2x128xf32> -> vector<2x128xf32>
      %366 = arith.truncf %339 : vector<2x32xf32> to vector<2x32xbf16>
      %367 = vector.extract_strided_slice %24 {offsets = [1, 0, 0], sizes = [1, 32, 128], strides = [1, 1, 1]} : vector<2x32x128xbf16> to vector<1x32x128xbf16>
      %368 = vector.shape_cast %367 : vector<1x32x128xbf16> to vector<32x128xbf16>
      %cst_68 = arith.constant dense<0.000000e+00> : vector<2x128xf32>
      %369 = tpu.matmul %366, %368, %cst_68 {dimension_numbers = #tpu.dot_dimension_numbers<[1], [0], [0], [1], [0, 0, 1, 1], [], []>} : vector<2x32xbf16>, vector<32x128xbf16>, vector<2x128xf32> -> vector<2x128xf32>
      %370 = arith.addf %365, %369 : vector<2x128xf32>
      %371 = vector.extract_strided_slice %25 {offsets = [1, 0, 0], sizes = [1, 1, 128], strides = [1, 1, 1]} : vector<2x1x128xf32> to vector<1x1x128xf32>
      %372 = vector.shape_cast %371 : vector<1x1x128xf32> to vector<1x128xf32>
      %373 = vector.broadcast %372 : vector<1x128xf32> to vector<2x128xf32>
      %374 = arith.addf %370, %373 : vector<2x128xf32>
      %375 = arith.negf %374 : vector<2x128xf32>
      %376 = math.exp %375 : vector<2x128xf32>
      %cst_69 = arith.constant 1.000000e+00 : f32
      %377 = vector.broadcast %cst_69 : f32 to vector<2x128xf32>
      %378 = arith.addf %377, %376 : vector<2x128xf32>
      %379 = arith.divf %377, %378 : vector<2x128xf32>
      %380 = math.tanh %374 : vector<2x128xf32>
      %381 = vector.extract_strided_slice %379 {offsets = [0, 0], sizes = [2, 32], strides = [1, 1]} : vector<2x128xf32> to vector<2x32xf32>
      %382 = vector.extract_strided_slice %379 {offsets = [0, 32], sizes = [2, 32], strides = [1, 1]} : vector<2x128xf32> to vector<2x32xf32>
      %383 = vector.extract_strided_slice %380 {offsets = [0, 64], sizes = [2, 32], strides = [1, 1]} : vector<2x128xf32> to vector<2x32xf32>
      %384 = vector.extract_strided_slice %379 {offsets = [0, 96], sizes = [2, 32], strides = [1, 1]} : vector<2x128xf32> to vector<2x32xf32>
      %385 = arith.mulf %382, %337 : vector<2x32xf32>
      %386 = arith.mulf %381, %383 : vector<2x32xf32>
      %387 = arith.addf %385, %386 : vector<2x32xf32>
      %388 = math.tanh %387 : vector<2x32xf32>
      %389 = arith.mulf %384, %388 : vector<2x32xf32>
      %390 = vector.extract_strided_slice %35 {offsets = [7, 0, 0], sizes = [1, 2, 128], strides = [1, 1, 1]} : vector<8x2x128xf32> to vector<1x2x128xf32>
      %391 = vector.shape_cast %390 : vector<1x2x128xf32> to vector<2x128xf32>
      %392 = arith.truncf %361 : vector<2x32xf32> to vector<2x32xbf16>
      %393 = vector.extract_strided_slice %24 {offsets = [0, 0, 0], sizes = [1, 32, 128], strides = [1, 1, 1]} : vector<2x32x128xbf16> to vector<1x32x128xbf16>
      %394 = vector.shape_cast %393 : vector<1x32x128xbf16> to vector<32x128xbf16>
      %cst_70 = arith.constant dense<0.000000e+00> : vector<2x128xf32>
      %395 = tpu.matmul %392, %394, %cst_70 {dimension_numbers = #tpu.dot_dimension_numbers<[1], [0], [0], [1], [0, 0, 1, 1], [], []>} : vector<2x32xbf16>, vector<32x128xbf16>, vector<2x128xf32> -> vector<2x128xf32>
      %396 = arith.addf %391, %395 : vector<2x128xf32>
      %397 = arith.negf %396 : vector<2x128xf32>
      %398 = math.exp %397 : vector<2x128xf32>
      %cst_71 = arith.constant 1.000000e+00 : f32
      %399 = vector.broadcast %cst_71 : f32 to vector<2x128xf32>
      %400 = arith.addf %399, %398 : vector<2x128xf32>
      %401 = arith.divf %399, %400 : vector<2x128xf32>
      %402 = math.tanh %396 : vector<2x128xf32>
      %403 = vector.extract_strided_slice %401 {offsets = [0, 0], sizes = [2, 32], strides = [1, 1]} : vector<2x128xf32> to vector<2x32xf32>
      %404 = vector.extract_strided_slice %401 {offsets = [0, 32], sizes = [2, 32], strides = [1, 1]} : vector<2x128xf32> to vector<2x32xf32>
      %405 = vector.extract_strided_slice %402 {offsets = [0, 64], sizes = [2, 32], strides = [1, 1]} : vector<2x128xf32> to vector<2x32xf32>
      %406 = vector.extract_strided_slice %401 {offsets = [0, 96], sizes = [2, 32], strides = [1, 1]} : vector<2x128xf32> to vector<2x32xf32>
      %407 = arith.mulf %404, %359 : vector<2x32xf32>
      %408 = arith.mulf %403, %405 : vector<2x32xf32>
      %409 = arith.addf %407, %408 : vector<2x32xf32>
      %410 = math.tanh %409 : vector<2x32xf32>
      %411 = arith.mulf %406, %410 : vector<2x32xf32>
      %412 = arith.truncf %411 : vector<2x32xf32> to vector<2x32xbf16>
      %413 = vector.extract_strided_slice %23 {offsets = [1, 0, 0], sizes = [1, 32, 128], strides = [1, 1, 1]} : vector<2x32x128xbf16> to vector<1x32x128xbf16>
      %414 = vector.shape_cast %413 : vector<1x32x128xbf16> to vector<32x128xbf16>
      %cst_72 = arith.constant dense<0.000000e+00> : vector<2x128xf32>
      %415 = tpu.matmul %412, %414, %cst_72 {dimension_numbers = #tpu.dot_dimension_numbers<[1], [0], [0], [1], [0, 0, 1, 1], [], []>} : vector<2x32xbf16>, vector<32x128xbf16>, vector<2x128xf32> -> vector<2x128xf32>
      %416 = arith.truncf %389 : vector<2x32xf32> to vector<2x32xbf16>
      %417 = vector.extract_strided_slice %24 {offsets = [1, 0, 0], sizes = [1, 32, 128], strides = [1, 1, 1]} : vector<2x32x128xbf16> to vector<1x32x128xbf16>
      %418 = vector.shape_cast %417 : vector<1x32x128xbf16> to vector<32x128xbf16>
      %cst_73 = arith.constant dense<0.000000e+00> : vector<2x128xf32>
      %419 = tpu.matmul %416, %418, %cst_73 {dimension_numbers = #tpu.dot_dimension_numbers<[1], [0], [0], [1], [0, 0, 1, 1], [], []>} : vector<2x32xbf16>, vector<32x128xbf16>, vector<2x128xf32> -> vector<2x128xf32>
      %420 = arith.addf %415, %419 : vector<2x128xf32>
      %421 = vector.extract_strided_slice %25 {offsets = [1, 0, 0], sizes = [1, 1, 128], strides = [1, 1, 1]} : vector<2x1x128xf32> to vector<1x1x128xf32>
      %422 = vector.shape_cast %421 : vector<1x1x128xf32> to vector<1x128xf32>
      %423 = vector.broadcast %422 : vector<1x128xf32> to vector<2x128xf32>
      %424 = arith.addf %420, %423 : vector<2x128xf32>
      %425 = arith.negf %424 : vector<2x128xf32>
      %426 = math.exp %425 : vector<2x128xf32>
      %cst_74 = arith.constant 1.000000e+00 : f32
      %427 = vector.broadcast %cst_74 : f32 to vector<2x128xf32>
      %428 = arith.addf %427, %426 : vector<2x128xf32>
      %429 = arith.divf %427, %428 : vector<2x128xf32>
      %430 = math.tanh %424 : vector<2x128xf32>
      %431 = vector.extract_strided_slice %429 {offsets = [0, 0], sizes = [2, 32], strides = [1, 1]} : vector<2x128xf32> to vector<2x32xf32>
      %432 = vector.extract_strided_slice %429 {offsets = [0, 32], sizes = [2, 32], strides = [1, 1]} : vector<2x128xf32> to vector<2x32xf32>
      %433 = vector.extract_strided_slice %430 {offsets = [0, 64], sizes = [2, 32], strides = [1, 1]} : vector<2x128xf32> to vector<2x32xf32>
      %434 = vector.extract_strided_slice %429 {offsets = [0, 96], sizes = [2, 32], strides = [1, 1]} : vector<2x128xf32> to vector<2x32xf32>
      %435 = arith.mulf %432, %387 : vector<2x32xf32>
      %436 = arith.mulf %431, %433 : vector<2x32xf32>
      %437 = arith.addf %435, %436 : vector<2x32xf32>
      %438 = math.tanh %437 : vector<2x32xf32>
      %439 = arith.mulf %434, %438 : vector<2x32xf32>
      %c0_75 = arith.constant 0 : index
      %c0_76 = arith.constant 0 : index
      %440 = vector.load %arg11[%c0_75, %c0_76] : memref<128x128xbf16, #tpu.memory_space<vmem>>, vector<128x128xbf16>
      %c0_77 = arith.constant 0 : index
      %c0_78 = arith.constant 0 : index
      %441 = vector.load %arg12[%c0_77, %c0_78] : memref<1x128xf32, #tpu.memory_space<vmem>>, vector<1x128xf32>
      %442 = vector.shape_cast %441 : vector<1x128xf32> to vector<1x128xf32>
      %443 = vector.broadcast %442 : vector<1x128xf32> to vector<2x128xf32>
      %444 = math.tanh %411 : vector<2x32xf32>
      %445 = arith.truncf %444 : vector<2x32xf32> to vector<2x32xbf16>
      %446 = vector.extract_strided_slice %440 {offsets = [0, 0], sizes = [32, 128], strides = [1, 1]} : vector<128x128xbf16> to vector<32x128xbf16>
      %cst_79 = arith.constant dense<0.000000e+00> : vector<2x128xf32>
      %447 = tpu.matmul %445, %446, %cst_79 {dimension_numbers = #tpu.dot_dimension_numbers<[1], [0], [0], [1], [0, 0, 1, 1], [], []>} : vector<2x32xbf16>, vector<32x128xbf16>, vector<2x128xf32> -> vector<2x128xf32>
      %448 = arith.addf %443, %447 : vector<2x128xf32>
      %449 = math.tanh %409 : vector<2x32xf32>
      %450 = arith.truncf %449 : vector<2x32xf32> to vector<2x32xbf16>
      %451 = vector.extract_strided_slice %440 {offsets = [32, 0], sizes = [32, 128], strides = [1, 1]} : vector<128x128xbf16> to vector<32x128xbf16>
      %cst_80 = arith.constant dense<0.000000e+00> : vector<2x128xf32>
      %452 = tpu.matmul %450, %451, %cst_80 {dimension_numbers = #tpu.dot_dimension_numbers<[1], [0], [0], [1], [0, 0, 1, 1], [], []>} : vector<2x32xbf16>, vector<32x128xbf16>, vector<2x128xf32> -> vector<2x128xf32>
      %453 = arith.addf %448, %452 : vector<2x128xf32>
      %454 = math.tanh %439 : vector<2x32xf32>
      %455 = arith.truncf %454 : vector<2x32xf32> to vector<2x32xbf16>
      %456 = vector.extract_strided_slice %440 {offsets = [64, 0], sizes = [32, 128], strides = [1, 1]} : vector<128x128xbf16> to vector<32x128xbf16>
      %cst_81 = arith.constant dense<0.000000e+00> : vector<2x128xf32>
      %457 = tpu.matmul %455, %456, %cst_81 {dimension_numbers = #tpu.dot_dimension_numbers<[1], [0], [0], [1], [0, 0, 1, 1], [], []>} : vector<2x32xbf16>, vector<32x128xbf16>, vector<2x128xf32> -> vector<2x128xf32>
      %458 = arith.addf %453, %457 : vector<2x128xf32>
      %459 = math.tanh %437 : vector<2x32xf32>
      %460 = arith.truncf %459 : vector<2x32xf32> to vector<2x32xbf16>
      %461 = vector.extract_strided_slice %440 {offsets = [96, 0], sizes = [32, 128], strides = [1, 1]} : vector<128x128xbf16> to vector<32x128xbf16>
      %cst_82 = arith.constant dense<0.000000e+00> : vector<2x128xf32>
      %462 = tpu.matmul %460, %461, %cst_82 {dimension_numbers = #tpu.dot_dimension_numbers<[1], [0], [0], [1], [0, 0, 1, 1], [], []>} : vector<2x32xbf16>, vector<32x128xbf16>, vector<2x128xf32> -> vector<2x128xf32>
      %463 = arith.addf %458, %462 : vector<2x128xf32>
      %c0_83 = arith.constant 0 : index
      %c0_84 = arith.constant 0 : index
      %464 = vector.load %arg19[%c0_83, %c0_84] : memref<2x128xf32, #tpu.memory_space<vmem>>, vector<2x128xf32>
      tpu.vector_store %arg19[%c0_83, %c0_84], %463 {strides = array<i32>} : memref<2x128xf32, #tpu.memory_space<vmem>>, vector<2x128xf32>,
    } else {
    }
    %c0 = arith.constant 0 : index
    %c0_1 = arith.constant 0 : index
    %c0_2 = arith.constant 0 : index
    %3 = vector.load %arg2[%c0, %c0_1, %c0_2] : memref<2x256x32xbf16, #tpu.memory_space<vmem>>, vector<2x256x32xbf16>
    %4 = vector.shape_cast %3 : vector<2x256x32xbf16> to vector<512x32xbf16>
    %c0_3 = arith.constant 0 : index
    %c0_4 = arith.constant 0 : index
    %5 = vector.load %arg3[%c0_3, %c0_4] : memref<32x512xbf16, #tpu.memory_space<vmem>>, vector<32x512xbf16>
    %cst = arith.constant dense<0.000000e+00> : vector<512x512xf32>
    %6 = tpu.matmul %4, %5, %cst {dimension_numbers = #tpu.dot_dimension_numbers<[1], [0], [0], [1], [0, 0, 1, 1], [], []>} : vector<512x32xbf16>, vector<32x512xbf16>, vector<512x512xf32> -> vector<512x512xf32>
    %c0_5 = arith.constant 0 : index
    %c0_6 = arith.constant 0 : index
    %7 = vector.load %arg4[%c0_5, %c0_6] : memref<1x512xf32, #tpu.memory_space<vmem>>, vector<1x512xf32>
    %8 = vector.broadcast %7 : vector<1x512xf32> to vector<512x512xf32>
    %9 = arith.addf %6, %8 : vector<512x512xf32>
    %cst_7 = arith.constant 0.000000e+00 : f32
    %10 = vector.broadcast %cst_7 : f32 to vector<512x512xf32>
    %11 = arith.maximumf %9, %10 : vector<512x512xf32>
    %12 = vector.shape_cast %11 : vector<512x512xf32> to vector<2x256x512xf32>
    %c0_8 = arith.constant 0 : index
    %c0_9 = arith.constant 0 : index
    %13 = vector.load %arg18[%c0_8, %c0_9] : memref<2x512xf32, #tpu.memory_space<vmem>>, vector<2x512xf32>
    %cst_10 = arith.constant dense<0.000000e+00> : vector<2x512xf32>
    %14 = vector.multi_reduction <add>, %12, %cst_10 [1] : vector<2x256x512xf32> to vector<2x512xf32>
    %15 = arith.addf %13, %14 : vector<2x512xf32>
    %c0_11 = arith.constant 0 : index
    %c0_12 = arith.constant 0 : index
    %16 = vector.load %arg18[%c0_11, %c0_12] : memref<2x512xf32, #tpu.memory_space<vmem>>, vector<2x512xf32>
    tpu.vector_store %arg18[%c0_11, %c0_12], %15 {strides = array<i32>} : memref<2x512xf32, #tpu.memory_space<vmem>>, vector<2x512xf32>,
    %c0_i32_13 = arith.constant 0 : i32
    %17 = arith.cmpi eq, %arg1, %c0_i32_13 : i32
    %18 = arith.extui %17 : i1 to i32
    %c0_i32_14 = arith.constant 0 : i32
    %19 = arith.cmpi ne, %18, %c0_i32_14 : i32
    scf.if %19 {
      %c0_15 = arith.constant 0 : index
      %c0_16 = arith.constant 0 : index
      %20 = vector.load %arg18[%c0_15, %c0_16] : memref<2x512xf32, #tpu.memory_space<vmem>>, vector<2x512xf32>
      %cst_17 = arith.constant 3.906250e-03 : f32
      %21 = vector.broadcast %cst_17 : f32 to vector<2x512xf32>
      %22 = arith.mulf %20, %21 : vector<2x512xf32>
      %23 = arith.truncf %22 : vector<2x512xf32> to vector<2x512xbf16>
      %c0_18 = arith.constant 0 : index
      %c0_19 = arith.constant 0 : index
      %24 = vector.load %arg5[%c0_18, %c0_19] : memref<512x128xbf16, #tpu.memory_space<vmem>>, vector<512x128xbf16>
      %cst_20 = arith.constant dense<0.000000e+00> : vector<2x128xf32>
      %25 = tpu.matmul %23, %24, %cst_20 {dimension_numbers = #tpu.dot_dimension_numbers<[1], [0], [0], [1], [0, 0, 1, 1], [], []>} : vector<2x512xbf16>, vector<512x128xbf16>, vector<2x128xf32> -> vector<2x128xf32>
      %c0_21 = arith.constant 0 : index
      %c0_22 = arith.constant 0 : index
      %26 = vector.load %arg6[%c0_21, %c0_22] : memref<1x128xf32, #tpu.memory_space<vmem>>, vector<1x128xf32>
      %27 = vector.broadcast %26 : vector<1x128xf32> to vector<2x128xf32>
      %28 = arith.addf %25, %27 : vector<2x128xf32>
      %29 = arith.mulf %28, %28 : vector<2x128xf32>
      %cst_23 = arith.constant dense<0.000000e+00> : vector<2xf32>
      %30 = vector.multi_reduction <add>, %29, %cst_23 [1] : vector<2x128xf32> to vector<2xf32>
      %31 = vector.shape_cast %30 : vector<2xf32> to vector<2x1xf32>
      %cst_24 = arith.constant 9.99999996E-13 : f32
      %32 = vector.broadcast %cst_24 : f32 to vector<2x1xf32>
      %33 = arith.addf %31, %32 : vector<2x1xf32>
      %34 = math.rsqrt %33 : vector<2x1xf32>
      %35 = vector.broadcast %34 : vector<2x1xf32> to vector<2x128xf32>
      %36 = arith.mulf %28, %35 : vector<2x128xf32>
      %c0_25 = arith.constant 0 : index
      %c0_26 = arith.constant 0 : index
      %37 = vector.load %arg19[%c0_25, %c0_26] : memref<2x128xf32, #tpu.memory_space<vmem>>, vector<2x128xf32>
      %38 = arith.mulf %36, %37 : vector<2x128xf32>
      %39 = math.tanh %38 : vector<2x128xf32>
      %40 = arith.truncf %39 : vector<2x128xf32> to vector<2x128xbf16>
      %c0_27 = arith.constant 0 : index
      %c0_28 = arith.constant 0 : index
      %41 = vector.load %arg13[%c0_27, %c0_28] : memref<128x128xbf16, #tpu.memory_space<vmem>>, vector<128x128xbf16>
      %cst_29 = arith.constant dense<0.000000e+00> : vector<2x128xf32>
      %42 = tpu.matmul %40, %41, %cst_29 {dimension_numbers = #tpu.dot_dimension_numbers<[1], [0], [0], [1], [0, 0, 1, 1], [], []>} : vector<2x128xbf16>, vector<128x128xbf16>, vector<2x128xf32> -> vector<2x128xf32>
      %c0_30 = arith.constant 0 : index
      %c0_31 = arith.constant 0 : index
      %43 = vector.load %arg14[%c0_30, %c0_31] : memref<1x128xf32, #tpu.memory_space<vmem>>, vector<1x128xf32>
      %44 = vector.broadcast %43 : vector<1x128xf32> to vector<2x128xf32>
      %45 = arith.addf %42, %44 : vector<2x128xf32>
      %46 = math.tanh %45 : vector<2x128xf32>
      %47 = arith.truncf %46 : vector<2x128xf32> to vector<2x128xbf16>
      %c0_32 = arith.constant 0 : index
      %c0_33 = arith.constant 0 : index
      %48 = vector.load %arg15[%c0_32, %c0_33] : memref<128x128xbf16, #tpu.memory_space<vmem>>, vector<128x128xbf16>
      %cst_34 = arith.constant dense<0.000000e+00> : vector<2x128xf32>
      %49 = tpu.matmul %47, %48, %cst_34 {dimension_numbers = #tpu.dot_dimension_numbers<[1], [0], [0], [1], [0, 0, 1, 1], [], []>} : vector<2x128xbf16>, vector<128x128xbf16>, vector<2x128xf32> -> vector<2x128xf32>
      %c0_35 = arith.constant 0 : index
      %c0_36 = arith.constant 0 : index
      %50 = vector.load %arg16[%c0_35, %c0_36] : memref<1x128xf32, #tpu.memory_space<vmem>>, vector<1x128xf32>
      %51 = vector.broadcast %50 : vector<1x128xf32> to vector<2x128xf32>
      %52 = arith.addf %49, %51 : vector<2x128xf32>
      %c0_37 = arith.constant 0 : index
      %c0_38 = arith.constant 0 : index
      %53 = vector.load %arg17[%c0_37, %c0_38] : memref<2x128xf32, #tpu.memory_space<vmem>>, vector<2x128xf32>
      tpu.vector_store %arg17[%c0_37, %c0_38], %52 {strides = array<i32>} : memref<2x128xf32, #tpu.memory_space<vmem>>, vector<2x128xf32>,
    } else {
    }
    return
  }
  func.func @transform_0(%arg0: i32, %arg1: i32) -> (i32, i32, i32) {
    %c0_i32 = arith.constant 0 : i32
    %c0_i32_0 = arith.constant 0 : i32
    return %arg0, %arg1, %c0_i32 : i32, i32, i32
  }
  func.func @transform_1(%arg0: i32, %arg1: i32) -> (i32, i32) {
    %c0_i32 = arith.constant 0 : i32
    %c0_i32_0 = arith.constant 0 : i32
    %c0_i32_1 = arith.constant 0 : i32
    return %c0_i32, %c0_i32_0 : i32, i32
  }
  func.func @transform_2(%arg0: i32, %arg1: i32) -> (i32, i32) {
    %c0_i32 = arith.constant 0 : i32
    %c0_i32_0 = arith.constant 0 : i32
    %c0_i32_1 = arith.constant 0 : i32
    return %c0_i32, %c0_i32_0 : i32, i32
  }
  func.func @transform_3(%arg0: i32, %arg1: i32) -> (i32, i32) {
    %c0_i32 = arith.constant 0 : i32
    %c0_i32_0 = arith.constant 0 : i32
    %c0_i32_1 = arith.constant 0 : i32
    return %c0_i32, %c0_i32_0 : i32, i32
  }
  func.func @transform_4(%arg0: i32, %arg1: i32) -> (i32, i32) {
    %c0_i32 = arith.constant 0 : i32
    %c0_i32_0 = arith.constant 0 : i32
    %c0_i32_1 = arith.constant 0 : i32
    return %c0_i32, %c0_i32_0 : i32, i32
  }
  func.func @transform_5(%arg0: i32, %arg1: i32) -> (i32, i32, i32) {
    %c0_i32 = arith.constant 0 : i32
    %c0_i32_0 = arith.constant 0 : i32
    %c0_i32_1 = arith.constant 0 : i32
    return %c0_i32, %arg0, %c0_i32_0 : i32, i32, i32
  }
  func.func @transform_6(%arg0: i32, %arg1: i32) -> (i32, i32, i32) {
    %c0_i32 = arith.constant 0 : i32
    %c0_i32_0 = arith.constant 0 : i32
    %c0_i32_1 = arith.constant 0 : i32
    %c0_i32_2 = arith.constant 0 : i32
    return %c0_i32, %c0_i32_0, %c0_i32_1 : i32, i32, i32
  }
  func.func @transform_7(%arg0: i32, %arg1: i32) -> (i32, i32, i32) {
    %c0_i32 = arith.constant 0 : i32
    %c0_i32_0 = arith.constant 0 : i32
    %c0_i32_1 = arith.constant 0 : i32
    %c0_i32_2 = arith.constant 0 : i32
    return %c0_i32, %c0_i32_0, %c0_i32_1 : i32, i32, i32
  }
  func.func @transform_8(%arg0: i32, %arg1: i32) -> (i32, i32, i32) {
    %c0_i32 = arith.constant 0 : i32
    %c0_i32_0 = arith.constant 0 : i32
    %c0_i32_1 = arith.constant 0 : i32
    %c0_i32_2 = arith.constant 0 : i32
    return %c0_i32, %c0_i32_0, %c0_i32_1 : i32, i32, i32
  }
  func.func @transform_9(%arg0: i32, %arg1: i32) -> (i32, i32) {
    %c0_i32 = arith.constant 0 : i32
    %c0_i32_0 = arith.constant 0 : i32
    %c0_i32_1 = arith.constant 0 : i32
    return %c0_i32, %c0_i32_0 : i32, i32
  }
  func.func @transform_10(%arg0: i32, %arg1: i32) -> (i32, i32) {
    %c0_i32 = arith.constant 0 : i32
    %c0_i32_0 = arith.constant 0 : i32
    %c0_i32_1 = arith.constant 0 : i32
    return %c0_i32, %c0_i32_0 : i32, i32
  }
  func.func @transform_11(%arg0: i32, %arg1: i32) -> (i32, i32) {
    %c0_i32 = arith.constant 0 : i32
    %c0_i32_0 = arith.constant 0 : i32
    %c0_i32_1 = arith.constant 0 : i32
    return %c0_i32, %c0_i32_0 : i32, i32
  }
  func.func @transform_12(%arg0: i32, %arg1: i32) -> (i32, i32) {
    %c0_i32 = arith.constant 0 : i32
    %c0_i32_0 = arith.constant 0 : i32
    %c0_i32_1 = arith.constant 0 : i32
    return %c0_i32, %c0_i32_0 : i32, i32
  }
  func.func @transform_13(%arg0: i32, %arg1: i32) -> (i32, i32) {
    %c0_i32 = arith.constant 0 : i32
    %c0_i32_0 = arith.constant 0 : i32
    %c0_i32_1 = arith.constant 0 : i32
    return %c0_i32, %c0_i32_0 : i32, i32
  }
  func.func @transform_14(%arg0: i32, %arg1: i32) -> (i32, i32) {
    %c0_i32 = arith.constant 0 : i32
    %c0_i32_0 = arith.constant 0 : i32
    %c0_i32_1 = arith.constant 0 : i32
    return %c0_i32, %c0_i32_0 : i32, i32
  }
  func.func @transform_15(%arg0: i32, %arg1: i32) -> (i32, i32) {
    %c0_i32 = arith.constant 0 : i32
    %c0_i32_0 = arith.constant 0 : i32
    return %arg0, %c0_i32 : i32, i32
  }
}

</mosaic_0001>

<llo_original>
// kernel: visual_qa_forward.1
$region0: #{visual_qa_forward.1}
  #allocation0 [shape = 'u32[]', space=smem, size = 0x4, offset = 0x4, fixed_abs, tag = 'smem constant byte address 0x4 - core index']
  #allocation1 [shape = 'u32[72,128]{1,0:T(1,128)}', space=vmem, size = 0x9000, scoped, tag = 'internal scratch']
  #allocation2 [shape = 'f32[2,512]{1,0:T(2,128)}', space=vmem, size = 0x1000, scoped, tag = 'scratch operand']
  #allocation3 [shape = 'f32[2,128]{1,0:T(2,128)}', space=vmem, size = 0x400, scoped, tag = 'scratch operand']
  %s0 = inlined_call_operand.vmem [shape: bf16[2,256,32], index: 0, kind: input, shape index: {}]
  %s1 = inlined_call_operand.vmem [shape: bf16[32,512], index: 1, kind: input, shape index: {}]
  %s2 = inlined_call_operand.vmem [shape: f32[1,512], index: 2, kind: input, shape index: {}]
  %s3 = inlined_call_operand.vmem [shape: bf16[512,128], index: 3, kind: input, shape index: {}]
  %s4 = inlined_call_operand.vmem [shape: f32[1,128], index: 4, kind: input, shape index: {}]
  %s5 = inlined_call_operand.vmem [shape: f32[8,2,32], index: 5, kind: input, shape index: {}]
  %s6 = inlined_call_operand.vmem [shape: bf16[2,32,128], index: 6, kind: input, shape index: {}]
  %s7 = inlined_call_operand.vmem [shape: bf16[2,32,128], index: 7, kind: input, shape index: {}]
  %s8 = inlined_call_operand.vmem [shape: f32[2,1,128], index: 8, kind: input, shape index: {}]
  %s9 = inlined_call_operand.vmem [shape: bf16[128,128], index: 9, kind: input, shape index: {}]
  %s10 = inlined_call_operand.vmem [shape: f32[1,128], index: 10, kind: input, shape index: {}]
  %s11 = inlined_call_operand.vmem [shape: bf16[128,128], index: 11, kind: input, shape index: {}]
  %s12 = inlined_call_operand.vmem [shape: f32[1,128], index: 12, kind: input, shape index: {}]
  %s13 = inlined_call_operand.vmem [shape: bf16[128,128], index: 13, kind: input, shape index: {}]
  %s14 = inlined_call_operand.vmem [shape: f32[1,128], index: 14, kind: input, shape index: {}]
  %s15 = inlined_call_operand.hbm [shape: f32[2,128], index: 15, kind: output, shape index: {}]
  %s16 = sld [smem:[#allocation0]]
  $region78: #{visual_qa_forward.1} parent=0
    _
  %s18 = ssub.s32 1, %s16
  %s19 = scalar_select 0, %s18, %s16
  $region1: #{visual_qa_forward.1} parent=0
    #allocation4 [shape = 'u8[1024]{0}', space=vmem, size = 0x400, scoped, tag = 'output window, operand 0, single buffered']
    #allocation5 [shape = 's32[1]{0}', space=sflag, size = 0x4, scoped, tag = 'scoped memory for visual_qa_forward.1']
    %20 = vsyncpa [#allocation5], 0
    // Predicated region
    $region2: #{visual_qa_forward.1} parent=1 // pred_check
      _
    $region3: #{visual_qa_forward.1} parent=1 // pred_check_branch
      %22 = sbr.rel (0) target = $region5
    $region4: #{visual_qa_forward.1} parent=1 // pred_region
      _
    $region5: #{visual_qa_forward.1} parent=1 // pred_fallthru
      _
    // Predicated region
    $region6: #{visual_qa_forward.1} parent=1 // pred_check
      _
    $region7: #{visual_qa_forward.1} parent=1 // pred_check_branch
      %24 = sbr.rel (0) target = $region9
    $region8: #{visual_qa_forward.1} parent=1 // pred_region
      _
    $region9: #{visual_qa_forward.1} parent=1 // pred_fallthru
      _
    // Predicated region
    $region10: #{visual_qa_forward.1} parent=1 // pred_check
      _
    $region11: #{visual_qa_forward.1} parent=1 // pred_check_branch
      %26 = sbr.rel (0) target = $region13
    $region12: #{visual_qa_forward.1} parent=1 // pred_region
      _
    $region13: #{visual_qa_forward.1} parent=1 // pred_fallthru
      _
    // Predicated region
    $region14: #{visual_qa_forward.1} parent=1 // pred_check
      _
    $region15: #{visual_qa_forward.1} parent=1 // pred_check_branch
      %28 = sbr.rel (0) target = $region17
    $region16: #{visual_qa_forward.1} parent=1 // pred_region
      _
    $region17: #{visual_qa_forward.1} parent=1 // pred_fallthru
      _
    // Predicated region
    $region18: #{visual_qa_forward.1} parent=1 // pred_check
      _
    $region19: #{visual_qa_forward.1} parent=1 // pred_check_branch
      %30 = sbr.rel (0) target = $region21
    $region20: #{visual_qa_forward.1} parent=1 // pred_region
      _
    $region21: #{visual_qa_forward.1} parent=1 // pred_fallthru
      _
    // Predicated region
    $region22: #{visual_qa_forward.1} parent=1 // pred_check
      _
    $region23: #{visual_qa_forward.1} parent=1 // pred_check_branch
      %32 = sbr.rel (0) target = $region25
    $region24: #{visual_qa_forward.1} parent=1 // pred_region
      _
    $region25: #{visual_qa_forward.1} parent=1 // pred_fallthru
      _
    // Predicated region
    $region26: #{visual_qa_forward.1} parent=1 // pred_check
      _
    $region27: #{visual_qa_forward.1} parent=1 // pred_check_branch
      %34 = sbr.rel (0) target = $region29
    $region28: #{visual_qa_forward.1} parent=1 // pred_region
      _
    $region29: #{visual_qa_forward.1} parent=1 // pred_fallthru
      _
    // Predicated region
    $region30: #{visual_qa_forward.1} parent=1 // pred_check
      _
    $region31: #{visual_qa_forward.1} parent=1 // pred_check_branch
      %36 = sbr.rel (0) target = $region33
    $region32: #{visual_qa_forward.1} parent=1 // pred_region
      _
    $region33: #{visual_qa_forward.1} parent=1 // pred_fallthru
      _
    // Predicated region
    $region34: #{visual_qa_forward.1} parent=1 // pred_check
      _
    $region35: #{visual_qa_forward.1} parent=1 // pred_check_branch
      %38 = sbr.rel (0) target = $region37
    $region36: #{visual_qa_forward.1} parent=1 // pred_region
      _
    $region37: #{visual_qa_forward.1} parent=1 // pred_fallthru
      _
    // Predicated region
    $region38: #{visual_qa_forward.1} parent=1 // pred_check
      _
    $region39: #{visual_qa_forward.1} parent=1 // pred_check_branch
      %40 = sbr.rel (0) target = $region41
    $region40: #{visual_qa_forward.1} parent=1 // pred_region
      _
    $region41: #{visual_qa_forward.1} parent=1 // pred_fallthru
      _
    // Predicated region
    $region42: #{visual_qa_forward.1} parent=1 // pred_check
      _
    $region43: #{visual_qa_forward.1} parent=1 // pred_check_branch
      %42 = sbr.rel (0) target = $region45
    $region44: #{visual_qa_forward.1} parent=1 // pred_region
      _
    $region45: #{visual_qa_forward.1} parent=1 // pred_fallthru
      _
    // Predicated region
    $region46: #{visual_qa_forward.1} parent=1 // pred_check
      _
    $region47: #{visual_qa_forward.1} parent=1 // pred_check_branch
      %44 = sbr.rel (0) target = $region49
    $region48: #{visual_qa_forward.1} parent=1 // pred_region
      _
    $region49: #{visual_qa_forward.1} parent=1 // pred_fallthru
      _
    // Predicated region
    $region50: #{visual_qa_forward.1} parent=1 // pred_check
      _
    $region51: #{visual_qa_forward.1} parent=1 // pred_check_branch
      %46 = sbr.rel (0) target = $region53
    $region52: #{visual_qa_forward.1} parent=1 // pred_region
      _
    $region53: #{visual_qa_forward.1} parent=1 // pred_fallthru
      _
    // Predicated region
    $region54: #{visual_qa_forward.1} parent=1 // pred_check
      _
    $region55: #{visual_qa_forward.1} parent=1 // pred_check_branch
      %48 = sbr.rel (0) target = $region57
    $region56: #{visual_qa_forward.1} parent=1 // pred_region
      _
    $region57: #{visual_qa_forward.1} parent=1 // pred_fallthru
      _
    // Predicated region
    $region58: #{visual_qa_forward.1} parent=1 // pred_check
      _
    $region59: #{visual_qa_forward.1} parent=1 // pred_check_branch
      %50 = sbr.rel (0) target = $region61
    $region60: #{visual_qa_forward.1} parent=1 // pred_region
      _
    $region61: #{visual_qa_forward.1} parent=1 // pred_fallthru
      _
    %p52 = scmp.eq.s32.totalorder 0, 0
    // Predicated region
    $region62: #{visual_qa_forward.1} parent=1 // pred_check
      %p53 = pneg %p52
    $region63: #{visual_qa_forward.1} parent=1 // pred_check_branch
      %55 = sbr.rel (%p53) target = $region65
    $region64: #{visual_qa_forward.1} parent=1 // pred_region
      %56 = vst [vmem:[#allocation2] sm:$0xff] 0.0
      %v57 = vld [vmem:[%s5] sm:$0x3]
      %v58 = vld [vmem:[%s5 + $0x2] sm:$0x3]
      %v59 = vld [vmem:[%s5 + $0x4] sm:$0x3]
      %v60 = vld [vmem:[%s5 + $0x6] sm:$0x3]
      %v61 = vld [vmem:[%s5 + $0x8] sm:$0x3]
      %v62 = vld [vmem:[%s5 + $0xa] sm:$0x3]
      %v63 = vld [vmem:[%s5 + $0xc] sm:$0x3]
      %v64 = vld [vmem:[%s5 + $0xe] sm:$0x3]
      %v65 = vld [vmem:[%s6] sm:$0xf]
      %v66 = vld [vmem:[%s6 + $0x4] sm:$0xf]
      %v67 = vld [vmem:[%s6 + $0x8] sm:$0xf]
      %v68 = vld [vmem:[%s6 + $0xc] sm:$0xf]
      %v69 = vld [vmem:[%s6 + $0x10] sm:$0xf]
      %v70 = vld [vmem:[%s6 + $0x14] sm:$0xf]
      %v71 = vld [vmem:[%s6 + $0x18] sm:$0xf]
      %v72 = vld [vmem:[%s6 + $0x1c] sm:$0xf]
      %v73 = vld [vmem:[%s7] sm:$0xf]
      %v74 = vld [vmem:[%s7 + $0x4] sm:$0xf]
      %v75 = vld [vmem:[%s7 + $0x8] sm:$0xf]
      %v76 = vld [vmem:[%s7 + $0xc] sm:$0xf]
      %v77 = vld [vmem:[%s7 + $0x10] sm:$0xf]
      %v78 = vld [vmem:[%s7 + $0x14] sm:$0xf]
      %v79 = vld [vmem:[%s7 + $0x18] sm:$0xf]
      %v80 = vld [vmem:[%s7 + $0x1c] sm:$0xf]
      %v81 = vld [vmem:[%s8] sm:$0x1]
      %v82 = vld [vmem:[%s8 + $0x1] sm:$0x1]
      %91 = vst [vmem:[#allocation1] ss:$4 sm:$0xff] %v57
      %s92 = scalar_lea.vmem [#allocation1], 1
      %93 = vst [vmem:[%s92] ss:$4 sm:$0xff] %v58
      %s94 = scalar_lea.vmem [#allocation1], 2
      %95 = vst [vmem:[%s94] ss:$4 sm:$0xff] %v59
      %s96 = scalar_lea.vmem [#allocation1], 3
      %97 = vst [vmem:[%s96] ss:$4 sm:$0xff] %v60
      %s98 = scalar_lea.vmem [#allocation1], 32
      %99 = vst [vmem:[%s98] ss:$4 sm:$0xff] %v61
      %s100 = scalar_lea.vmem [#allocation1], 33
      %101 = vst [vmem:[%s100] ss:$4 sm:$0xff] %v62
      %s102 = scalar_lea.vmem [#allocation1], 34
      %103 = vst [vmem:[%s102] ss:$4 sm:$0xff] %v63
      %s104 = scalar_lea.vmem [#allocation1], 35
      %105 = vst [vmem:[%s104] ss:$4 sm:$0xff] %v64
      %v106 = vld.sshfl [vmem:[#allocation1] sm:$0xff pattern:$0x73625140]
      %v107 = vld.sshfl [vmem:[#allocation1 + $0x20] sm:$0xff pattern:$0x73625140]
      %v110 = vpack.c.bf16 %v107, %v106
      %v112 = vperm.slane %v81, 0
      %v118 = vunpack.c.l.b16 %v65
      %v119 = vunpack.c.l.b16 %v66
      %v120 = vunpack.c.l.b16 %v67
      %v121 = vunpack.c.l.b16 %v68
      %v122 = vpack.c.b16 %v119, %v118
      %v123 = vpack.c.b16 %v121, %v120
      %vm126 = vcmask 261120
      %v128 = vsel %vm126, %v110, 0
      %130 = vmatpush.bf16.msra.mxu0 0
      %131 = vmatpush.bf16.msra.mxu0 0
      %132 = vmatpush.bf16.msra.mxu0 0
      %133 = vmatpush.bf16.msra.mxu0 0
      %134 = vmatpush.bf16.msra.mxu0 0
      %135 = vmatpush.bf16.msra.mxu0 0
      %136 = vmatpush.bf16.msra.mxu0 %v123
      %137 = vmatpush.bf16.msra.mxu0 %v122
      %138 = vmatmul.bf16.gmra.mxu0 %v128
      %v139 = vpop.f32.mrf.mxu0
      %v140 = vadd.f32 %v112, %v139
      %v141 = vpop.f32.mrf.mxu0
      %v142 = vadd.f32 %v112, %v141
      %143 = vdwg.mxu0
      %v146 = vrot.slane %v140, 2
      %v147 = vrot.slane %v140, 4
      %v148 = vrot.slane %v140, 6
      %v149 = vrot.slane %v142, 2
      %v150 = vrot.slane %v142, 4
      %v151 = vrot.slane %v142, 6
      %v162 = vunpack.c.l.b16 %v73
      %v163 = vunpack.c.l.b16 %v74
      %v164 = vunpack.c.l.b16 %v75
      %v165 = vunpack.c.l.b16 %v76
      %v166 = vpack.c.b16 %v163, %v162
      %v167 = vpack.c.b16 %v165, %v164
      %v171 = vsel %vm126, 0, 0
      %173 = vmatpush.bf16.msra.mxu0 0
      %174 = vmatpush.bf16.msra.mxu0 0
      %175 = vmatpush.bf16.msra.mxu0 0
      %176 = vmatpush.bf16.msra.mxu0 0
      %177 = vmatpush.bf16.msra.mxu0 0
      %178 = vmatpush.bf16.msra.mxu0 0
      %179 = vmatpush.bf16.msra.mxu0 %v167
      %180 = vmatpush.bf16.msra.mxu0 %v166
      %181 = vmatmul.bf16.gmra.mxu0 %v171
      %v182 = vpop.f32.mrf.mxu0
      %v183 = vadd.f32 0.0, %v182
      %v184 = vpop.f32.mrf.mxu0
      %185 = vdwg.mxu0
      %v186 = vadd.f32 %v140, %v183
      %v187 = vxor.u32 %v186, 2147483648
      %v188 = vmul.f32 %v187, 1.442695
      %v189 = vpow.pop %v188
      %v190 = vadd.f32 %v189, 1.0
      %v191 = vrcp.pop %v190
      %v192 = vmul.f32 %v190, %v191
      %v193 = vsub.f32 1.0, %v192
      %v194 = vmul.f32 %v191, %v193
      %v195 = vadd.f32 %v191, %v194
      %vm196 = vweird.f32 %v190
      %vm197 = vweird.f32 %v191
      %vm198 = vmor %vm196, %vm197
      %v199 = vsel %vm198, %v191, %v195
      %v200 = vand.u32 2147483647, %v190
      %vm201 = vcmp.eq.f32.partialorder %v200, 8.507059e+37
      %v202 = vand.u32 %v190, 2147483648
      %v203 = vor.u32 1.1754944e-38, %v202
      %v204 = vsel %vm201, %v203, %v199
      %v205 = vmul.f32 1.0, %v204
      %v206 = vtanh.pop %v186
      %v207 = vmul.f32 %v205, 0.0
      %209 = vrot.lane.b32.xlu0 %v206, 64
      %v210 = vpop.permute.xlu0 %209
      %v212 = vmul.f32 %v205, %v210
      %214 = vrot.lane.b32.xlu0 %v212, 32
      %v215 = vpop.permute.xlu0 %214
      %v217 = vadd.f32 %v207, %v215
      %v218 = vtanh.pop %v217
      %220 = vrot.lane.b32.xlu0 %v218, 64
      %v221 = vpop.permute.xlu0 %220
      %v223 = vmul.f32 %v205, %v221
      %v224 = vpack.c.bf16 %v223, %v223
      %v229 = vunpack.c.l.b16 %v77
      %v230 = vunpack.c.l.b16 %v78
      %v231 = vunpack.c.l.b16 %v79
      %v232 = vunpack.c.l.b16 %v80
      %v233 = vpack.c.b16 %v230, %v229
      %v234 = vpack.c.b16 %v232, %v231
      %237 = vmatpush.bf16.msra.mxu0 0
      %238 = vmatpush.bf16.msra.mxu0 0
      %239 = vmatpush.bf16.msra.mxu0 0
      %240 = vmatpush.bf16.msra.mxu0 0
      %241 = vmatpush.bf16.msra.mxu0 0
      %242 = vmatpush.bf16.msra.mxu0 0
      %243 = vmatpush.bf16.msra.mxu0 %v234
      %244 = vmatpush.bf16.msra.mxu0 %v233
      %245 = vmatmul.bf16.gmra.mxu0 %v171
      %v246 = vpop.f32.mrf.mxu0
      %v247 = vadd.f32 0.0, %v246
      %v248 = vpop.f32.mrf.mxu0
      %249 = vdwg.mxu0
      %251 = vrot.lane.b32.xlu0 %v224, 32
      %v252 = vpop.permute.xlu0 %251
      %v257 = vunpack.c.l.b16 %v69
      %v258 = vunpack.c.l.b16 %v70
      %v259 = vunpack.c.l.b16 %v71
      %v260 = vunpack.c.l.b16 %v72
      %v261 = vpack.c.b16 %v258, %v257
      %v262 = vpack.c.b16 %v260, %v259
      %v266 = vsel %vm126, %v252, 0
      %268 = vmatpush.bf16.msra.mxu0 0
      %269 = vmatpush.bf16.msra.mxu0 0
      %270 = vmatpush.bf16.msra.mxu0 0
      %271 = vmatpush.bf16.msra.mxu0 0
      %272 = vmatpush.bf16.msra.mxu0 0
      %273 = vmatpush.bf16.msra.mxu0 0
      %274 = vmatpush.bf16.msra.mxu0 %v262
      %275 = vmatpush.bf16.msra.mxu0 %v261
      %276 = vmatmul.bf16.gmra.mxu0 %v266
      %v277 = vpop.f32.mrf.mxu0
      %v278 = vadd.f32 %v247, %v277
      %v279 = vpop.f32.mrf.mxu0
      %280 = vdwg.mxu0
      %v282 = vperm.slane %v82, 0
      %v284 = vadd.f32 %v278, %v282
      %v285 = vxor.u32 %v284, 2147483648
      %v286 = vmul.f32 %v285, 1.442695
      %v287 = vpow.pop %v286
      %v288 = vadd.f32 %v287, 1.0
      %v289 = vrcp.pop %v288
      %v290 = vmul.f32 %v288, %v289
      %v291 = vsub.f32 1.0, %v290
      %v292 = vmul.f32 %v289, %v291
      %v293 = vadd.f32 %v289, %v292
      %vm294 = vweird.f32 %v288
      %vm295 = vweird.f32 %v289
      %vm296 = vmor %vm294, %vm295
      %v297 = vsel %vm296, %v289, %v293
      %v298 = vand.u32 2147483647, %v288
      %vm299 = vcmp.eq.f32.partialorder %v298, 8.507059e+37
      %v300 = vand.u32 %v288, 2147483648
      %v301 = vor.u32 1.1754944e-38, %v300
      %v302 = vsel %vm299, %v301, %v297
      %v303 = vmul.f32 1.0, %v302
      %v304 = vtanh.pop %v284
      %v305 = vmul.f32 %v303, 0.0
      %307 = vrot.lane.b32.xlu0 %v304, 64
      %v308 = vpop.permute.xlu0 %307
      %v310 = vmul.f32 %v303, %v308
      %312 = vrot.lane.b32.xlu0 %v310, 32
      %v313 = vpop.permute.xlu0 %312
      %v315 = vadd.f32 %v305, %v313
      %v316 = vtanh.pop %v315
      %318 = vrot.lane.b32.xlu0 %v316, 64
      %v319 = vpop.permute.xlu0 %318
      %v321 = vmul.f32 %v303, %v319
      %322 = vmatpush.bf16.msra.mxu0 0
      %323 = vmatpush.bf16.msra.mxu0 0
      %324 = vmatpush.bf16.msra.mxu0 0
      %325 = vmatpush.bf16.msra.mxu0 0
      %326 = vmatpush.bf16.msra.mxu0 0
      %327 = vmatpush.bf16.msra.mxu0 0
      %328 = vmatpush.bf16.msra.mxu0 %v167
      %329 = vmatpush.bf16.msra.mxu0 %v166
      %330 = vmatmul.bf16.gmra.mxu0 %v266
      %v331 = vpop.f32.mrf.mxu0
      %v332 = vadd.f32 0.0, %v331
      %v333 = vpop.f32.mrf.mxu0
      %334 = vdwg.mxu0
      %v335 = vadd.f32 %v146, %v332
      %v336 = vxor.u32 %v335, 2147483648
      %v337 = vmul.f32 %v336, 1.442695
      %v338 = vpow.pop %v337
      %v339 = vadd.f32 %v338, 1.0
      %v340 = vrcp.pop %v339
      %v341 = vmul.f32 %v339, %v340
      %v342 = vsub.f32 1.0, %v341
      %v343 = vmul.f32 %v340, %v342
      %v344 = vadd.f32 %v340, %v343
      %vm345 = vweird.f32 %v339
      %vm346 = vweird.f32 %v340
      %vm347 = vmor %vm345, %vm346
      %v348 = vsel %vm347, %v340, %v344
      %v349 = vand.u32 2147483647, %v339
      %vm350 = vcmp.eq.f32.partialorder %v349, 8.507059e+37
      %v351 = vand.u32 %v339, 2147483648
      %v352 = vor.u32 1.1754944e-38, %v351
      %v353 = vsel %vm350, %v352, %v348
      %v354 = vmul.f32 1.0, %v353
      %v355 = vtanh.pop %v335
      %v356 = vmul.f32 %v354, %v217
      %358 = vrot.lane.b32.xlu0 %v355, 64
      %v359 = vpop.permute.xlu0 %358
      %v361 = vmul.f32 %v354, %v359
      %363 = vrot.lane.b32.xlu0 %v361, 32
      %v364 = vpop.permute.xlu0 %363
      %v366 = vadd.f32 %v356, %v364
      %v367 = vtanh.pop %v366
      %369 = vrot.lane.b32.xlu0 %v367, 64
      %v370 = vpop.permute.xlu0 %369
      %v372 = vmul.f32 %v354, %v370
      %v373 = vpack.c.bf16 %v372, %v372
      %v374 = vpack.c.bf16 %v321, %v321
      %376 = vrot.lane.b32.xlu0 %v374, 32
      %v377 = vpop.permute.xlu0 %376
      %v379 = vsel %vm126, %v377, 0
      %381 = vmatpush.bf16.msra.mxu0 0
      %382 = vmatpush.bf16.msra.mxu0 0
      %383 = vmatpush.bf16.msra.mxu0 0
      %384 = vmatpush.bf16.msra.mxu0 0
      %385 = vmatpush.bf16.msra.mxu0 0
      %386 = vmatpush.bf16.msra.mxu0 0
      %387 = vmatpush.bf16.msra.mxu0 %v234
      %388 = vmatpush.bf16.msra.mxu0 %v233
      %389 = vmatmul.bf16.gmra.mxu0 %v379
      %v390 = vpop.f32.mrf.mxu0
      %v391 = vadd.f32 0.0, %v390
      %v392 = vpop.f32.mrf.mxu0
      %393 = vdwg.mxu0
      %395 = vrot.lane.b32.xlu0 %v373, 32
      %v396 = vpop.permute.xlu0 %395
      %v398 = vsel %vm126, %v396, 0
      %400 = vmatpush.bf16.msra.mxu0 0
      %401 = vmatpush.bf16.msra.mxu0 0
      %402 = vmatpush.bf16.msra.mxu0 0
      %403 = vmatpush.bf16.msra.mxu0 0
      %404 = vmatpush.bf16.msra.mxu0 0
      %405 = vmatpush.bf16.msra.mxu0 0
      %406 = vmatpush.bf16.msra.mxu0 %v262
      %407 = vmatpush.bf16.msra.mxu0 %v261
      %408 = vmatmul.bf16.gmra.mxu0 %v398
      %v409 = vpop.f32.mrf.mxu0
      %v410 = vadd.f32 %v391, %v409
      %v411 = vpop.f32.mrf.mxu0
      %412 = vdwg.mxu0
      %v413 = vadd.f32 %v410, %v282
      %v414 = vxor.u32 %v413, 2147483648
      %v415 = vmul.f32 %v414, 1.442695
      %v416 = vpow.pop %v415
      %v417 = vadd.f32 %v416, 1.0
      %v418 = vrcp.pop %v417
      %v419 = vmul.f32 %v417, %v418
      %v420 = vsub.f32 1.0, %v419
      %v421 = vmul.f32 %v418, %v420
      %v422 = vadd.f32 %v418, %v421
      %vm423 = vweird.f32 %v417
      %vm424 = vweird.f32 %v418
      %vm425 = vmor %vm423, %vm424
      %v426 = vsel %vm425, %v418, %v422
      %v427 = vand.u32 2147483647, %v417
      %vm428 = vcmp.eq.f32.partialorder %v427, 8.507059e+37
      %v429 = vand.u32 %v417, 2147483648
      %v430 = vor.u32 1.1754944e-38, %v429
      %v431 = vsel %vm428, %v430, %v426
      %v432 = vmul.f32 1.0, %v431
      %v433 = vtanh.pop %v413
      %v434 = vmul.f32 %v432, %v315
      %436 = vrot.lane.b32.xlu0 %v433, 64
      %v437 = vpop.permute.xlu0 %436
      %v439 = vmul.f32 %v432, %v437
      %441 = vrot.lane.b32.xlu0 %v439, 32
      %v442 = vpop.permute.xlu0 %441
      %v444 = vadd.f32 %v434, %v442
      %v445 = vtanh.pop %v444
      %447 = vrot.lane.b32.xlu0 %v445, 64
      %v448 = vpop.permute.xlu0 %447
      %v450 = vmul.f32 %v432, %v448
      %451 = vmatpush.bf16.msra.mxu0 0
      %452 = vmatpush.bf16.msra.mxu0 0
      %453 = vmatpush.bf16.msra.mxu0 0
      %454 = vmatpush.bf16.msra.mxu0 0
      %455 = vmatpush.bf16.msra.mxu0 0
      %456 = vmatpush.bf16.msra.mxu0 0
      %457 = vmatpush.bf16.msra.mxu0 %v167
      %458 = vmatpush.bf16.msra.mxu0 %v166
      %459 = vmatmul.bf16.gmra.mxu0 %v398
      %v460 = vpop.f32.mrf.mxu0
      %v461 = vadd.f32 0.0, %v460
      %v462 = vpop.f32.mrf.mxu0
      %463 = vdwg.mxu0
      %v464 = vadd.f32 %v147, %v461
      %v465 = vxor.u32 %v464, 2147483648
      %v466 = vmul.f32 %v465, 1.442695
      %v467 = vpow.pop %v466
      %v468 = vadd.f32 %v467, 1.0
      %v469 = vrcp.pop %v468
      %v470 = vmul.f32 %v468, %v469
      %v471 = vsub.f32 1.0, %v470
      %v472 = vmul.f32 %v469, %v471
      %v473 = vadd.f32 %v469, %v472
      %vm474 = vweird.f32 %v468
      %vm475 = vweird.f32 %v469
      %vm476 = vmor %vm474, %vm475
      %v477 = vsel %vm476, %v469, %v473
      %v478 = vand.u32 2147483647, %v468
      %vm479 = vcmp.eq.f32.partialorder %v478, 8.507059e+37
      %v480 = vand.u32 %v468, 2147483648
      %v481 = vor.u32 1.1754944e-38, %v480
      %v482 = vsel %vm479, %v481, %v477
      %v483 = vmul.f32 1.0, %v482
      %v484 = vtanh.pop %v464
      %v485 = vmul.f32 %v483, %v366
      %487 = vrot.lane.b32.xlu0 %v484, 64
      %v488 = vpop.permute.xlu0 %487
      %v490 = vmul.f32 %v483, %v488
      %492 = vrot.lane.b32.xlu0 %v490, 32
      %v493 = vpop.permute.xlu0 %492
      %v495 = vadd.f32 %v485, %v493
      %v496 = vtanh.pop %v495
      %498 = vrot.lane.b32.xlu0 %v496, 64
      %v499 = vpop.permute.xlu0 %498
      %v501 = vmul.f32 %v483, %v499
      %v502 = vpack.c.bf16 %v501, %v501
      %v503 = vpack.c.bf16 %v450, %v450
      %505 = vrot.lane.b32.xlu0 %v503, 32
      %v506 = vpop.permute.xlu0 %505
      %v508 = vsel %vm126, %v506, 0
      %510 = vmatpush.bf16.msra.mxu0 0
      %511 = vmatpush.bf16.msra.mxu0 0
      %512 = vmatpush.bf16.msra.mxu0 0
      %513 = vmatpush.bf16.msra.mxu0 0
      %514 = vmatpush.bf16.msra.mxu0 0
      %515 = vmatpush.bf16.msra.mxu0 0
      %516 = vmatpush.bf16.msra.mxu0 %v234
      %517 = vmatpush.bf16.msra.mxu0 %v233
      %518 = vmatmul.bf16.gmra.mxu0 %v508
      %v519 = vpop.f32.mrf.mxu0
      %v520 = vadd.f32 0.0, %v519
      %v521 = vpop.f32.mrf.mxu0
      %522 = vdwg.mxu0
      %524 = vrot.lane.b32.xlu0 %v502, 32
      %v525 = vpop.permute.xlu0 %524
      %v527 = vsel %vm126, %v525, 0
      %529 = vmatpush.bf16.msra.mxu0 0
      %530 = vmatpush.bf16.msra.mxu0 0
      %531 = vmatpush.bf16.msra.mxu0 0
      %532 = vmatpush.bf16.msra.mxu0 0
      %533 = vmatpush.bf16.msra.mxu0 0
      %534 = vmatpush.bf16.msra.mxu0 0
      %535 = vmatpush.bf16.msra.mxu0 %v262
      %536 = vmatpush.bf16.msra.mxu0 %v261
      %537 = vmatmul.bf16.gmra.mxu0 %v527
      %v538 = vpop.f32.mrf.mxu0
      %v539 = vadd.f32 %v520, %v538
      %v540 = vpop.f32.mrf.mxu0
      %541 = vdwg.mxu0
      %v542 = vadd.f32 %v539, %v282
      %v543 = vxor.u32 %v542, 2147483648
      %v544 = vmul.f32 %v543, 1.442695
      %v545 = vpow.pop %v544
      %v546 = vadd.f32 %v545, 1.0
      %v547 = vrcp.pop %v546
      %v548 = vmul.f32 %v546, %v547
      %v549 = vsub.f32 1.0, %v548
      %v550 = vmul.f32 %v547, %v549
      %v551 = vadd.f32 %v547, %v550
      %vm552 = vweird.f32 %v546
      %vm553 = vweird.f32 %v547
      %vm554 = vmor %vm552, %vm553
      %v555 = vsel %vm554, %v547, %v551
      %v556 = vand.u32 2147483647, %v546
      %vm557 = vcmp.eq.f32.partialorder %v556, 8.507059e+37
      %v558 = vand.u32 %v546, 2147483648
      %v559 = vor.u32 1.1754944e-38, %v558
      %v560 = vsel %vm557, %v559, %v555
      %v561 = vmul.f32 1.0, %v560
      %v562 = vtanh.pop %v542
      %v563 = vmul.f32 %v561, %v444
      %565 = vrot.lane.b32.xlu0 %v562, 64
      %v566 = vpop.permute.xlu0 %565
      %v568 = vmul.f32 %v561, %v566
      %570 = vrot.lane.b32.xlu0 %v568, 32
      %v571 = vpop.permute.xlu0 %570
      %v573 = vadd.f32 %v563, %v571
      %v574 = vtanh.pop %v573
      %576 = vrot.lane.b32.xlu0 %v574, 64
      %v577 = vpop.permute.xlu0 %576
      %v579 = vmul.f32 %v561, %v577
      %580 = vmatpush.bf16.msra.mxu0 0
      %581 = vmatpush.bf16.msra.mxu0 0
      %582 = vmatpush.bf16.msra.mxu0 0
      %583 = vmatpush.bf16.msra.mxu0 0
      %584 = vmatpush.bf16.msra.mxu0 0
      %585 = vmatpush.bf16.msra.mxu0 0
      %586 = vmatpush.bf16.msra.mxu0 %v167
      %587 = vmatpush.bf16.msra.mxu0 %v166
      %588 = vmatmul.bf16.gmra.mxu0 %v527
      %v589 = vpop.f32.mrf.mxu0
      %v590 = vadd.f32 0.0, %v589
      %v591 = vpop.f32.mrf.mxu0
      %592 = vdwg.mxu0
      %v593 = vadd.f32 %v148, %v590
      %v594 = vxor.u32 %v593, 2147483648
      %v595 = vmul.f32 %v594, 1.442695
      %v596 = vpow.pop %v595
      %v597 = vadd.f32 %v596, 1.0
      %v598 = vrcp.pop %v597
      %v599 = vmul.f32 %v597, %v598
      %v600 = vsub.f32 1.0, %v599
      %v601 = vmul.f32 %v598, %v600
      %v602 = vadd.f32 %v598, %v601
      %vm603 = vweird.f32 %v597
      %vm604 = vweird.f32 %v598
      %vm605 = vmor %vm603, %vm604
      %v606 = vsel %vm605, %v598, %v602
      %v607 = vand.u32 2147483647, %v597
      %vm608 = vcmp.eq.f32.partialorder %v607, 8.507059e+37
      %v609 = vand.u32 %v597, 2147483648
      %v610 = vor.u32 1.1754944e-38, %v609
      %v611 = vsel %vm608, %v610, %v606
      %v612 = vmul.f32 1.0, %v611
      %v613 = vtanh.pop %v593
      %v614 = vmul.f32 %v612, %v495
      %616 = vrot.lane.b32.xlu0 %v613, 64
      %v617 = vpop.permute.xlu0 %616
      %v619 = vmul.f32 %v612, %v617
      %621 = vrot.lane.b32.xlu0 %v619, 32
      %v622 = vpop.permute.xlu0 %621
      %v624 = vadd.f32 %v614, %v622
      %v625 = vtanh.pop %v624
      %627 = vrot.lane.b32.xlu0 %v625, 64
      %v628 = vpop.permute.xlu0 %627
      %v630 = vmul.f32 %v612, %v628
      %v631 = vpack.c.bf16 %v630, %v630
      %v632 = vpack.c.bf16 %v579, %v579
      %634 = vrot.lane.b32.xlu0 %v632, 32
      %v635 = vpop.permute.xlu0 %634
      %v637 = vsel %vm126, %v635, 0
      %639 = vmatpush.bf16.msra.mxu0 0
      %640 = vmatpush.bf16.msra.mxu0 0
      %641 = vmatpush.bf16.msra.mxu0 0
      %642 = vmatpush.bf16.msra.mxu0 0
      %643 = vmatpush.bf16.msra.mxu0 0
      %644 = vmatpush.bf16.msra.mxu0 0
      %645 = vmatpush.bf16.msra.mxu0 %v234
      %646 = vmatpush.bf16.msra.mxu0 %v233
      %647 = vmatmul.bf16.gmra.mxu0 %v637
      %v648 = vpop.f32.mrf.mxu0
      %v649 = vadd.f32 0.0, %v648
      %v650 = vpop.f32.mrf.mxu0
      %651 = vdwg.mxu0
      %653 = vrot.lane.b32.xlu0 %v631, 32
      %v654 = vpop.permute.xlu0 %653
      %v656 = vsel %vm126, %v654, 0
      %658 = vmatpush.bf16.msra.mxu0 0
      %659 = vmatpush.bf16.msra.mxu0 0
      %660 = vmatpush.bf16.msra.mxu0 0
      %661 = vmatpush.bf16.msra.mxu0 0
      %662 = vmatpush.bf16.msra.mxu0 0
      %663 = vmatpush.bf16.msra.mxu0 0
      %664 = vmatpush.bf16.msra.mxu0 %v262
      %665 = vmatpush.bf16.msra.mxu0 %v261
      %666 = vmatmul.bf16.gmra.mxu0 %v656
      %v667 = vpop.f32.mrf.mxu0
      %v668 = vadd.f32 %v649, %v667
      %v669 = vpop.f32.mrf.mxu0
      %670 = vdwg.mxu0
      %v671 = vadd.f32 %v668, %v282
      %v672 = vxor.u32 %v671, 2147483648
      %v673 = vmul.f32 %v672, 1.442695
      %v674 = vpow.pop %v673
      %v675 = vadd.f32 %v674, 1.0
      %v676 = vrcp.pop %v675
      %v677 = vmul.f32 %v675, %v676
      %v678 = vsub.f32 1.0, %v677
      %v679 = vmul.f32 %v676, %v678
      %v680 = vadd.f32 %v676, %v679
      %vm681 = vweird.f32 %v675
      %vm682 = vweird.f32 %v676
      %vm683 = vmor %vm681, %vm682
      %v684 = vsel %vm683, %v676, %v680
      %v685 = vand.u32 2147483647, %v675
      %vm686 = vcmp.eq.f32.partialorder %v685, 8.507059e+37
      %v687 = vand.u32 %v675, 2147483648
      %v688 = vor.u32 1.1754944e-38, %v687
      %v689 = vsel %vm686, %v688, %v684
      %v690 = vmul.f32 1.0, %v689
      %v691 = vtanh.pop %v671
      %v692 = vmul.f32 %v690, %v573
      %694 = vrot.lane.b32.xlu0 %v691, 64
      %v695 = vpop.permute.xlu0 %694
      %v697 = vmul.f32 %v690, %v695
      %699 = vrot.lane.b32.xlu0 %v697, 32
      %v700 = vpop.permute.xlu0 %699
      %v702 = vadd.f32 %v692, %v700
      %v703 = vtanh.pop %v702
      %705 = vrot.lane.b32.xlu0 %v703, 64
      %v706 = vpop.permute.xlu0 %705
      %v708 = vmul.f32 %v690, %v706
      %709 = vmatpush.bf16.msra.mxu0 0
      %710 = vmatpush.bf16.msra.mxu0 0
      %711 = vmatpush.bf16.msra.mxu0 0
      %712 = vmatpush.bf16.msra.mxu0 0
      %713 = vmatpush.bf16.msra.mxu0 0
      %714 = vmatpush.bf16.msra.mxu0 0
      %715 = vmatpush.bf16.msra.mxu0 %v167
      %716 = vmatpush.bf16.msra.mxu0 %v166
      %717 = vmatmul.bf16.gmra.mxu0 %v656
      %v718 = vpop.f32.mrf.mxu0
      %v719 = vadd.f32 0.0, %v718
      %v720 = vpop.f32.mrf.mxu0
      %721 = vdwg.mxu0
      %v722 = vadd.f32 %v142, %v719
      %v723 = vxor.u32 %v722, 2147483648
      %v724 = vmul.f32 %v723, 1.442695
      %v725 = vpow.pop %v724
      %v726 = vadd.f32 %v725, 1.0
      %v727 = vrcp.pop %v726
      %v728 = vmul.f32 %v726, %v727
      %v729 = vsub.f32 1.0, %v728
      %v730 = vmul.f32 %v727, %v729
      %v731 = vadd.f32 %v727, %v730
      %vm732 = vweird.f32 %v726
      %vm733 = vweird.f32 %v727
      %vm734 = vmor %vm732, %vm733
      %v735 = vsel %vm734, %v727, %v731
      %v736 = vand.u32 2147483647, %v726
      %vm737 = vcmp.eq.f32.partialorder %v736, 8.507059e+37
      %v738 = vand.u32 %v726, 2147483648
      %v739 = vor.u32 1.1754944e-38, %v738
      %v740 = vsel %vm737, %v739, %v735
      %v741 = vmul.f32 1.0, %v740
      %v742 = vtanh.pop %v722
      %v743 = vmul.f32 %v741, %v624
      %745 = vrot.lane.b32.xlu0 %v742, 64
      %v746 = vpop.permute.xlu0 %745
      %v748 = vmul.f32 %v741, %v746
      %750 = vrot.lane.b32.xlu0 %v748, 32
      %v751 = vpop.permute.xlu0 %750
      %v753 = vadd.f32 %v743, %v751
      %v754 = vtanh.pop %v753
      %756 = vrot.lane.b32.xlu0 %v754, 64
      %v757 = vpop.permute.xlu0 %756
      %v759 = vmul.f32 %v741, %v757
      %v760 = vpack.c.bf16 %v759, %v759
      %v761 = vpack.c.bf16 %v708, %v708
      %763 = vrot.lane.b32.xlu0 %v761, 32
      %v764 = vpop.permute.xlu0 %763
      %v766 = vsel %vm126, %v764, 0
      %768 = vmatpush.bf16.msra.mxu0 0
      %769 = vmatpush.bf16.msra.mxu0 0
      %770 = vmatpush.bf16.msra.mxu0 0
      %771 = vmatpush.bf16.msra.mxu0 0
      %772 = vmatpush.bf16.msra.mxu0 0
      %773 = vmatpush.bf16.msra.mxu0 0
      %774 = vmatpush.bf16.msra.mxu0 %v234
      %775 = vmatpush.bf16.msra.mxu0 %v233
      %776 = vmatmul.bf16.gmra.mxu0 %v766
      %v777 = vpop.f32.mrf.mxu0
      %v778 = vadd.f32 0.0, %v777
      %v779 = vpop.f32.mrf.mxu0
      %780 = vdwg.mxu0
      %782 = vrot.lane.b32.xlu0 %v760, 32
      %v783 = vpop.permute.xlu0 %782
      %v785 = vsel %vm126, %v783, 0
      %787 = vmatpush.bf16.msra.mxu0 0
      %788 = vmatpush.bf16.msra.mxu0 0
      %789 = vmatpush.bf16.msra.mxu0 0
      %790 = vmatpush.bf16.msra.mxu0 0
      %791 = vmatpush.bf16.msra.mxu0 0
      %792 = vmatpush.bf16.msra.mxu0 0
      %793 = vmatpush.bf16.msra.mxu0 %v262
      %794 = vmatpush.bf16.msra.mxu0 %v261
      %795 = vmatmul.bf16.gmra.mxu0 %v785
      %v796 = vpop.f32.mrf.mxu0
      %v797 = vadd.f32 %v778, %v796
      %v798 = vpop.f32.mrf.mxu0
      %799 = vdwg.mxu0
      %v800 = vadd.f32 %v797, %v282
      %v801 = vxor.u32 %v800, 2147483648
      %v802 = vmul.f32 %v801, 1.442695
      %v803 = vpow.pop %v802
      %v804 = vadd.f32 %v803, 1.0
      %v805 = vrcp.pop %v804
      %v806 = vmul.f32 %v804, %v805
      %v807 = vsub.f32 1.0, %v806
      %v808 = vmul.f32 %v805, %v807
      %v809 = vadd.f32 %v805, %v808
      %vm810 = vweird.f32 %v804
      %vm811 = vweird.f32 %v805
      %vm812 = vmor %vm810, %vm811
      %v813 = vsel %vm812, %v805, %v809
      %v814 = vand.u32 2147483647, %v804
      %vm815 = vcmp.eq.f32.partialorder %v814, 8.507059e+37
      %v816 = vand.u32 %v804, 2147483648
      %v817 = vor.u32 1.1754944e-38, %v816
      %v818 = vsel %vm815, %v817, %v813
      %v819 = vmul.f32 1.0, %v818
      %v820 = vtanh.pop %v800
      %v821 = vmul.f32 %v819, %v702
      %823 = vrot.lane.b32.xlu0 %v820, 64
      %v824 = vpop.permute.xlu0 %823
      %v826 = vmul.f32 %v819, %v824
      %828 = vrot.lane.b32.xlu0 %v826, 32
      %v829 = vpop.permute.xlu0 %828
      %v831 = vadd.f32 %v821, %v829
      %v832 = vtanh.pop %v831
      %834 = vrot.lane.b32.xlu0 %v832, 64
      %v835 = vpop.permute.xlu0 %834
      %v837 = vmul.f32 %v819, %v835
      %838 = vmatpush.bf16.msra.mxu0 0
      %839 = vmatpush.bf16.msra.mxu0 0
      %840 = vmatpush.bf16.msra.mxu0 0
      %841 = vmatpush.bf16.msra.mxu0 0
      %842 = vmatpush.bf16.msra.mxu0 0
      %843 = vmatpush.bf16.msra.mxu0 0
      %844 = vmatpush.bf16.msra.mxu0 %v167
      %845 = vmatpush.bf16.msra.mxu0 %v166
      %846 = vmatmul.bf16.gmra.mxu0 %v785
      %v847 = vpop.f32.mrf.mxu0
      %v848 = vadd.f32 0.0, %v847
      %v849 = vpop.f32.mrf.mxu0
      %850 = vdwg.mxu0
      %v851 = vadd.f32 %v149, %v848
      %v852 = vxor.u32 %v851, 2147483648
      %v853 = vmul.f32 %v852, 1.442695
      %v854 = vpow.pop %v853
      %v855 = vadd.f32 %v854, 1.0
      %v856 = vrcp.pop %v855
      %v857 = vmul.f32 %v855, %v856
      %v858 = vsub.f32 1.0, %v857
      %v859 = vmul.f32 %v856, %v858
      %v860 = vadd.f32 %v856, %v859
      %vm861 = vweird.f32 %v855
      %vm862 = vweird.f32 %v856
      %vm863 = vmor %vm861, %vm862
      %v864 = vsel %vm863, %v856, %v860
      %v865 = vand.u32 2147483647, %v855
      %vm866 = vcmp.eq.f32.partialorder %v865, 8.507059e+37
      %v867 = vand.u32 %v855, 2147483648
      %v868 = vor.u32 1.1754944e-38, %v867
      %v869 = vsel %vm866, %v868, %v864
      %v870 = vmul.f32 1.0, %v869
      %v871 = vtanh.pop %v851
      %v872 = vmul.f32 %v870, %v753
      %874 = vrot.lane.b32.xlu0 %v871, 64
      %v875 = vpop.permute.xlu0 %874
      %v877 = vmul.f32 %v870, %v875
      %879 = vrot.lane.b32.xlu0 %v877, 32
      %v880 = vpop.permute.xlu0 %879
      %v882 = vadd.f32 %v872, %v880
      %v883 = vtanh.pop %v882
      %885 = vrot.lane.b32.xlu0 %v883, 64
      %v886 = vpop.permute.xlu0 %885
      %v888 = vmul.f32 %v870, %v886
      %v889 = vpack.c.bf16 %v888, %v888
      %v890 = vpack.c.bf16 %v837, %v837
      %892 = vrot.lane.b32.xlu0 %v890, 32
      %v893 = vpop.permute.xlu0 %892
      %v895 = vsel %vm126, %v893, 0
      %897 = vmatpush.bf16.msra.mxu0 0
      %898 = vmatpush.bf16.msra.mxu0 0
      %899 = vmatpush.bf16.msra.mxu0 0
      %900 = vmatpush.bf16.msra.mxu0 0
      %901 = vmatpush.bf16.msra.mxu0 0
      %902 = vmatpush.bf16.msra.mxu0 0
      %903 = vmatpush.bf16.msra.mxu0 %v234
      %904 = vmatpush.bf16.msra.mxu0 %v233
      %905 = vmatmul.bf16.gmra.mxu0 %v895
      %v906 = vpop.f32.mrf.mxu0
      %v907 = vadd.f32 0.0, %v906
      %v908 = vpop.f32.mrf.mxu0
      %909 = vdwg.mxu0
      %911 = vrot.lane.b32.xlu0 %v889, 32
      %v912 = vpop.permute.xlu0 %911
      %v914 = vsel %vm126, %v912, 0
      %916 = vmatpush.bf16.msra.mxu0 0
      %917 = vmatpush.bf16.msra.mxu0 0
      %918 = vmatpush.bf16.msra.mxu0 0
      %919 = vmatpush.bf16.msra.mxu0 0
      %920 = vmatpush.bf16.msra.mxu0 0
      %921 = vmatpush.bf16.msra.mxu0 0
      %922 = vmatpush.bf16.msra.mxu0 %v262
      %923 = vmatpush.bf16.msra.mxu0 %v261
      %924 = vmatmul.bf16.gmra.mxu0 %v914
      %v925 = vpop.f32.mrf.mxu0
      %v926 = vadd.f32 %v907, %v925
      %v927 = vpop.f32.mrf.mxu0
      %928 = vdwg.mxu0
      %v929 = vadd.f32 %v926, %v282
      %v930 = vxor.u32 %v929, 2147483648
      %v931 = vmul.f32 %v930, 1.442695
      %v932 = vpow.pop %v931
      %v933 = vadd.f32 %v932, 1.0
      %v934 = vrcp.pop %v933
      %v935 = vmul.f32 %v933, %v934
      %v936 = vsub.f32 1.0, %v935
      %v937 = vmul.f32 %v934, %v936
      %v938 = vadd.f32 %v934, %v937
      %vm939 = vweird.f32 %v933
      %vm940 = vweird.f32 %v934
      %vm941 = vmor %vm939, %vm940
      %v942 = vsel %vm941, %v934, %v938
      %v943 = vand.u32 2147483647, %v933
      %vm944 = vcmp.eq.f32.partialorder %v943, 8.507059e+37
      %v945 = vand.u32 %v933, 2147483648
      %v946 = vor.u32 1.1754944e-38, %v945
      %v947 = vsel %vm944, %v946, %v942
      %v948 = vmul.f32 1.0, %v947
      %v949 = vtanh.pop %v929
      %v950 = vmul.f32 %v948, %v831
      %952 = vrot.lane.b32.xlu0 %v949, 64
      %v953 = vpop.permute.xlu0 %952
      %v955 = vmul.f32 %v948, %v953
      %957 = vrot.lane.b32.xlu0 %v955, 32
      %v958 = vpop.permute.xlu0 %957
      %v960 = vadd.f32 %v950, %v958
      %v961 = vtanh.pop %v960
      %963 = vrot.lane.b32.xlu0 %v961, 64
      %v964 = vpop.permute.xlu0 %963
      %v966 = vmul.f32 %v948, %v964
      %967 = vmatpush.bf16.msra.mxu0 0
      %968 = vmatpush.bf16.msra.mxu0 0
      %969 = vmatpush.bf16.msra.mxu0 0
      %970 = vmatpush.bf16.msra.mxu0 0
      %971 = vmatpush.bf16.msra.mxu0 0
      %972 = vmatpush.bf16.msra.mxu0 0
      %973 = vmatpush.bf16.msra.mxu0 %v167
      %974 = vmatpush.bf16.msra.mxu0 %v166
      %975 = vmatmul.bf16.gmra.mxu0 %v914
      %v976 = vpop.f32.mrf.mxu0
      %v977 = vadd.f32 0.0, %v976
      %v978 = vpop.f32.mrf.mxu0
      %979 = vdwg.mxu0
      %v980 = vadd.f32 %v150, %v977
      %v981 = vxor.u32 %v980, 2147483648
      %v982 = vmul.f32 %v981, 1.442695
      %v983 = vpow.pop %v982
      %v984 = vadd.f32 %v983, 1.0
      %v985 = vrcp.pop %v984
      %v986 = vmul.f32 %v984, %v985
      %v987 = vsub.f32 1.0, %v986
      %v988 = vmul.f32 %v985, %v987
      %v989 = vadd.f32 %v985, %v988
      %vm990 = vweird.f32 %v984
      %vm991 = vweird.f32 %v985
      %vm992 = vmor %vm990, %vm991
      %v993 = vsel %vm992, %v985, %v989
      %v994 = vand.u32 2147483647, %v984
      %vm995 = vcmp.eq.f32.partialorder %v994, 8.507059e+37
      %v996 = vand.u32 %v984, 2147483648
      %v997 = vor.u32 1.1754944e-38, %v996
      %v998 = vsel %vm995, %v997, %v993
      %v999 = vmul.f32 1.0, %v998
      %v1000 = vtanh.pop %v980
      %v1001 = vmul.f32 %v999, %v882
      %1003 = vrot.lane.b32.xlu0 %v1000, 64
      %v1004 = vpop.permute.xlu0 %1003
      %v1006 = vmul.f32 %v999, %v1004
      %1008 = vrot.lane.b32.xlu0 %v1006, 32
      %v1009 = vpop.permute.xlu0 %1008
      %v1011 = vadd.f32 %v1001, %v1009
      %v1012 = vtanh.pop %v1011
      %1014 = vrot.lane.b32.xlu0 %v1012, 64
      %v1015 = vpop.permute.xlu0 %1014
      %v1017 = vmul.f32 %v999, %v1015
      %v1018 = vpack.c.bf16 %v1017, %v1017
      %v1019 = vpack.c.bf16 %v966, %v966
      %1021 = vrot.lane.b32.xlu0 %v1019, 32
      %v1022 = vpop.permute.xlu0 %1021
      %v1024 = vsel %vm126, %v1022, 0
      %1026 = vmatpush.bf16.msra.mxu0 0
      %1027 = vmatpush.bf16.msra.mxu0 0
      %1028 = vmatpush.bf16.msra.mxu0 0
      %1029 = vmatpush.bf16.msra.mxu0 0
      %1030 = vmatpush.bf16.msra.mxu0 0
      %1031 = vmatpush.bf16.msra.mxu0 0
      %1032 = vmatpush.bf16.msra.mxu0 %v234
      %1033 = vmatpush.bf16.msra.mxu0 %v233
      %1034 = vmatmul.bf16.gmra.mxu0 %v1024
      %v1035 = vpop.f32.mrf.mxu0
      %v1036 = vadd.f32 0.0, %v1035
      %v1037 = vpop.f32.mrf.mxu0
      %1038 = vdwg.mxu0
      %1040 = vrot.lane.b32.xlu0 %v1018, 32
      %v1041 = vpop.permute.xlu0 %1040
      %v1043 = vsel %vm126, %v1041, 0
      %1045 = vmatpush.bf16.msra.mxu0 0
      %1046 = vmatpush.bf16.msra.mxu0 0
      %1047 = vmatpush.bf16.msra.mxu0 0
      %1048 = vmatpush.bf16.msra.mxu0 0
      %1049 = vmatpush.bf16.msra.mxu0 0
      %1050 = vmatpush.bf16.msra.mxu0 0
      %1051 = vmatpush.bf16.msra.mxu0 %v262
      %1052 = vmatpush.bf16.msra.mxu0 %v261
      %1053 = vmatmul.bf16.gmra.mxu0 %v1043
      %v1054 = vpop.f32.mrf.mxu0
      %v1055 = vadd.f32 %v1036, %v1054
      %v1056 = vpop.f32.mrf.mxu0
      %1057 = vdwg.mxu0
      %v1058 = vadd.f32 %v1055, %v282
      %v1059 = vxor.u32 %v1058, 2147483648
      %v1060 = vmul.f32 %v1059, 1.442695
      %v1061 = vpow.pop %v1060
      %v1062 = vadd.f32 %v1061, 1.0
      %v1063 = vrcp.pop %v1062
      %v1064 = vmul.f32 %v1062, %v1063
      %v1065 = vsub.f32 1.0, %v1064
      %v1066 = vmul.f32 %v1063, %v1065
      %v1067 = vadd.f32 %v1063, %v1066
      %vm1068 = vweird.f32 %v1062
      %vm1069 = vweird.f32 %v1063
      %vm1070 = vmor %vm1068, %vm1069
      %v1071 = vsel %vm1070, %v1063, %v1067
      %v1072 = vand.u32 2147483647, %v1062
      %vm1073 = vcmp.eq.f32.partialorder %v1072, 8.507059e+37
      %v1074 = vand.u32 %v1062, 2147483648
      %v1075 = vor.u32 1.1754944e-38, %v1074
      %v1076 = vsel %vm1073, %v1075, %v1071
      %v1077 = vmul.f32 1.0, %v1076
      %v1078 = vtanh.pop %v1058
      %v1079 = vmul.f32 %v1077, %v960
      %1081 = vrot.lane.b32.xlu0 %v1078, 64
      %v1082 = vpop.permute.xlu0 %1081
      %v1084 = vmul.f32 %v1077, %v1082
      %1086 = vrot.lane.b32.xlu0 %v1084, 32
      %v1087 = vpop.permute.xlu0 %1086
      %v1089 = vadd.f32 %v1079, %v1087
      %v1090 = vtanh.pop %v1089
      %1092 = vrot.lane.b32.xlu0 %v1090, 64
      %v1093 = vpop.permute.xlu0 %1092
      %v1095 = vmul.f32 %v1077, %v1093
      %1096 = vmatpush.bf16.msra.mxu0 0
      %1097 = vmatpush.bf16.msra.mxu0 0
      %1098 = vmatpush.bf16.msra.mxu0 0
      %1099 = vmatpush.bf16.msra.mxu0 0
      %1100 = vmatpush.bf16.msra.mxu0 0
      %1101 = vmatpush.bf16.msra.mxu0 0
      %1102 = vmatpush.bf16.msra.mxu0 %v167
      %1103 = vmatpush.bf16.msra.mxu0 %v166
      %1104 = vmatmul.bf16.gmra.mxu0 %v1043
      %v1105 = vpop.f32.mrf.mxu0
      %v1106 = vadd.f32 0.0, %v1105
      %v1107 = vpop.f32.mrf.mxu0
      %1108 = vdwg.mxu0
      %v1109 = vadd.f32 %v151, %v1106
      %v1110 = vxor.u32 %v1109, 2147483648
      %v1111 = vmul.f32 %v1110, 1.442695
      %v1112 = vpow.pop %v1111
      %v1113 = vadd.f32 %v1112, 1.0
      %v1114 = vrcp.pop %v1113
      %v1115 = vmul.f32 %v1113, %v1114
      %v1116 = vsub.f32 1.0, %v1115
      %v1117 = vmul.f32 %v1114, %v1116
      %v1118 = vadd.f32 %v1114, %v1117
      %vm1119 = vweird.f32 %v1113
      %vm1120 = vweird.f32 %v1114
      %vm1121 = vmor %vm1119, %vm1120
      %v1122 = vsel %vm1121, %v1114, %v1118
      %v1123 = vand.u32 2147483647, %v1113
      %vm1124 = vcmp.eq.f32.partialorder %v1123, 8.507059e+37
      %v1125 = vand.u32 %v1113, 2147483648
      %v1126 = vor.u32 1.1754944e-38, %v1125
      %v1127 = vsel %vm1124, %v1126, %v1122
      %v1128 = vmul.f32 1.0, %v1127
      %v1129 = vtanh.pop %v1109
      %v1130 = vmul.f32 %v1128, %v1011
      %1132 = vrot.lane.b32.xlu0 %v1129, 64
      %v1133 = vpop.permute.xlu0 %1132
      %v1135 = vmul.f32 %v1128, %v1133
      %1137 = vrot.lane.b32.xlu0 %v1135, 32
      %v1138 = vpop.permute.xlu0 %1137
      %v1140 = vadd.f32 %v1130, %v1138
      %v1141 = vtanh.pop %v1140
      %1143 = vrot.lane.b32.xlu0 %v1141, 64
      %v1144 = vpop.permute.xlu0 %1143
      %v1146 = vmul.f32 %v1128, %v1144
      %v1147 = vpack.c.bf16 %v1146, %v1146
      %v1148 = vpack.c.bf16 %v1095, %v1095
      %1150 = vrot.lane.b32.xlu0 %v1148, 32
      %v1151 = vpop.permute.xlu0 %1150
      %v1153 = vsel %vm126, %v1151, 0
      %1155 = vmatpush.bf16.msra.mxu0 0
      %1156 = vmatpush.bf16.msra.mxu0 0
      %1157 = vmatpush.bf16.msra.mxu0 0
      %1158 = vmatpush.bf16.msra.mxu0 0
      %1159 = vmatpush.bf16.msra.mxu0 0
      %1160 = vmatpush.bf16.msra.mxu0 0
      %1161 = vmatpush.bf16.msra.mxu0 %v234
      %1162 = vmatpush.bf16.msra.mxu0 %v233
      %1163 = vmatmul.bf16.gmra.mxu0 %v1153
      %v1164 = vpop.f32.mrf.mxu0
      %v1165 = vadd.f32 0.0, %v1164
      %v1166 = vpop.f32.mrf.mxu0
      %1167 = vdwg.mxu0
      %1169 = vrot.lane.b32.xlu0 %v1147, 32
      %v1170 = vpop.permute.xlu0 %1169
      %v1172 = vsel %vm126, %v1170, 0
      %1174 = vmatpush.bf16.msra.mxu0 0
      %1175 = vmatpush.bf16.msra.mxu0 0
      %1176 = vmatpush.bf16.msra.mxu0 0
      %1177 = vmatpush.bf16.msra.mxu0 0
      %1178 = vmatpush.bf16.msra.mxu0 0
      %1179 = vmatpush.bf16.msra.mxu0 0
      %1180 = vmatpush.bf16.msra.mxu0 %v262
      %1181 = vmatpush.bf16.msra.mxu0 %v261
      %1182 = vmatmul.bf16.gmra.mxu0 %v1172
      %v1183 = vpop.f32.mrf.mxu0
      %v1184 = vadd.f32 %v1165, %v1183
      %v1185 = vpop.f32.mrf.mxu0
      %1186 = vdwg.mxu0
      %v1187 = vadd.f32 %v1184, %v282
      %v1188 = vxor.u32 %v1187, 2147483648
      %v1189 = vmul.f32 %v1188, 1.442695
      %v1190 = vpow.pop %v1189
      %v1191 = vadd.f32 %v1190, 1.0
      %v1192 = vrcp.pop %v1191
      %v1193 = vmul.f32 %v1191, %v1192
      %v1194 = vsub.f32 1.0, %v1193
      %v1195 = vmul.f32 %v1192, %v1194
      %v1196 = vadd.f32 %v1192, %v1195
      %vm1197 = vweird.f32 %v1191
      %vm1198 = vweird.f32 %v1192
      %vm1199 = vmor %vm1197, %vm1198
      %v1200 = vsel %vm1199, %v1192, %v1196
      %v1201 = vand.u32 2147483647, %v1191
      %vm1202 = vcmp.eq.f32.partialorder %v1201, 8.507059e+37
      %v1203 = vand.u32 %v1191, 2147483648
      %v1204 = vor.u32 1.1754944e-38, %v1203
      %v1205 = vsel %vm1202, %v1204, %v1200
      %v1206 = vmul.f32 1.0, %v1205
      %v1207 = vtanh.pop %v1187
      %v1208 = vmul.f32 %v1206, %v1089
      %1210 = vrot.lane.b32.xlu0 %v1207, 64
      %v1211 = vpop.permute.xlu0 %1210
      %v1213 = vmul.f32 %v1206, %v1211
      %1215 = vrot.lane.b32.xlu0 %v1213, 32
      %v1216 = vpop.permute.xlu0 %1215
      %v1218 = vadd.f32 %v1208, %v1216
      %v1219 = vtanh.pop %v1218
      %1221 = vrot.lane.b32.xlu0 %v1219, 64
      %v1222 = vpop.permute.xlu0 %1221
      %v1224 = vmul.f32 %v1206, %v1222
      %v1225 = vld [vmem:[%s9] sm:$0xf]
      %v1226 = vld [vmem:[%s9 + $0x4] sm:$0xf]
      %v1227 = vld [vmem:[%s9 + $0x8] sm:$0xf]
      %v1228 = vld [vmem:[%s9 + $0xc] sm:$0xf]
      %v1229 = vld [vmem:[%s9 + $0x10] sm:$0xf]
      %v1230 = vld [vmem:[%s9 + $0x14] sm:$0xf]
      %v1231 = vld [vmem:[%s9 + $0x18] sm:$0xf]
      %v1232 = vld [vmem:[%s9 + $0x1c] sm:$0xf]
      %v1233 = vld [vmem:[%s9 + $0x20] sm:$0xf]
      %v1234 = vld [vmem:[%s9 + $0x24] sm:$0xf]
      %v1235 = vld [vmem:[%s9 + $0x28] sm:$0xf]
      %v1236 = vld [vmem:[%s9 + $0x2c] sm:$0xf]
      %v1237 = vld [vmem:[%s9 + $0x30] sm:$0xf]
      %v1238 = vld [vmem:[%s9 + $0x34] sm:$0xf]
      %v1239 = vld [vmem:[%s9 + $0x38] sm:$0xf]
      %v1240 = vld [vmem:[%s9 + $0x3c] sm:$0xf]
      %v1241 = vld [vmem:[%s10] sm:$0x1]
      %v1243 = vperm.slane %v1241, 0
      %v1245 = vtanh.pop %v1146
      %v1246 = vpack.c.bf16 %v1245, %v1245
      %1248 = vrot.lane.b32.xlu0 %v1246, 32
      %v1249 = vpop.permute.xlu0 %1248
      %v1254 = vunpack.c.l.b16 %v1225
      %v1255 = vunpack.c.l.b16 %v1226
      %v1256 = vunpack.c.l.b16 %v1227
      %v1257 = vunpack.c.l.b16 %v1228
      %v1258 = vpack.c.b16 %v1255, %v1254
      %v1259 = vpack.c.b16 %v1257, %v1256
      %v1263 = vsel %vm126, %v1249, 0
      %1265 = vmatpush.bf16.msra.mxu0 0
      %1266 = vmatpush.bf16.msra.mxu0 0
      %1267 = vmatpush.bf16.msra.mxu0 0
      %1268 = vmatpush.bf16.msra.mxu0 0
      %1269 = vmatpush.bf16.msra.mxu0 0
      %1270 = vmatpush.bf16.msra.mxu0 0
      %1271 = vmatpush.bf16.msra.mxu0 %v1259
      %1272 = vmatpush.bf16.msra.mxu0 %v1258
      %1273 = vmatmul.bf16.gmra.mxu0 %v1263
      %v1274 = vpop.f32.mrf.mxu0
      %v1275 = vadd.f32 0.0, %v1274
      %v1276 = vpop.f32.mrf.mxu0
      %1277 = vdwg.mxu0
      %v1278 = vadd.f32 %v1243, %v1275
      %v1279 = vpack.c.bf16 %v1141, %v1141
      %1281 = vrot.lane.b32.xlu0 %v1279, 96
      %v1282 = vpop.permute.xlu0 %1281
      %v1287 = vunpack.c.l.b16 %v1229
      %v1288 = vunpack.c.l.b16 %v1230
      %v1289 = vunpack.c.l.b16 %v1231
      %v1290 = vunpack.c.l.b16 %v1232
      %v1291 = vpack.c.b16 %v1288, %v1287
      %v1292 = vpack.c.b16 %v1290, %v1289
      %v1296 = vsel %vm126, %v1282, 0
      %1298 = vmatpush.bf16.msra.mxu0 0
      %1299 = vmatpush.bf16.msra.mxu0 0
      %1300 = vmatpush.bf16.msra.mxu0 0
      %1301 = vmatpush.bf16.msra.mxu0 0
      %1302 = vmatpush.bf16.msra.mxu0 0
      %1303 = vmatpush.bf16.msra.mxu0 0
      %1304 = vmatpush.bf16.msra.mxu0 %v1292
      %1305 = vmatpush.bf16.msra.mxu0 %v1291
      %1306 = vmatmul.bf16.gmra.mxu0 %v1296
      %v1307 = vpop.f32.mrf.mxu0
      %v1308 = vadd.f32 0.0, %v1307
      %v1309 = vpop.f32.mrf.mxu0
      %1310 = vdwg.mxu0
      %v1311 = vadd.f32 %v1278, %v1308
      %v1312 = vtanh.pop %v1224
      %v1313 = vpack.c.bf16 %v1312, %v1312
      %1315 = vrot.lane.b32.xlu0 %v1313, 32
      %v1316 = vpop.permute.xlu0 %1315
      %v1321 = vunpack.c.l.b16 %v1233
      %v1322 = vunpack.c.l.b16 %v1234
      %v1323 = vunpack.c.l.b16 %v1235
      %v1324 = vunpack.c.l.b16 %v1236
      %v1325 = vpack.c.b16 %v1322, %v1321
      %v1326 = vpack.c.b16 %v1324, %v1323
      %v1330 = vsel %vm126, %v1316, 0
      %1332 = vmatpush.bf16.msra.mxu0 0
      %1333 = vmatpush.bf16.msra.mxu0 0
      %1334 = vmatpush.bf16.msra.mxu0 0
      %1335 = vmatpush.bf16.msra.mxu0 0
      %1336 = vmatpush.bf16.msra.mxu0 0
      %1337 = vmatpush.bf16.msra.mxu0 0
      %1338 = vmatpush.bf16.msra.mxu0 %v1326
      %1339 = vmatpush.bf16.msra.mxu0 %v1325
      %1340 = vmatmul.bf16.gmra.mxu0 %v1330
      %v1341 = vpop.f32.mrf.mxu0
      %v1342 = vadd.f32 0.0, %v1341
      %v1343 = vpop.f32.mrf.mxu0
      %1344 = vdwg.mxu0
      %v1345 = vadd.f32 %v1311, %v1342
      %v1346 = vpack.c.bf16 %v1219, %v1219
      %1348 = vrot.lane.b32.xlu0 %v1346, 96
      %v1349 = vpop.permute.xlu0 %1348
      %v1354 = vunpack.c.l.b16 %v1237
      %v1355 = vunpack.c.l.b16 %v1238
      %v1356 = vunpack.c.l.b16 %v1239
      %v1357 = vunpack.c.l.b16 %v1240
      %v1358 = vpack.c.b16 %v1355, %v1354
      %v1359 = vpack.c.b16 %v1357, %v1356
      %v1363 = vsel %vm126, %v1349, 0
      %1365 = vmatpush.bf16.msra.mxu0 0
      %1366 = vmatpush.bf16.msra.mxu0 0
      %1367 = vmatpush.bf16.msra.mxu0 0
      %1368 = vmatpush.bf16.msra.mxu0 0
      %1369 = vmatpush.bf16.msra.mxu0 0
      %1370 = vmatpush.bf16.msra.mxu0 0
      %1371 = vmatpush.bf16.msra.mxu0 %v1359
      %1372 = vmatpush.bf16.msra.mxu0 %v1358
      %1373 = vmatmul.bf16.gmra.mxu0 %v1363
      %v1374 = vpop.f32.mrf.mxu0
      %v1375 = vadd.f32 0.0, %v1374
      %v1376 = vpop.f32.mrf.mxu0
      %1377 = vdwg.mxu0
      %v1378 = vadd.f32 %v1345, %v1375
      %1379 = vst [vmem:[#allocation3] sm:$0x3] %v1378
    $region65: #{visual_qa_forward.1} parent=1 // pred_fallthru
      _
    %v1380 = vld [vmem:[%s0] sm:$0xf]
    %v1381 = vld [vmem:[%s0 + $0x4] sm:$0xf]
    %v1382 = vld [vmem:[%s0 + $0x8] sm:$0xf]
    %v1383 = vld [vmem:[%s0 + $0xc] sm:$0xf]
    %v1384 = vld [vmem:[%s0 + $0x10] sm:$0xf]
    %v1385 = vld [vmem:[%s0 + $0x14] sm:$0xf]
    %v1386 = vld [vmem:[%s0 + $0x18] sm:$0xf]
    %v1387 = vld [vmem:[%s0 + $0x1c] sm:$0xf]
    %v1388 = vld [vmem:[%s0 + $0x20] sm:$0xf]
    %v1389 = vld [vmem:[%s0 + $0x24] sm:$0xf]
    %v1390 = vld [vmem:[%s0 + $0x28] sm:$0xf]
    %v1391 = vld [vmem:[%s0 + $0x2c] sm:$0xf]
    %v1392 = vld [vmem:[%s0 + $0x30] sm:$0xf]
    %v1393 = vld [vmem:[%s0 + $0x34] sm:$0xf]
    %v1394 = vld [vmem:[%s0 + $0x38] sm:$0xf]
    %v1395 = vld [vmem:[%s0 + $0x3c] sm:$0xf]
    %v1396 = vld [vmem:[%s0 + $0x40] sm:$0xf]
    %v1397 = vld [vmem:[%s0 + $0x44] sm:$0xf]
    %v1398 = vld [vmem:[%s0 + $0x48] sm:$0xf]
    %v1399 = vld [vmem:[%s0 + $0x4c] sm:$0xf]
    %v1400 = vld [vmem:[%s0 + $0x50] sm:$0xf]
    %v1401 = vld [vmem:[%s0 + $0x54] sm:$0xf]
    %v1402 = vld [vmem:[%s0 + $0x58] sm:$0xf]
    %v1403 = vld [vmem:[%s0 + $0x5c] sm:$0xf]
    %v1404 = vld [vmem:[%s0 + $0x60] sm:$0xf]
    %v1405 = vld [vmem:[%s0 + $0x64] sm:$0xf]
    %v1406 = vld [vmem:[%s0 + $0x68] sm:$0xf]
    %v1407 = vld [vmem:[%s0 + $0x6c] sm:$0xf]
    %v1408 = vld [vmem:[%s0 + $0x70] sm:$0xf]
    %v1409 = vld [vmem:[%s0 + $0x74] sm:$0xf]
    %v1410 = vld [vmem:[%s0 + $0x78] sm:$0xf]
    %v1411 = vld [vmem:[%s0 + $0x7c] sm:$0xf]
    %v1412 = vld [vmem:[%s0 + $0x80] sm:$0xf]
    %v1413 = vld [vmem:[%s0 + $0x84] sm:$0xf]
    %v1414 = vld [vmem:[%s0 + $0x88] sm:$0xf]
    %v1415 = vld [vmem:[%s0 + $0x8c] sm:$0xf]
    %v1416 = vld [vmem:[%s0 + $0x90] sm:$0xf]
    %v1417 = vld [vmem:[%s0 + $0x94] sm:$0xf]
    %v1418 = vld [vmem:[%s0 + $0x98] sm:$0xf]
    %v1419 = vld [vmem:[%s0 + $0x9c] sm:$0xf]
    %v1420 = vld [vmem:[%s0 + $0xa0] sm:$0xf]
    %v1421 = vld [vmem:[%s0 + $0xa4] sm:$0xf]
    %v1422 = vld [vmem:[%s0 + $0xa8] sm:$0xf]
    %v1423 = vld [vmem:[%s0 + $0xac] sm:$0xf]
    %v1424 = vld [vmem:[%s0 + $0xb0] sm:$0xf]
    %v1425 = vld [vmem:[%s0 + $0xb4] sm:$0xf]
    %v1426 = vld [vmem:[%s0 + $0xb8] sm:$0xf]
    %v1427 = vld [vmem:[%s0 + $0xbc] sm:$0xf]
    %v1428 = vld [vmem:[%s0 + $0xc0] sm:$0xf]
    %v1429 = vld [vmem:[%s0 + $0xc4] sm:$0xf]
    %v1430 = vld [vmem:[%s0 + $0xc8] sm:$0xf]
    %v1431 = vld [vmem:[%s0 + $0xcc] sm:$0xf]
    %v1432 = vld [vmem:[%s0 + $0xd0] sm:$0xf]
    %v1433 = vld [vmem:[%s0 + $0xd4] sm:$0xf]
    %v1434 = vld [vmem:[%s0 + $0xd8] sm:$0xf]
    %v1435 = vld [vmem:[%s0 + $0xdc] sm:$0xf]
    %v1436 = vld [vmem:[%s0 + $0xe0] sm:$0xf]
    %v1437 = vld [vmem:[%s0 + $0xe4] sm:$0xf]
    %v1438 = vld [vmem:[%s0 + $0xe8] sm:$0xf]
    %v1439 = vld [vmem:[%s0 + $0xec] sm:$0xf]
    %v1440 = vld [vmem:[%s0 + $0xf0] sm:$0xf]
    %v1441 = vld [vmem:[%s0 + $0xf4] sm:$0xf]
    %v1442 = vld [vmem:[%s0 + $0xf8] sm:$0xf]
    %v1443 = vld [vmem:[%s0 + $0xfc] sm:$0xf]
    %v1444 = vld [vmem:[%s1] sm:$0xff]
    %v1445 = vld [vmem:[%s1 + $0x8] sm:$0xff]
    %v1446 = vld [vmem:[%s1 + $0x10] sm:$0xff]
    %v1447 = vld [vmem:[%s1 + $0x18] sm:$0xff]
    %v1448 = vld [vmem:[%s1 + $0x20] sm:$0xff]
    %v1449 = vld [vmem:[%s1 + $0x28] sm:$0xff]
    %v1450 = vld [vmem:[%s1 + $0x30] sm:$0xff]
    %v1451 = vld [vmem:[%s1 + $0x38] sm:$0xff]
    %v1452 = vld [vmem:[%s2] sm:$0xf]
    %v1454 = vperm.slane %v1452, 0
    %v1455 = vperm.slane %v1452, 1
    %v1456 = vperm.slane %v1452, 2
    %v1457 = vperm.slane %v1452, 3
    %v1526 = vunpack.c.l.b16 %v1380
    %v1527 = vunpack.c.l.b16 %v1381
    %v1528 = vunpack.c.l.b16 %v1382
    %v1529 = vunpack.c.l.b16 %v1383
    %v1530 = vunpack.c.l.b16 %v1384
    %v1531 = vunpack.c.l.b16 %v1385
    %v1532 = vunpack.c.l.b16 %v1386
    %v1533 = vunpack.c.l.b16 %v1387
    %v1534 = vunpack.c.l.b16 %v1388
    %v1535 = vunpack.c.l.b16 %v1389
    %v1536 = vunpack.c.l.b16 %v1390
    %v1537 = vunpack.c.l.b16 %v1391
    %v1538 = vunpack.c.l.b16 %v1392
    %v1539 = vunpack.c.l.b16 %v1393
    %v1540 = vunpack.c.l.b16 %v1394
    %v1541 = vunpack.c.l.b16 %v1395
    %v1542 = vunpack.c.l.b16 %v1396
    %v1543 = vunpack.c.l.b16 %v1397
    %v1544 = vunpack.c.l.b16 %v1398
    %v1545 = vunpack.c.l.b16 %v1399
    %v1546 = vunpack.c.l.b16 %v1400
    %v1547 = vunpack.c.l.b16 %v1401
    %v1548 = vunpack.c.l.b16 %v1402
    %v1549 = vunpack.c.l.b16 %v1403
    %v1550 = vunpack.c.l.b16 %v1404
    %v1551 = vunpack.c.l.b16 %v1405
    %v1552 = vunpack.c.l.b16 %v1406
    %v1553 = vunpack.c.l.b16 %v1407
    %v1554 = vunpack.c.l.b16 %v1408
    %v1555 = vunpack.c.l.b16 %v1409
    %v1556 = vunpack.c.l.b16 %v1410
    %v1557 = vunpack.c.l.b16 %v1411
    %v1558 = vunpack.c.l.b16 %v1412
    %v1559 = vunpack.c.l.b16 %v1413
    %v1560 = vunpack.c.l.b16 %v1414
    %v1561 = vunpack.c.l.b16 %v1415
    %v1562 = vunpack.c.l.b16 %v1416
    %v1563 = vunpack.c.l.b16 %v1417
    %v1564 = vunpack.c.l.b16 %v1418
    %v1565 = vunpack.c.l.b16 %v1419
    %v1566 = vunpack.c.l.b16 %v1420
    %v1567 = vunpack.c.l.b16 %v1421
    %v1568 = vunpack.c.l.b16 %v1422
    %v1569 = vunpack.c.l.b16 %v1423
    %v1570 = vunpack.c.l.b16 %v1424
    %v1571 = vunpack.c.l.b16 %v1425
    %v1572 = vunpack.c.l.b16 %v1426
    %v1573 = vunpack.c.l.b16 %v1427
    %v1574 = vunpack.c.l.b16 %v1428
    %v1575 = vunpack.c.l.b16 %v1429
    %v1576 = vunpack.c.l.b16 %v1430
    %v1577 = vunpack.c.l.b16 %v1431
    %v1578 = vunpack.c.l.b16 %v1432
    %v1579 = vunpack.c.l.b16 %v1433
    %v1580 = vunpack.c.l.b16 %v1434
    %v1581 = vunpack.c.l.b16 %v1435
    %v1582 = vunpack.c.l.b16 %v1436
    %v1583 = vunpack.c.l.b16 %v1437
    %v1584 = vunpack.c.l.b16 %v1438
    %v1585 = vunpack.c.l.b16 %v1439
    %v1586 = vunpack.c.l.b16 %v1440
    %v1587 = vunpack.c.l.b16 %v1441
    %v1588 = vunpack.c.l.b16 %v1442
    %v1589 = vunpack.c.l.b16 %v1443
    %v1590 = vpack.c.b16 %v1527, %v1526
    %v1591 = vpack.c.b16 %v1529, %v1528
    %v1592 = vpack.c.b16 %v1531, %v1530
    %v1593 = vpack.c.b16 %v1533, %v1532
    %v1594 = vpack.c.b16 %v1535, %v1534
    %v1595 = vpack.c.b16 %v1537, %v1536
    %v1596 = vpack.c.b16 %v1539, %v1538
    %v1597 = vpack.c.b16 %v1541, %v1540
    %v1598 = vpack.c.b16 %v1543, %v1542
    %v1599 = vpack.c.b16 %v1545, %v1544
    %v1600 = vpack.c.b16 %v1547, %v1546
    %v1601 = vpack.c.b16 %v1549, %v1548
    %v1602 = vpack.c.b16 %v1551, %v1550
    %v1603 = vpack.c.b16 %v1553, %v1552
    %v1604 = vpack.c.b16 %v1555, %v1554
    %v1605 = vpack.c.b16 %v1557, %v1556
    %v1606 = vpack.c.b16 %v1559, %v1558
    %v1607 = vpack.c.b16 %v1561, %v1560
    %v1608 = vpack.c.b16 %v1563, %v1562
    %v1609 = vpack.c.b16 %v1565, %v1564
    %v1610 = vpack.c.b16 %v1567, %v1566
    %v1611 = vpack.c.b16 %v1569, %v1568
    %v1612 = vpack.c.b16 %v1571, %v1570
    %v1613 = vpack.c.b16 %v1573, %v1572
    %v1614 = vpack.c.b16 %v1575, %v1574
    %v1615 = vpack.c.b16 %v1577, %v1576
    %v1616 = vpack.c.b16 %v1579, %v1578
    %v1617 = vpack.c.b16 %v1581, %v1580
    %v1618 = vpack.c.b16 %v1583, %v1582
    %v1619 = vpack.c.b16 %v1585, %v1584
    %v1620 = vpack.c.b16 %v1587, %v1586
    %v1621 = vpack.c.b16 %v1589, %v1588
    %v1630 = vunpack.c.l.b16 %v1444
    %v1631 = vunpack.c.h.b16 %v1444
    %v1632 = vunpack.c.l.b16 %v1445
    %v1633 = vunpack.c.h.b16 %v1445
    %v1634 = vunpack.c.l.b16 %v1446
    %v1635 = vunpack.c.h.b16 %v1446
    %v1636 = vunpack.c.l.b16 %v1447
    %v1637 = vunpack.c.h.b16 %v1447
    %v1638 = vunpack.c.l.b16 %v1448
    %v1639 = vunpack.c.h.b16 %v1448
    %v1640 = vunpack.c.l.b16 %v1449
    %v1641 = vunpack.c.h.b16 %v1449
    %v1642 = vunpack.c.l.b16 %v1450
    %v1643 = vunpack.c.h.b16 %v1450
    %v1644 = vunpack.c.l.b16 %v1451
    %v1645 = vunpack.c.h.b16 %v1451
    %v1646 = vpack.c.b16 %v1634, %v1630
    %v1647 = vpack.c.b16 %v1635, %v1631
    %v1648 = vpack.c.b16 %v1636, %v1632
    %v1649 = vpack.c.b16 %v1637, %v1633
    %v1650 = vpack.c.b16 %v1642, %v1638
    %v1651 = vpack.c.b16 %v1643, %v1639
    %v1652 = vpack.c.b16 %v1644, %v1640
    %v1653 = vpack.c.b16 %v1645, %v1641
    %vm1662 = vcmask 261120
    %v1664 = vsel %vm1662, %v1590, 0
    %v1667 = vsel %vm1662, %v1591, 0
    %v1670 = vsel %vm1662, %v1592, 0
    %v1673 = vsel %vm1662, %v1593, 0
    %v1676 = vsel %vm1662, %v1594, 0
    %v1679 = vsel %vm1662, %v1595, 0
    %v1682 = vsel %vm1662, %v1596, 0
    %v1685 = vsel %vm1662, %v1597, 0
    %v1688 = vsel %vm1662, %v1598, 0
    %v1691 = vsel %vm1662, %v1599, 0
    %v1694 = vsel %vm1662, %v1600, 0
    %v1697 = vsel %vm1662, %v1601, 0
    %v1700 = vsel %vm1662, %v1602, 0
    %v1703 = vsel %vm1662, %v1603, 0
    %v1706 = vsel %vm1662, %v1604, 0
    %v1709 = vsel %vm1662, %v1605, 0
    %v1712 = vsel %vm1662, %v1606, 0
    %v1715 = vsel %vm1662, %v1607, 0
    %v1718 = vsel %vm1662, %v1608, 0
    %v1721 = vsel %vm1662, %v1609, 0
    %v1724 = vsel %vm1662, %v1610, 0
    %v1727 = vsel %vm1662, %v1611, 0
    %v1730 = vsel %vm1662, %v1612, 0
    %v1733 = vsel %vm1662, %v1613, 0
    %v1736 = vsel %vm1662, %v1614, 0
    %v1739 = vsel %vm1662, %v1615, 0
    %v1742 = vsel %vm1662, %v1616, 0
    %v1745 = vsel %vm1662, %v1617, 0
    %v1748 = vsel %vm1662, %v1618, 0
    %v1751 = vsel %vm1662, %v1619, 0
    %v1754 = vsel %vm1662, %v1620, 0
    %v1757 = vsel %vm1662, %v1621, 0
    %1759 = vmatpush.bf16.msra.mxu0 0
    %1760 = vmatpush.bf16.msra.mxu0 0
    %1761 = vmatpush.bf16.msra.mxu0 0
    %1762 = vmatpush.bf16.msra.mxu0 0
    %1763 = vmatpush.bf16.msra.mxu0 0
    %1764 = vmatpush.bf16.msra.mxu0 0
    %1765 = vmatpush.bf16.msra.mxu0 %v1650
    %1766 = vmatpush.bf16.msra.mxu0 %v1646
    %1767 = vmatmul.bf16.gmra.mxu0 %v1664
    %v1768 = vpop.f32.mrf.mxu0
    %v1769 = vadd.f32 %v1454, %v1768
    %v1770 = vpop.f32.mrf.mxu0
    %v1771 = vadd.f32 %v1454, %v1770
    %1772 = vmatmul.bf16.gmra.mxu0 %v1667
    %v1773 = vpop.f32.mrf.mxu0
    %v1774 = vadd.f32 %v1454, %v1773
    %v1775 = vpop.f32.mrf.mxu0
    %v1776 = vadd.f32 %v1454, %v1775
    %1777 = vmatmul.bf16.gmra.mxu0 %v1670
    %v1778 = vpop.f32.mrf.mxu0
    %v1779 = vadd.f32 %v1454, %v1778
    %v1780 = vpop.f32.mrf.mxu0
    %v1781 = vadd.f32 %v1454, %v1780
    %1782 = vmatmul.bf16.gmra.mxu0 %v1673
    %v1783 = vpop.f32.mrf.mxu0
    %v1784 = vadd.f32 %v1454, %v1783
    %v1785 = vpop.f32.mrf.mxu0
    %v1786 = vadd.f32 %v1454, %v1785
    %1787 = vmatmul.bf16.gmra.mxu0 %v1676
    %v1788 = vpop.f32.mrf.mxu0
    %v1789 = vadd.f32 %v1454, %v1788
    %v1790 = vpop.f32.mrf.mxu0
    %v1791 = vadd.f32 %v1454, %v1790
    %1792 = vmatmul.bf16.gmra.mxu0 %v1679
    %v1793 = vpop.f32.mrf.mxu0
    %v1794 = vadd.f32 %v1454, %v1793
    %v1795 = vpop.f32.mrf.mxu0
    %v1796 = vadd.f32 %v1454, %v1795
    %1797 = vmatmul.bf16.gmra.mxu0 %v1682
    %v1798 = vpop.f32.mrf.mxu0
    %v1799 = vadd.f32 %v1454, %v1798
    %v1800 = vpop.f32.mrf.mxu0
    %v1801 = vadd.f32 %v1454, %v1800
    %1802 = vmatmul.bf16.gmra.mxu0 %v1685
    %v1803 = vpop.f32.mrf.mxu0
    %v1804 = vadd.f32 %v1454, %v1803
    %v1805 = vpop.f32.mrf.mxu0
    %v1806 = vadd.f32 %v1454, %v1805
    %1807 = vmatmul.bf16.gmra.mxu0 %v1688
    %v1808 = vpop.f32.mrf.mxu0
    %v1809 = vadd.f32 %v1454, %v1808
    %v1810 = vpop.f32.mrf.mxu0
    %v1811 = vadd.f32 %v1454, %v1810
    %1812 = vmatmul.bf16.gmra.mxu0 %v1691
    %v1813 = vpop.f32.mrf.mxu0
    %v1814 = vadd.f32 %v1454, %v1813
    %v1815 = vpop.f32.mrf.mxu0
    %v1816 = vadd.f32 %v1454, %v1815
    %1817 = vmatmul.bf16.gmra.mxu0 %v1694
    %v1818 = vpop.f32.mrf.mxu0
    %v1819 = vadd.f32 %v1454, %v1818
    %v1820 = vpop.f32.mrf.mxu0
    %v1821 = vadd.f32 %v1454, %v1820
    %1822 = vmatmul.bf16.gmra.mxu0 %v1697
    %v1823 = vpop.f32.mrf.mxu0
    %v1824 = vadd.f32 %v1454, %v1823
    %v1825 = vpop.f32.mrf.mxu0
    %v1826 = vadd.f32 %v1454, %v1825
    %1827 = vmatmul.bf16.gmra.mxu0 %v1700
    %v1828 = vpop.f32.mrf.mxu0
    %v1829 = vadd.f32 %v1454, %v1828
    %v1830 = vpop.f32.mrf.mxu0
    %v1831 = vadd.f32 %v1454, %v1830
    %1832 = vmatmul.bf16.gmra.mxu0 %v1703
    %v1833 = vpop.f32.mrf.mxu0
    %v1834 = vadd.f32 %v1454, %v1833
    %v1835 = vpop.f32.mrf.mxu0
    %v1836 = vadd.f32 %v1454, %v1835
    %1837 = vmatmul.bf16.gmra.mxu0 %v1706
    %v1838 = vpop.f32.mrf.mxu0
    %v1839 = vadd.f32 %v1454, %v1838
    %v1840 = vpop.f32.mrf.mxu0
    %v1841 = vadd.f32 %v1454, %v1840
    %1842 = vmatmul.bf16.gmra.mxu0 %v1709
    %v1843 = vpop.f32.mrf.mxu0
    %v1844 = vadd.f32 %v1454, %v1843
    %v1845 = vpop.f32.mrf.mxu0
    %v1846 = vadd.f32 %v1454, %v1845
    %1847 = vmatmul.bf16.gmra.mxu0 %v1712
    %v1848 = vpop.f32.mrf.mxu0
    %v1849 = vadd.f32 %v1454, %v1848
    %v1850 = vpop.f32.mrf.mxu0
    %v1851 = vadd.f32 %v1454, %v1850
    %1852 = vmatmul.bf16.gmra.mxu0 %v1715
    %v1853 = vpop.f32.mrf.mxu0
    %v1854 = vadd.f32 %v1454, %v1853
    %v1855 = vpop.f32.mrf.mxu0
    %v1856 = vadd.f32 %v1454, %v1855
    %1857 = vmatmul.bf16.gmra.mxu0 %v1718
    %v1858 = vpop.f32.mrf.mxu0
    %v1859 = vadd.f32 %v1454, %v1858
    %v1860 = vpop.f32.mrf.mxu0
    %v1861 = vadd.f32 %v1454, %v1860
    %1862 = vmatmul.bf16.gmra.mxu0 %v1721
    %v1863 = vpop.f32.mrf.mxu0
    %v1864 = vadd.f32 %v1454, %v1863
    %v1865 = vpop.f32.mrf.mxu0
    %v1866 = vadd.f32 %v1454, %v1865
    %1867 = vmatmul.bf16.gmra.mxu0 %v1724
    %v1868 = vpop.f32.mrf.mxu0
    %v1869 = vadd.f32 %v1454, %v1868
    %v1870 = vpop.f32.mrf.mxu0
    %v1871 = vadd.f32 %v1454, %v1870
    %1872 = vmatmul.bf16.gmra.mxu0 %v1727
    %v1873 = vpop.f32.mrf.mxu0
    %v1874 = vadd.f32 %v1454, %v1873
    %v1875 = vpop.f32.mrf.mxu0
    %v1876 = vadd.f32 %v1454, %v1875
    %1877 = vmatmul.bf16.gmra.mxu0 %v1730
    %v1878 = vpop.f32.mrf.mxu0
    %v1879 = vadd.f32 %v1454, %v1878
    %v1880 = vpop.f32.mrf.mxu0
    %v1881 = vadd.f32 %v1454, %v1880
    %1882 = vmatmul.bf16.gmra.mxu0 %v1733
    %v1883 = vpop.f32.mrf.mxu0
    %v1884 = vadd.f32 %v1454, %v1883
    %v1885 = vpop.f32.mrf.mxu0
    %v1886 = vadd.f32 %v1454, %v1885
    %1887 = vmatmul.bf16.gmra.mxu0 %v1736
    %v1888 = vpop.f32.mrf.mxu0
    %v1889 = vadd.f32 %v1454, %v1888
    %v1890 = vpop.f32.mrf.mxu0
    %v1891 = vadd.f32 %v1454, %v1890
    %1892 = vmatmul.bf16.gmra.mxu0 %v1739
    %v1893 = vpop.f32.mrf.mxu0
    %v1894 = vadd.f32 %v1454, %v1893
    %v1895 = vpop.f32.mrf.mxu0
    %v1896 = vadd.f32 %v1454, %v1895
    %1897 = vmatmul.bf16.gmra.mxu0 %v1742
    %v1898 = vpop.f32.mrf.mxu0
    %v1899 = vadd.f32 %v1454, %v1898
    %v1900 = vpop.f32.mrf.mxu0
    %v1901 = vadd.f32 %v1454, %v1900
    %1902 = vmatmul.bf16.gmra.mxu0 %v1745
    %v1903 = vpop.f32.mrf.mxu0
    %v1904 = vadd.f32 %v1454, %v1903
    %v1905 = vpop.f32.mrf.mxu0
    %v1906 = vadd.f32 %v1454, %v1905
    %1907 = vmatmul.bf16.gmra.mxu0 %v1748
    %v1908 = vpop.f32.mrf.mxu0
    %v1909 = vadd.f32 %v1454, %v1908
    %v1910 = vpop.f32.mrf.mxu0
    %v1911 = vadd.f32 %v1454, %v1910
    %1912 = vmatmul.bf16.gmra.mxu0 %v1751
    %v1913 = vpop.f32.mrf.mxu0
    %v1914 = vadd.f32 %v1454, %v1913
    %v1915 = vpop.f32.mrf.mxu0
    %v1916 = vadd.f32 %v1454, %v1915
    %1917 = vmatmul.bf16.gmra.mxu0 %v1754
    %v1918 = vpop.f32.mrf.mxu0
    %v1919 = vadd.f32 %v1454, %v1918
    %v1920 = vpop.f32.mrf.mxu0
    %v1921 = vadd.f32 %v1454, %v1920
    %1922 = vmatmul.bf16.gmra.mxu0 %v1757
    %v1923 = vpop.f32.mrf.mxu0
    %v1924 = vadd.f32 %v1454, %v1923
    %v1925 = vpop.f32.mrf.mxu0
    %v1926 = vadd.f32 %v1454, %v1925
    %1927 = vdwg.mxu0
    %1928 = vmatpush.bf16.msra.mxu0 0
    %1929 = vmatpush.bf16.msra.mxu0 0
    %1930 = vmatpush.bf16.msra.mxu0 0
    %1931 = vmatpush.bf16.msra.mxu0 0
    %1932 = vmatpush.bf16.msra.mxu0 0
    %1933 = vmatpush.bf16.msra.mxu0 0
    %1934 = vmatpush.bf16.msra.mxu0 %v1651
    %1935 = vmatpush.bf16.msra.mxu0 %v1647
    %1936 = vmatmul.bf16.gmra.mxu0 %v1664
    %v1937 = vpop.f32.mrf.mxu0
    %v1938 = vadd.f32 %v1455, %v1937
    %v1939 = vpop.f32.mrf.mxu0
    %v1940 = vadd.f32 %v1455, %v1939
    %1941 = vmatmul.bf16.gmra.mxu0 %v1667
    %v1942 = vpop.f32.mrf.mxu0
    %v1943 = vadd.f32 %v1455, %v1942
    %v1944 = vpop.f32.mrf.mxu0
    %v1945 = vadd.f32 %v1455, %v1944
    %1946 = vmatmul.bf16.gmra.mxu0 %v1670
    %v1947 = vpop.f32.mrf.mxu0
    %v1948 = vadd.f32 %v1455, %v1947
    %v1949 = vpop.f32.mrf.mxu0
    %v1950 = vadd.f32 %v1455, %v1949
    %1951 = vmatmul.bf16.gmra.mxu0 %v1673
    %v1952 = vpop.f32.mrf.mxu0
    %v1953 = vadd.f32 %v1455, %v1952
    %v1954 = vpop.f32.mrf.mxu0
    %v1955 = vadd.f32 %v1455, %v1954
    %1956 = vmatmul.bf16.gmra.mxu0 %v1676
    %v1957 = vpop.f32.mrf.mxu0
    %v1958 = vadd.f32 %v1455, %v1957
    %v1959 = vpop.f32.mrf.mxu0
    %v1960 = vadd.f32 %v1455, %v1959
    %1961 = vmatmul.bf16.gmra.mxu0 %v1679
    %v1962 = vpop.f32.mrf.mxu0
    %v1963 = vadd.f32 %v1455, %v1962
    %v1964 = vpop.f32.mrf.mxu0
    %v1965 = vadd.f32 %v1455, %v1964
    %1966 = vmatmul.bf16.gmra.mxu0 %v1682
    %v1967 = vpop.f32.mrf.mxu0
    %v1968 = vadd.f32 %v1455, %v1967
    %v1969 = vpop.f32.mrf.mxu0
    %v1970 = vadd.f32 %v1455, %v1969
    %1971 = vmatmul.bf16.gmra.mxu0 %v1685
    %v1972 = vpop.f32.mrf.mxu0
    %v1973 = vadd.f32 %v1455, %v1972
    %v1974 = vpop.f32.mrf.mxu0
    %v1975 = vadd.f32 %v1455, %v1974
    %1976 = vmatmul.bf16.gmra.mxu0 %v1688
    %v1977 = vpop.f32.mrf.mxu0
    %v1978 = vadd.f32 %v1455, %v1977
    %v1979 = vpop.f32.mrf.mxu0
    %v1980 = vadd.f32 %v1455, %v1979
    %1981 = vmatmul.bf16.gmra.mxu0 %v1691
    %v1982 = vpop.f32.mrf.mxu0
    %v1983 = vadd.f32 %v1455, %v1982
    %v1984 = vpop.f32.mrf.mxu0
    %v1985 = vadd.f32 %v1455, %v1984
    %1986 = vmatmul.bf16.gmra.mxu0 %v1694
    %v1987 = vpop.f32.mrf.mxu0
    %v1988 = vadd.f32 %v1455, %v1987
    %v1989 = vpop.f32.mrf.mxu0
    %v1990 = vadd.f32 %v1455, %v1989
    %1991 = vmatmul.bf16.gmra.mxu0 %v1697
    %v1992 = vpop.f32.mrf.mxu0
    %v1993 = vadd.f32 %v1455, %v1992
    %v1994 = vpop.f32.mrf.mxu0
    %v1995 = vadd.f32 %v1455, %v1994
    %1996 = vmatmul.bf16.gmra.mxu0 %v1700
    %v1997 = vpop.f32.mrf.mxu0
    %v1998 = vadd.f32 %v1455, %v1997
    %v1999 = vpop.f32.mrf.mxu0
    %v2000 = vadd.f32 %v1455, %v1999
    %2001 = vmatmul.bf16.gmra.mxu0 %v1703
    %v2002 = vpop.f32.mrf.mxu0
    %v2003 = vadd.f32 %v1455, %v2002
    %v2004 = vpop.f32.mrf.mxu0
    %v2005 = vadd.f32 %v1455, %v2004
    %2006 = vmatmul.bf16.gmra.mxu0 %v1706
    %v2007 = vpop.f32.mrf.mxu0
    %v2008 = vadd.f32 %v1455, %v2007
    %v2009 = vpop.f32.mrf.mxu0
    %v2010 = vadd.f32 %v1455, %v2009
    %2011 = vmatmul.bf16.gmra.mxu0 %v1709
    %v2012 = vpop.f32.mrf.mxu0
    %v2013 = vadd.f32 %v1455, %v2012
    %v2014 = vpop.f32.mrf.mxu0
    %v2015 = vadd.f32 %v1455, %v2014
    %2016 = vmatmul.bf16.gmra.mxu0 %v1712
    %v2017 = vpop.f32.mrf.mxu0
    %v2018 = vadd.f32 %v1455, %v2017
    %v2019 = vpop.f32.mrf.mxu0
    %v2020 = vadd.f32 %v1455, %v2019
    %2021 = vmatmul.bf16.gmra.mxu0 %v1715
    %v2022 = vpop.f32.mrf.mxu0
    %v2023 = vadd.f32 %v1455, %v2022
    %v2024 = vpop.f32.mrf.mxu0
    %v2025 = vadd.f32 %v1455, %v2024
    %2026 = vmatmul.bf16.gmra.mxu0 %v1718
    %v2027 = vpop.f32.mrf.mxu0
    %v2028 = vadd.f32 %v1455, %v2027
    %v2029 = vpop.f32.mrf.mxu0
    %v2030 = vadd.f32 %v1455, %v2029
    %2031 = vmatmul.bf16.gmra.mxu0 %v1721
    %v2032 = vpop.f32.mrf.mxu0
    %v2033 = vadd.f32 %v1455, %v2032
    %v2034 = vpop.f32.mrf.mxu0
    %v2035 = vadd.f32 %v1455, %v2034
    %2036 = vmatmul.bf16.gmra.mxu0 %v1724
    %v2037 = vpop.f32.mrf.mxu0
    %v2038 = vadd.f32 %v1455, %v2037
    %v2039 = vpop.f32.mrf.mxu0
    %v2040 = vadd.f32 %v1455, %v2039
    %2041 = vmatmul.bf16.gmra.mxu0 %v1727
    %v2042 = vpop.f32.mrf.mxu0
    %v2043 = vadd.f32 %v1455, %v2042
    %v2044 = vpop.f32.mrf.mxu0
    %v2045 = vadd.f32 %v1455, %v2044
    %2046 = vmatmul.bf16.gmra.mxu0 %v1730
    %v2047 = vpop.f32.mrf.mxu0
    %v2048 = vadd.f32 %v1455, %v2047
    %v2049 = vpop.f32.mrf.mxu0
    %v2050 = vadd.f32 %v1455, %v2049
    %2051 = vmatmul.bf16.gmra.mxu0 %v1733
    %v2052 = vpop.f32.mrf.mxu0
    %v2053 = vadd.f32 %v1455, %v2052
    %v2054 = vpop.f32.mrf.mxu0
    %v2055 = vadd.f32 %v1455, %v2054
    %2056 = vmatmul.bf16.gmra.mxu0 %v1736
    %v2057 = vpop.f32.mrf.mxu0
    %v2058 = vadd.f32 %v1455, %v2057
    %v2059 = vpop.f32.mrf.mxu0
    %v2060 = vadd.f32 %v1455, %v2059
    %2061 = vmatmul.bf16.gmra.mxu0 %v1739
    %v2062 = vpop.f32.mrf.mxu0
    %v2063 = vadd.f32 %v1455, %v2062
    %v2064 = vpop.f32.mrf.mxu0
    %v2065 = vadd.f32 %v1455, %v2064
    %2066 = vmatmul.bf16.gmra.mxu0 %v1742
    %v2067 = vpop.f32.mrf.mxu0
    %v2068 = vadd.f32 %v1455, %v2067
    %v2069 = vpop.f32.mrf.mxu0
    %v2070 = vadd.f32 %v1455, %v2069
    %2071 = vmatmul.bf16.gmra.mxu0 %v1745
    %v2072 = vpop.f32.mrf.mxu0
    %v2073 = vadd.f32 %v1455, %v2072
    %v2074 = vpop.f32.mrf.mxu0
    %v2075 = vadd.f32 %v1455, %v2074
    %2076 = vmatmul.bf16.gmra.mxu0 %v1748
    %v2077 = vpop.f32.mrf.mxu0
    %v2078 = vadd.f32 %v1455, %v2077
    %v2079 = vpop.f32.mrf.mxu0
    %v2080 = vadd.f32 %v1455, %v2079
    %2081 = vmatmul.bf16.gmra.mxu0 %v1751
    %v2082 = vpop.f32.mrf.mxu0
    %v2083 = vadd.f32 %v1455, %v2082
    %v2084 = vpop.f32.mrf.mxu0
    %v2085 = vadd.f32 %v1455, %v2084
    %2086 = vmatmul.bf16.gmra.mxu0 %v1754
    %v2087 = vpop.f32.mrf.mxu0
    %v2088 = vadd.f32 %v1455, %v2087
    %v2089 = vpop.f32.mrf.mxu0
    %v2090 = vadd.f32 %v1455, %v2089
    %2091 = vmatmul.bf16.gmra.mxu0 %v1757
    %v2092 = vpop.f32.mrf.mxu0
    %v2093 = vadd.f32 %v1455, %v2092
    %v2094 = vpop.f32.mrf.mxu0
    %v2095 = vadd.f32 %v1455, %v2094
    %2096 = vdwg.mxu0
    %2097 = vmatpush.bf16.msra.mxu0 0
    %2098 = vmatpush.bf16.msra.mxu0 0
    %2099 = vmatpush.bf16.msra.mxu0 0
    %2100 = vmatpush.bf16.msra.mxu0 0
    %2101 = vmatpush.bf16.msra.mxu0 0
    %2102 = vmatpush.bf16.msra.mxu0 0
    %2103 = vmatpush.bf16.msra.mxu0 %v1652
    %2104 = vmatpush.bf16.msra.mxu0 %v1648
    %2105 = vmatmul.bf16.gmra.mxu0 %v1664
    %v2106 = vpop.f32.mrf.mxu0
    %v2107 = vadd.f32 %v1456, %v2106
    %v2108 = vpop.f32.mrf.mxu0
    %v2109 = vadd.f32 %v1456, %v2108
    %2110 = vmatmul.bf16.gmra.mxu0 %v1667
    %v2111 = vpop.f32.mrf.mxu0
    %v2112 = vadd.f32 %v1456, %v2111
    %v2113 = vpop.f32.mrf.mxu0
    %v2114 = vadd.f32 %v1456, %v2113
    %2115 = vmatmul.bf16.gmra.mxu0 %v1670
    %v2116 = vpop.f32.mrf.mxu0
    %v2117 = vadd.f32 %v1456, %v2116
    %v2118 = vpop.f32.mrf.mxu0
    %v2119 = vadd.f32 %v1456, %v2118
    %2120 = vmatmul.bf16.gmra.mxu0 %v1673
    %v2121 = vpop.f32.mrf.mxu0
    %v2122 = vadd.f32 %v1456, %v2121
    %v2123 = vpop.f32.mrf.mxu0
    %v2124 = vadd.f32 %v1456, %v2123
    %2125 = vmatmul.bf16.gmra.mxu0 %v1676
    %v2126 = vpop.f32.mrf.mxu0
    %v2127 = vadd.f32 %v1456, %v2126
    %v2128 = vpop.f32.mrf.mxu0
    %v2129 = vadd.f32 %v1456, %v2128
    %2130 = vmatmul.bf16.gmra.mxu0 %v1679
    %v2131 = vpop.f32.mrf.mxu0
    %v2132 = vadd.f32 %v1456, %v2131
    %v2133 = vpop.f32.mrf.mxu0
    %v2134 = vadd.f32 %v1456, %v2133
    %2135 = vmatmul.bf16.gmra.mxu0 %v1682
    %v2136 = vpop.f32.mrf.mxu0
    %v2137 = vadd.f32 %v1456, %v2136
    %v2138 = vpop.f32.mrf.mxu0
    %v2139 = vadd.f32 %v1456, %v2138
    %2140 = vmatmul.bf16.gmra.mxu0 %v1685
    %v2141 = vpop.f32.mrf.mxu0
    %v2142 = vadd.f32 %v1456, %v2141
    %v2143 = vpop.f32.mrf.mxu0
    %v2144 = vadd.f32 %v1456, %v2143
    %2145 = vmatmul.bf16.gmra.mxu0 %v1688
    %v2146 = vpop.f32.mrf.mxu0
    %v2147 = vadd.f32 %v1456, %v2146
    %v2148 = vpop.f32.mrf.mxu0
    %v2149 = vadd.f32 %v1456, %v2148
    %2150 = vmatmul.bf16.gmra.mxu0 %v1691
    %v2151 = vpop.f32.mrf.mxu0
    %v2152 = vadd.f32 %v1456, %v2151
    %v2153 = vpop.f32.mrf.mxu0
    %v2154 = vadd.f32 %v1456, %v2153
    %2155 = vmatmul.bf16.gmra.mxu0 %v1694
    %v2156 = vpop.f32.mrf.mxu0
    %v2157 = vadd.f32 %v1456, %v2156
    %v2158 = vpop.f32.mrf.mxu0
    %v2159 = vadd.f32 %v1456, %v2158
    %2160 = vmatmul.bf16.gmra.mxu0 %v1697
    %v2161 = vpop.f32.mrf.mxu0
    %v2162 = vadd.f32 %v1456, %v2161
    %v2163 = vpop.f32.mrf.mxu0
    %v2164 = vadd.f32 %v1456, %v2163
    %2165 = vmatmul.bf16.gmra.mxu0 %v1700
    %v2166 = vpop.f32.mrf.mxu0
    %v2167 = vadd.f32 %v1456, %v2166
    %v2168 = vpop.f32.mrf.mxu0
    %v2169 = vadd.f32 %v1456, %v2168
    %2170 = vmatmul.bf16.gmra.mxu0 %v1703
    %v2171 = vpop.f32.mrf.mxu0
    %v2172 = vadd.f32 %v1456, %v2171
    %v2173 = vpop.f32.mrf.mxu0
    %v2174 = vadd.f32 %v1456, %v2173
    %2175 = vmatmul.bf16.gmra.mxu0 %v1706
    %v2176 = vpop.f32.mrf.mxu0
    %v2177 = vadd.f32 %v1456, %v2176
    %v2178 = vpop.f32.mrf.mxu0
    %v2179 = vadd.f32 %v1456, %v2178
    %2180 = vmatmul.bf16.gmra.mxu0 %v1709
    %v2181 = vpop.f32.mrf.mxu0
    %v2182 = vadd.f32 %v1456, %v2181
    %v2183 = vpop.f32.mrf.mxu0
    %v2184 = vadd.f32 %v1456, %v2183
    %2185 = vmatmul.bf16.gmra.mxu0 %v1712
    %v2186 = vpop.f32.mrf.mxu0
    %v2187 = vadd.f32 %v1456, %v2186
    %v2188 = vpop.f32.mrf.mxu0
    %v2189 = vadd.f32 %v1456, %v2188
    %2190 = vmatmul.bf16.gmra.mxu0 %v1715
    %v2191 = vpop.f32.mrf.mxu0
    %v2192 = vadd.f32 %v1456, %v2191
    %v2193 = vpop.f32.mrf.mxu0
    %v2194 = vadd.f32 %v1456, %v2193
    %2195 = vmatmul.bf16.gmra.mxu0 %v1718
    %v2196 = vpop.f32.mrf.mxu0
    %v2197 = vadd.f32 %v1456, %v2196
    %v2198 = vpop.f32.mrf.mxu0
    %v2199 = vadd.f32 %v1456, %v2198
    %2200 = vmatmul.bf16.gmra.mxu0 %v1721
    %v2201 = vpop.f32.mrf.mxu0
    %v2202 = vadd.f32 %v1456, %v2201
    %v2203 = vpop.f32.mrf.mxu0
    %v2204 = vadd.f32 %v1456, %v2203
    %2205 = vmatmul.bf16.gmra.mxu0 %v1724
    %v2206 = vpop.f32.mrf.mxu0
    %v2207 = vadd.f32 %v1456, %v2206
    %v2208 = vpop.f32.mrf.mxu0
    %v2209 = vadd.f32 %v1456, %v2208
    %2210 = vmatmul.bf16.gmra.mxu0 %v1727
    %v2211 = vpop.f32.mrf.mxu0
    %v2212 = vadd.f32 %v1456, %v2211
    %v2213 = vpop.f32.mrf.mxu0
    %v2214 = vadd.f32 %v1456, %v2213
    %2215 = vmatmul.bf16.gmra.mxu0 %v1730
    %v2216 = vpop.f32.mrf.mxu0
    %v2217 = vadd.f32 %v1456, %v2216
    %v2218 = vpop.f32.mrf.mxu0
    %v2219 = vadd.f32 %v1456, %v2218
    %2220 = vmatmul.bf16.gmra.mxu0 %v1733
    %v2221 = vpop.f32.mrf.mxu0
    %v2222 = vadd.f32 %v1456, %v2221
    %v2223 = vpop.f32.mrf.mxu0
    %v2224 = vadd.f32 %v1456, %v2223
    %2225 = vmatmul.bf16.gmra.mxu0 %v1736
    %v2226 = vpop.f32.mrf.mxu0
    %v2227 = vadd.f32 %v1456, %v2226
    %v2228 = vpop.f32.mrf.mxu0
    %v2229 = vadd.f32 %v1456, %v2228
    %2230 = vmatmul.bf16.gmra.mxu0 %v1739
    %v2231 = vpop.f32.mrf.mxu0
    %v2232 = vadd.f32 %v1456, %v2231
    %v2233 = vpop.f32.mrf.mxu0
    %v2234 = vadd.f32 %v1456, %v2233
    %2235 = vmatmul.bf16.gmra.mxu0 %v1742
    %v2236 = vpop.f32.mrf.mxu0
    %v2237 = vadd.f32 %v1456, %v2236
    %v2238 = vpop.f32.mrf.mxu0
    %v2239 = vadd.f32 %v1456, %v2238
    %2240 = vmatmul.bf16.gmra.mxu0 %v1745
    %v2241 = vpop.f32.mrf.mxu0
    %v2242 = vadd.f32 %v1456, %v2241
    %v2243 = vpop.f32.mrf.mxu0
    %v2244 = vadd.f32 %v1456, %v2243
    %2245 = vmatmul.bf16.gmra.mxu0 %v1748
    %v2246 = vpop.f32.mrf.mxu0
    %v2247 = vadd.f32 %v1456, %v2246
    %v2248 = vpop.f32.mrf.mxu0
    %v2249 = vadd.f32 %v1456, %v2248
    %2250 = vmatmul.bf16.gmra.mxu0 %v1751
    %v2251 = vpop.f32.mrf.mxu0
    %v2252 = vadd.f32 %v1456, %v2251
    %v2253 = vpop.f32.mrf.mxu0
    %v2254 = vadd.f32 %v1456, %v2253
    %2255 = vmatmul.bf16.gmra.mxu0 %v1754
    %v2256 = vpop.f32.mrf.mxu0
    %v2257 = vadd.f32 %v1456, %v2256
    %v2258 = vpop.f32.mrf.mxu0
    %v2259 = vadd.f32 %v1456, %v2258
    %2260 = vmatmul.bf16.gmra.mxu0 %v1757
    %v2261 = vpop.f32.mrf.mxu0
    %v2262 = vadd.f32 %v1456, %v2261
    %v2263 = vpop.f32.mrf.mxu0
    %v2264 = vadd.f32 %v1456, %v2263
    %2265 = vdwg.mxu0
    %2266 = vmatpush.bf16.msra.mxu0 0
    %2267 = vmatpush.bf16.msra.mxu0 0
    %2268 = vmatpush.bf16.msra.mxu0 0
    %2269 = vmatpush.bf16.msra.mxu0 0
    %2270 = vmatpush.bf16.msra.mxu0 0
    %2271 = vmatpush.bf16.msra.mxu0 0
    %2272 = vmatpush.bf16.msra.mxu0 %v1653
    %2273 = vmatpush.bf16.msra.mxu0 %v1649
    %2274 = vmatmul.bf16.gmra.mxu0 %v1664
    %v2275 = vpop.f32.mrf.mxu0
    %v2276 = vadd.f32 %v1457, %v2275
    %v2277 = vpop.f32.mrf.mxu0
    %v2278 = vadd.f32 %v1457, %v2277
    %2279 = vmatmul.bf16.gmra.mxu0 %v1667
    %v2280 = vpop.f32.mrf.mxu0
    %v2281 = vadd.f32 %v1457, %v2280
    %v2282 = vpop.f32.mrf.mxu0
    %v2283 = vadd.f32 %v1457, %v2282
    %2284 = vmatmul.bf16.gmra.mxu0 %v1670
    %v2285 = vpop.f32.mrf.mxu0
    %v2286 = vadd.f32 %v1457, %v2285
    %v2287 = vpop.f32.mrf.mxu0
    %v2288 = vadd.f32 %v1457, %v2287
    %2289 = vmatmul.bf16.gmra.mxu0 %v1673
    %v2290 = vpop.f32.mrf.mxu0
    %v2291 = vadd.f32 %v1457, %v2290
    %v2292 = vpop.f32.mrf.mxu0
    %v2293 = vadd.f32 %v1457, %v2292
    %2294 = vmatmul.bf16.gmra.mxu0 %v1676
    %v2295 = vpop.f32.mrf.mxu0
    %v2296 = vadd.f32 %v1457, %v2295
    %v2297 = vpop.f32.mrf.mxu0
    %v2298 = vadd.f32 %v1457, %v2297
    %2299 = vmatmul.bf16.gmra.mxu0 %v1679
    %v2300 = vpop.f32.mrf.mxu0
    %v2301 = vadd.f32 %v1457, %v2300
    %v2302 = vpop.f32.mrf.mxu0
    %v2303 = vadd.f32 %v1457, %v2302
    %2304 = vmatmul.bf16.gmra.mxu0 %v1682
    %v2305 = vpop.f32.mrf.mxu0
    %v2306 = vadd.f32 %v1457, %v2305
    %v2307 = vpop.f32.mrf.mxu0
    %v2308 = vadd.f32 %v1457, %v2307
    %2309 = vmatmul.bf16.gmra.mxu0 %v1685
    %v2310 = vpop.f32.mrf.mxu0
    %v2311 = vadd.f32 %v1457, %v2310
    %v2312 = vpop.f32.mrf.mxu0
    %v2313 = vadd.f32 %v1457, %v2312
    %2314 = vmatmul.bf16.gmra.mxu0 %v1688
    %v2315 = vpop.f32.mrf.mxu0
    %v2316 = vadd.f32 %v1457, %v2315
    %v2317 = vpop.f32.mrf.mxu0
    %v2318 = vadd.f32 %v1457, %v2317
    %2319 = vmatmul.bf16.gmra.mxu0 %v1691
    %v2320 = vpop.f32.mrf.mxu0
    %v2321 = vadd.f32 %v1457, %v2320
    %v2322 = vpop.f32.mrf.mxu0
    %v2323 = vadd.f32 %v1457, %v2322
    %2324 = vmatmul.bf16.gmra.mxu0 %v1694
    %v2325 = vpop.f32.mrf.mxu0
    %v2326 = vadd.f32 %v1457, %v2325
    %v2327 = vpop.f32.mrf.mxu0
    %v2328 = vadd.f32 %v1457, %v2327
    %2329 = vmatmul.bf16.gmra.mxu0 %v1697
    %v2330 = vpop.f32.mrf.mxu0
    %v2331 = vadd.f32 %v1457, %v2330
    %v2332 = vpop.f32.mrf.mxu0
    %v2333 = vadd.f32 %v1457, %v2332
    %2334 = vmatmul.bf16.gmra.mxu0 %v1700
    %v2335 = vpop.f32.mrf.mxu0
    %v2336 = vadd.f32 %v1457, %v2335
    %v2337 = vpop.f32.mrf.mxu0
    %v2338 = vadd.f32 %v1457, %v2337
    %2339 = vmatmul.bf16.gmra.mxu0 %v1703
    %v2340 = vpop.f32.mrf.mxu0
    %v2341 = vadd.f32 %v1457, %v2340
    %v2342 = vpop.f32.mrf.mxu0
    %v2343 = vadd.f32 %v1457, %v2342
    %2344 = vmatmul.bf16.gmra.mxu0 %v1706
    %v2345 = vpop.f32.mrf.mxu0
    %v2346 = vadd.f32 %v1457, %v2345
    %v2347 = vpop.f32.mrf.mxu0
    %v2348 = vadd.f32 %v1457, %v2347
    %2349 = vmatmul.bf16.gmra.mxu0 %v1709
    %v2350 = vpop.f32.mrf.mxu0
    %v2351 = vadd.f32 %v1457, %v2350
    %v2352 = vpop.f32.mrf.mxu0
    %v2353 = vadd.f32 %v1457, %v2352
    %2354 = vmatmul.bf16.gmra.mxu0 %v1712
    %v2355 = vpop.f32.mrf.mxu0
    %v2356 = vadd.f32 %v1457, %v2355
    %v2357 = vpop.f32.mrf.mxu0
    %v2358 = vadd.f32 %v1457, %v2357
    %2359 = vmatmul.bf16.gmra.mxu0 %v1715
    %v2360 = vpop.f32.mrf.mxu0
    %v2361 = vadd.f32 %v1457, %v2360
    %v2362 = vpop.f32.mrf.mxu0
    %v2363 = vadd.f32 %v1457, %v2362
    %2364 = vmatmul.bf16.gmra.mxu0 %v1718
    %v2365 = vpop.f32.mrf.mxu0
    %v2366 = vadd.f32 %v1457, %v2365
    %v2367 = vpop.f32.mrf.mxu0
    %v2368 = vadd.f32 %v1457, %v2367
    %2369 = vmatmul.bf16.gmra.mxu0 %v1721
    %v2370 = vpop.f32.mrf.mxu0
    %v2371 = vadd.f32 %v1457, %v2370
    %v2372 = vpop.f32.mrf.mxu0
    %v2373 = vadd.f32 %v1457, %v2372
    %2374 = vmatmul.bf16.gmra.mxu0 %v1724
    %v2375 = vpop.f32.mrf.mxu0
    %v2376 = vadd.f32 %v1457, %v2375
    %v2377 = vpop.f32.mrf.mxu0
    %v2378 = vadd.f32 %v1457, %v2377
    %2379 = vmatmul.bf16.gmra.mxu0 %v1727
    %v2380 = vpop.f32.mrf.mxu0
    %v2381 = vadd.f32 %v1457, %v2380
    %v2382 = vpop.f32.mrf.mxu0
    %v2383 = vadd.f32 %v1457, %v2382
    %2384 = vmatmul.bf16.gmra.mxu0 %v1730
    %v2385 = vpop.f32.mrf.mxu0
    %v2386 = vadd.f32 %v1457, %v2385
    %v2387 = vpop.f32.mrf.mxu0
    %v2388 = vadd.f32 %v1457, %v2387
    %2389 = vmatmul.bf16.gmra.mxu0 %v1733
    %v2390 = vpop.f32.mrf.mxu0
    %v2391 = vadd.f32 %v1457, %v2390
    %v2392 = vpop.f32.mrf.mxu0
    %v2393 = vadd.f32 %v1457, %v2392
    %2394 = vmatmul.bf16.gmra.mxu0 %v1736
    %v2395 = vpop.f32.mrf.mxu0
    %v2396 = vadd.f32 %v1457, %v2395
    %v2397 = vpop.f32.mrf.mxu0
    %v2398 = vadd.f32 %v1457, %v2397
    %2399 = vmatmul.bf16.gmra.mxu0 %v1739
    %v2400 = vpop.f32.mrf.mxu0
    %v2401 = vadd.f32 %v1457, %v2400
    %v2402 = vpop.f32.mrf.mxu0
    %v2403 = vadd.f32 %v1457, %v2402
    %2404 = vmatmul.bf16.gmra.mxu0 %v1742
    %v2405 = vpop.f32.mrf.mxu0
    %v2406 = vadd.f32 %v1457, %v2405
    %v2407 = vpop.f32.mrf.mxu0
    %v2408 = vadd.f32 %v1457, %v2407
    %2409 = vmatmul.bf16.gmra.mxu0 %v1745
    %v2410 = vpop.f32.mrf.mxu0
    %v2411 = vadd.f32 %v1457, %v2410
    %v2412 = vpop.f32.mrf.mxu0
    %v2413 = vadd.f32 %v1457, %v2412
    %2414 = vmatmul.bf16.gmra.mxu0 %v1748
    %v2415 = vpop.f32.mrf.mxu0
    %v2416 = vadd.f32 %v1457, %v2415
    %v2417 = vpop.f32.mrf.mxu0
    %v2418 = vadd.f32 %v1457, %v2417
    %2419 = vmatmul.bf16.gmra.mxu0 %v1751
    %v2420 = vpop.f32.mrf.mxu0
    %v2421 = vadd.f32 %v1457, %v2420
    %v2422 = vpop.f32.mrf.mxu0
    %v2423 = vadd.f32 %v1457, %v2422
    %2424 = vmatmul.bf16.gmra.mxu0 %v1754
    %v2425 = vpop.f32.mrf.mxu0
    %v2426 = vadd.f32 %v1457, %v2425
    %v2427 = vpop.f32.mrf.mxu0
    %v2428 = vadd.f32 %v1457, %v2427
    %2429 = vmatmul.bf16.gmra.mxu0 %v1757
    %v2430 = vpop.f32.mrf.mxu0
    %v2431 = vadd.f32 %v1457, %v2430
    %v2432 = vpop.f32.mrf.mxu0
    %v2433 = vadd.f32 %v1457, %v2432
    %2434 = vdwg.mxu0
    %v2435 = vmax.f32 %v1769, 0.0
    %v2436 = vmax.f32 %v1938, 0.0
    %v2437 = vmax.f32 %v2107, 0.0
    %v2438 = vmax.f32 %v2276, 0.0
    %v2439 = vmax.f32 %v1771, 0.0
    %v2440 = vmax.f32 %v1940, 0.0
    %v2441 = vmax.f32 %v2109, 0.0
    %v2442 = vmax.f32 %v2278, 0.0
    %v2443 = vmax.f32 %v1774, 0.0
    %v2444 = vmax.f32 %v1943, 0.0
    %v2445 = vmax.f32 %v2112, 0.0
    %v2446 = vmax.f32 %v2281, 0.0
    %v2447 = vmax.f32 %v1776, 0.0
    %v2448 = vmax.f32 %v1945, 0.0
    %v2449 = vmax.f32 %v2114, 0.0
    %v2450 = vmax.f32 %v2283, 0.0
    %v2451 = vmax.f32 %v1779, 0.0
    %v2452 = vmax.f32 %v1948, 0.0
    %v2453 = vmax.f32 %v2117, 0.0
    %v2454 = vmax.f32 %v2286, 0.0
    %v2455 = vmax.f32 %v1781, 0.0
    %v2456 = vmax.f32 %v1950, 0.0
    %v2457 = vmax.f32 %v2119, 0.0
    %v2458 = vmax.f32 %v2288, 0.0
    %v2459 = vmax.f32 %v1784, 0.0
    %v2460 = vmax.f32 %v1953, 0.0
    %v2461 = vmax.f32 %v2122, 0.0
    %v2462 = vmax.f32 %v2291, 0.0
    %v2463 = vmax.f32 %v1786, 0.0
    %v2464 = vmax.f32 %v1955, 0.0
    %v2465 = vmax.f32 %v2124, 0.0
    %v2466 = vmax.f32 %v2293, 0.0
    %v2467 = vmax.f32 %v1789, 0.0
    %v2468 = vmax.f32 %v1958, 0.0
    %v2469 = vmax.f32 %v2127, 0.0
    %v2470 = vmax.f32 %v2296, 0.0
    %v2471 = vmax.f32 %v1791, 0.0
    %v2472 = vmax.f32 %v1960, 0.0
    %v2473 = vmax.f32 %v2129, 0.0
    %v2474 = vmax.f32 %v2298, 0.0
    %v2475 = vmax.f32 %v1794, 0.0
    %v2476 = vmax.f32 %v1963, 0.0
    %v2477 = vmax.f32 %v2132, 0.0
    %v2478 = vmax.f32 %v2301, 0.0
    %v2479 = vmax.f32 %v1796, 0.0
    %v2480 = vmax.f32 %v1965, 0.0
    %v2481 = vmax.f32 %v2134, 0.0
    %v2482 = vmax.f32 %v2303, 0.0
    %v2483 = vmax.f32 %v1799, 0.0
    %v2484 = vmax.f32 %v1968, 0.0
    %v2485 = vmax.f32 %v2137, 0.0
    %v2486 = vmax.f32 %v2306, 0.0
    %v2487 = vmax.f32 %v1801, 0.0
    %v2488 = vmax.f32 %v1970, 0.0
    %v2489 = vmax.f32 %v2139, 0.0
    %v2490 = vmax.f32 %v2308, 0.0
    %v2491 = vmax.f32 %v1804, 0.0
    %v2492 = vmax.f32 %v1973, 0.0
    %v2493 = vmax.f32 %v2142, 0.0
    %v2494 = vmax.f32 %v2311, 0.0
    %v2495 = vmax.f32 %v1806, 0.0
    %v2496 = vmax.f32 %v1975, 0.0
    %v2497 = vmax.f32 %v2144, 0.0
    %v2498 = vmax.f32 %v2313, 0.0
    %v2499 = vmax.f32 %v1809, 0.0
    %v2500 = vmax.f32 %v1978, 0.0
    %v2501 = vmax.f32 %v2147, 0.0
    %v2502 = vmax.f32 %v2316, 0.0
    %v2503 = vmax.f32 %v1811, 0.0
    %v2504 = vmax.f32 %v1980, 0.0
    %v2505 = vmax.f32 %v2149, 0.0
    %v2506 = vmax.f32 %v2318, 0.0
    %v2507 = vmax.f32 %v1814, 0.0
    %v2508 = vmax.f32 %v1983, 0.0
    %v2509 = vmax.f32 %v2152, 0.0
    %v2510 = vmax.f32 %v2321, 0.0
    %v2511 = vmax.f32 %v1816, 0.0
    %v2512 = vmax.f32 %v1985, 0.0
    %v2513 = vmax.f32 %v2154, 0.0
    %v2514 = vmax.f32 %v2323, 0.0
    %v2515 = vmax.f32 %v1819, 0.0
    %v2516 = vmax.f32 %v1988, 0.0
    %v2517 = vmax.f32 %v2157, 0.0
    %v2518 = vmax.f32 %v2326, 0.0
    %v2519 = vmax.f32 %v1821, 0.0
    %v2520 = vmax.f32 %v1990, 0.0
    %v2521 = vmax.f32 %v2159, 0.0
    %v2522 = vmax.f32 %v2328, 0.0
    %v2523 = vmax.f32 %v1824, 0.0
    %v2524 = vmax.f32 %v1993, 0.0
    %v2525 = vmax.f32 %v2162, 0.0
    %v2526 = vmax.f32 %v2331, 0.0
    %v2527 = vmax.f32 %v1826, 0.0
    %v2528 = vmax.f32 %v1995, 0.0
    %v2529 = vmax.f32 %v2164, 0.0
    %v2530 = vmax.f32 %v2333, 0.0
    %v2531 = vmax.f32 %v1829, 0.0
    %v2532 = vmax.f32 %v1998, 0.0
    %v2533 = vmax.f32 %v2167, 0.0
    %v2534 = vmax.f32 %v2336, 0.0
    %v2535 = vmax.f32 %v1831, 0.0
    %v2536 = vmax.f32 %v2000, 0.0
    %v2537 = vmax.f32 %v2169, 0.0
    %v2538 = vmax.f32 %v2338, 0.0
    %v2539 = vmax.f32 %v1834, 0.0
    %v2540 = vmax.f32 %v2003, 0.0
    %v2541 = vmax.f32 %v2172, 0.0
    %v2542 = vmax.f32 %v2341, 0.0
    %v2543 = vmax.f32 %v1836, 0.0
    %v2544 = vmax.f32 %v2005, 0.0
    %v2545 = vmax.f32 %v2174, 0.0
    %v2546 = vmax.f32 %v2343, 0.0
    %v2547 = vmax.f32 %v1839, 0.0
    %v2548 = vmax.f32 %v2008, 0.0
    %v2549 = vmax.f32 %v2177, 0.0
    %v2550 = vmax.f32 %v2346, 0.0
    %v2551 = vmax.f32 %v1841, 0.0
    %v2552 = vmax.f32 %v2010, 0.0
    %v2553 = vmax.f32 %v2179, 0.0
    %v2554 = vmax.f32 %v2348, 0.0
    %v2555 = vmax.f32 %v1844, 0.0
    %v2556 = vmax.f32 %v2013, 0.0
    %v2557 = vmax.f32 %v2182, 0.0
    %v2558 = vmax.f32 %v2351, 0.0
    %v2559 = vmax.f32 %v1846, 0.0
    %v2560 = vmax.f32 %v2015, 0.0
    %v2561 = vmax.f32 %v2184, 0.0
    %v2562 = vmax.f32 %v2353, 0.0
    %v2563 = vmax.f32 %v1849, 0.0
    %v2564 = vmax.f32 %v2018, 0.0
    %v2565 = vmax.f32 %v2187, 0.0
    %v2566 = vmax.f32 %v2356, 0.0
    %v2567 = vmax.f32 %v1851, 0.0
    %v2568 = vmax.f32 %v2020, 0.0
    %v2569 = vmax.f32 %v2189, 0.0
    %v2570 = vmax.f32 %v2358, 0.0
    %v2571 = vmax.f32 %v1854, 0.0
    %v2572 = vmax.f32 %v2023, 0.0
    %v2573 = vmax.f32 %v2192, 0.0
    %v2574 = vmax.f32 %v2361, 0.0
    %v2575 = vmax.f32 %v1856, 0.0
    %v2576 = vmax.f32 %v2025, 0.0
    %v2577 = vmax.f32 %v2194, 0.0
    %v2578 = vmax.f32 %v2363, 0.0
    %v2579 = vmax.f32 %v1859, 0.0
    %v2580 = vmax.f32 %v2028, 0.0
    %v2581 = vmax.f32 %v2197, 0.0
    %v2582 = vmax.f32 %v2366, 0.0
    %v2583 = vmax.f32 %v1861, 0.0
    %v2584 = vmax.f32 %v2030, 0.0
    %v2585 = vmax.f32 %v2199, 0.0
    %v2586 = vmax.f32 %v2368, 0.0
    %v2587 = vmax.f32 %v1864, 0.0
    %v2588 = vmax.f32 %v2033, 0.0
    %v2589 = vmax.f32 %v2202, 0.0
    %v2590 = vmax.f32 %v2371, 0.0
    %v2591 = vmax.f32 %v1866, 0.0
    %v2592 = vmax.f32 %v2035, 0.0
    %v2593 = vmax.f32 %v2204, 0.0
    %v2594 = vmax.f32 %v2373, 0.0
    %v2595 = vmax.f32 %v1869, 0.0
    %v2596 = vmax.f32 %v2038, 0.0
    %v2597 = vmax.f32 %v2207, 0.0
    %v2598 = vmax.f32 %v2376, 0.0
    %v2599 = vmax.f32 %v1871, 0.0
    %v2600 = vmax.f32 %v2040, 0.0
    %v2601 = vmax.f32 %v2209, 0.0
    %v2602 = vmax.f32 %v2378, 0.0
    %v2603 = vmax.f32 %v1874, 0.0
    %v2604 = vmax.f32 %v2043, 0.0
    %v2605 = vmax.f32 %v2212, 0.0
    %v2606 = vmax.f32 %v2381, 0.0
    %v2607 = vmax.f32 %v1876, 0.0
    %v2608 = vmax.f32 %v2045, 0.0
    %v2609 = vmax.f32 %v2214, 0.0
    %v2610 = vmax.f32 %v2383, 0.0
    %v2611 = vmax.f32 %v1879, 0.0
    %v2612 = vmax.f32 %v2048, 0.0
    %v2613 = vmax.f32 %v2217, 0.0
    %v2614 = vmax.f32 %v2386, 0.0
    %v2615 = vmax.f32 %v1881, 0.0
    %v2616 = vmax.f32 %v2050, 0.0
    %v2617 = vmax.f32 %v2219, 0.0
    %v2618 = vmax.f32 %v2388, 0.0
    %v2619 = vmax.f32 %v1884, 0.0
    %v2620 = vmax.f32 %v2053, 0.0
    %v2621 = vmax.f32 %v2222, 0.0
    %v2622 = vmax.f32 %v2391, 0.0
    %v2623 = vmax.f32 %v1886, 0.0
    %v2624 = vmax.f32 %v2055, 0.0
    %v2625 = vmax.f32 %v2224, 0.0
    %v2626 = vmax.f32 %v2393, 0.0
    %v2627 = vmax.f32 %v1889, 0.0
    %v2628 = vmax.f32 %v2058, 0.0
    %v2629 = vmax.f32 %v2227, 0.0
    %v2630 = vmax.f32 %v2396, 0.0
    %v2631 = vmax.f32 %v1891, 0.0
    %v2632 = vmax.f32 %v2060, 0.0
    %v2633 = vmax.f32 %v2229, 0.0
    %v2634 = vmax.f32 %v2398, 0.0
    %v2635 = vmax.f32 %v1894, 0.0
    %v2636 = vmax.f32 %v2063, 0.0
    %v2637 = vmax.f32 %v2232, 0.0
    %v2638 = vmax.f32 %v2401, 0.0
    %v2639 = vmax.f32 %v1896, 0.0
    %v2640 = vmax.f32 %v2065, 0.0
    %v2641 = vmax.f32 %v2234, 0.0
    %v2642 = vmax.f32 %v2403, 0.0
    %v2643 = vmax.f32 %v1899, 0.0
    %v2644 = vmax.f32 %v2068, 0.0
    %v2645 = vmax.f32 %v2237, 0.0
    %v2646 = vmax.f32 %v2406, 0.0
    %v2647 = vmax.f32 %v1901, 0.0
    %v2648 = vmax.f32 %v2070, 0.0
    %v2649 = vmax.f32 %v2239, 0.0
    %v2650 = vmax.f32 %v2408, 0.0
    %v2651 = vmax.f32 %v1904, 0.0
    %v2652 = vmax.f32 %v2073, 0.0
    %v2653 = vmax.f32 %v2242, 0.0
    %v2654 = vmax.f32 %v2411, 0.0
    %v2655 = vmax.f32 %v1906, 0.0
    %v2656 = vmax.f32 %v2075, 0.0
    %v2657 = vmax.f32 %v2244, 0.0
    %v2658 = vmax.f32 %v2413, 0.0
    %v2659 = vmax.f32 %v1909, 0.0
    %v2660 = vmax.f32 %v2078, 0.0
    %v2661 = vmax.f32 %v2247, 0.0
    %v2662 = vmax.f32 %v2416, 0.0
    %v2663 = vmax.f32 %v1911, 0.0
    %v2664 = vmax.f32 %v2080, 0.0
    %v2665 = vmax.f32 %v2249, 0.0
    %v2666 = vmax.f32 %v2418, 0.0
    %v2667 = vmax.f32 %v1914, 0.0
    %v2668 = vmax.f32 %v2083, 0.0
    %v2669 = vmax.f32 %v2252, 0.0
    %v2670 = vmax.f32 %v2421, 0.0
    %v2671 = vmax.f32 %v1916, 0.0
    %v2672 = vmax.f32 %v2085, 0.0
    %v2673 = vmax.f32 %v2254, 0.0
    %v2674 = vmax.f32 %v2423, 0.0
    %v2675 = vmax.f32 %v1919, 0.0
    %v2676 = vmax.f32 %v2088, 0.0
    %v2677 = vmax.f32 %v2257, 0.0
    %v2678 = vmax.f32 %v2426, 0.0
    %v2679 = vmax.f32 %v1921, 0.0
    %v2680 = vmax.f32 %v2090, 0.0
    %v2681 = vmax.f32 %v2259, 0.0
    %v2682 = vmax.f32 %v2428, 0.0
    %v2683 = vmax.f32 %v1924, 0.0
    %v2684 = vmax.f32 %v2093, 0.0
    %v2685 = vmax.f32 %v2262, 0.0
    %v2686 = vmax.f32 %v2431, 0.0
    %v2687 = vmax.f32 %v1926, 0.0
    %v2688 = vmax.f32 %v2095, 0.0
    %v2689 = vmax.f32 %v2264, 0.0
    %v2690 = vmax.f32 %v2433, 0.0
    %v2691 = vld [vmem:[#allocation2] sm:$0xff]
    %v2692 = vadd.f32 %v2435, %v2439
    %v2693 = vadd.f32 %v2692, %v2443
    %v2694 = vadd.f32 %v2693, %v2447
    %v2695 = vadd.f32 %v2694, %v2451
    %v2696 = vadd.f32 %v2695, %v2455
    %v2697 = vadd.f32 %v2696, %v2459
    %v2698 = vadd.f32 %v2697, %v2463
    %v2699 = vadd.f32 %v2698, %v2467
    %v2700 = vadd.f32 %v2699, %v2471
    %v2701 = vadd.f32 %v2700, %v2475
    %v2702 = vadd.f32 %v2701, %v2479
    %v2703 = vadd.f32 %v2702, %v2483
    %v2704 = vadd.f32 %v2703, %v2487
    %v2705 = vadd.f32 %v2704, %v2491
    %v2706 = vadd.f32 %v2705, %v2495
    %v2707 = vadd.f32 %v2706, %v2499
    %v2708 = vadd.f32 %v2707, %v2503
    %v2709 = vadd.f32 %v2708, %v2507
    %v2710 = vadd.f32 %v2709, %v2511
    %v2711 = vadd.f32 %v2710, %v2515
    %v2712 = vadd.f32 %v2711, %v2519
    %v2713 = vadd.f32 %v2712, %v2523
    %v2714 = vadd.f32 %v2713, %v2527
    %v2715 = vadd.f32 %v2714, %v2531
    %v2716 = vadd.f32 %v2715, %v2535
    %v2717 = vadd.f32 %v2716, %v2539
    %v2718 = vadd.f32 %v2717, %v2543
    %v2719 = vadd.f32 %v2718, %v2547
    %v2720 = vadd.f32 %v2719, %v2551
    %v2721 = vadd.f32 %v2720, %v2555
    %v2722 = vadd.f32 %v2721, %v2559
    %v2723 = vrot.slane %v2722, 4
    %v2724 = vadd.f32 %v2722, %v2723
    %v2725 = vrot.slane %v2724, 2
    %v2726 = vadd.f32 %v2724, %v2725
    %v2727 = vrot.slane %v2726, 1
    %v2728 = vadd.f32 %v2726, %v2727
    %v2729 = vadd.f32 %v2436, %v2440
    %v2730 = vadd.f32 %v2729, %v2444
    %v2731 = vadd.f32 %v2730, %v2448
    %v2732 = vadd.f32 %v2731, %v2452
    %v2733 = vadd.f32 %v2732, %v2456
    %v2734 = vadd.f32 %v2733, %v2460
    %v2735 = vadd.f32 %v2734, %v2464
    %v2736 = vadd.f32 %v2735, %v2468
    %v2737 = vadd.f32 %v2736, %v2472
    %v2738 = vadd.f32 %v2737, %v2476
    %v2739 = vadd.f32 %v2738, %v2480
    %v2740 = vadd.f32 %v2739, %v2484
    %v2741 = vadd.f32 %v2740, %v2488
    %v2742 = vadd.f32 %v2741, %v2492
    %v2743 = vadd.f32 %v2742, %v2496
    %v2744 = vadd.f32 %v2743, %v2500
    %v2745 = vadd.f32 %v2744, %v2504
    %v2746 = vadd.f32 %v2745, %v2508
    %v2747 = vadd.f32 %v2746, %v2512
    %v2748 = vadd.f32 %v2747, %v2516
    %v2749 = vadd.f32 %v2748, %v2520
    %v2750 = vadd.f32 %v2749, %v2524
    %v2751 = vadd.f32 %v2750, %v2528
    %v2752 = vadd.f32 %v2751, %v2532
    %v2753 = vadd.f32 %v2752, %v2536
    %v2754 = vadd.f32 %v2753, %v2540
    %v2755 = vadd.f32 %v2754, %v2544
    %v2756 = vadd.f32 %v2755, %v2548
    %v2757 = vadd.f32 %v2756, %v2552
    %v2758 = vadd.f32 %v2757, %v2556
    %v2759 = vadd.f32 %v2758, %v2560
    %v2760 = vrot.slane %v2759, 4
    %v2761 = vadd.f32 %v2759, %v2760
    %v2762 = vrot.slane %v2761, 2
    %v2763 = vadd.f32 %v2761, %v2762
    %v2764 = vrot.slane %v2763, 1
    %v2765 = vadd.f32 %v2763, %v2764
    %v2766 = vadd.f32 %v2437, %v2441
    %v2767 = vadd.f32 %v2766, %v2445
    %v2768 = vadd.f32 %v2767, %v2449
    %v2769 = vadd.f32 %v2768, %v2453
    %v2770 = vadd.f32 %v2769, %v2457
    %v2771 = vadd.f32 %v2770, %v2461
    %v2772 = vadd.f32 %v2771, %v2465
    %v2773 = vadd.f32 %v2772, %v2469
    %v2774 = vadd.f32 %v2773, %v2473
    %v2775 = vadd.f32 %v2774, %v2477
    %v2776 = vadd.f32 %v2775, %v2481
    %v2777 = vadd.f32 %v2776, %v2485
    %v2778 = vadd.f32 %v2777, %v2489
    %v2779 = vadd.f32 %v2778, %v2493
    %v2780 = vadd.f32 %v2779, %v2497
    %v2781 = vadd.f32 %v2780, %v2501
    %v2782 = vadd.f32 %v2781, %v2505
    %v2783 = vadd.f32 %v2782, %v2509
    %v2784 = vadd.f32 %v2783, %v2513
    %v2785 = vadd.f32 %v2784, %v2517
    %v2786 = vadd.f32 %v2785, %v2521
    %v2787 = vadd.f32 %v2786, %v2525
    %v2788 = vadd.f32 %v2787, %v2529
    %v2789 = vadd.f32 %v2788, %v2533
    %v2790 = vadd.f32 %v2789, %v2537
    %v2791 = vadd.f32 %v2790, %v2541
    %v2792 = vadd.f32 %v2791, %v2545
    %v2793 = vadd.f32 %v2792, %v2549
    %v2794 = vadd.f32 %v2793, %v2553
    %v2795 = vadd.f32 %v2794, %v2557
    %v2796 = vadd.f32 %v2795, %v2561
    %v2797 = vrot.slane %v2796, 4
    %v2798 = vadd.f32 %v2796, %v2797
    %v2799 = vrot.slane %v2798, 2
    %v2800 = vadd.f32 %v2798, %v2799
    %v2801 = vrot.slane %v2800, 1
    %v2802 = vadd.f32 %v2800, %v2801
    %v2803 = vadd.f32 %v2438, %v2442
    %v2804 = vadd.f32 %v2803, %v2446
    %v2805 = vadd.f32 %v2804, %v2450
    %v2806 = vadd.f32 %v2805, %v2454
    %v2807 = vadd.f32 %v2806, %v2458
    %v2808 = vadd.f32 %v2807, %v2462
    %v2809 = vadd.f32 %v2808, %v2466
    %v2810 = vadd.f32 %v2809, %v2470
    %v2811 = vadd.f32 %v2810, %v2474
    %v2812 = vadd.f32 %v2811, %v2478
    %v2813 = vadd.f32 %v2812, %v2482
    %v2814 = vadd.f32 %v2813, %v2486
    %v2815 = vadd.f32 %v2814, %v2490
    %v2816 = vadd.f32 %v2815, %v2494
    %v2817 = vadd.f32 %v2816, %v2498
    %v2818 = vadd.f32 %v2817, %v2502
    %v2819 = vadd.f32 %v2818, %v2506
    %v2820 = vadd.f32 %v2819, %v2510
    %v2821 = vadd.f32 %v2820, %v2514
    %v2822 = vadd.f32 %v2821, %v2518
    %v2823 = vadd.f32 %v2822, %v2522
    %v2824 = vadd.f32 %v2823, %v2526
    %v2825 = vadd.f32 %v2824, %v2530
    %v2826 = vadd.f32 %v2825, %v2534
    %v2827 = vadd.f32 %v2826, %v2538
    %v2828 = vadd.f32 %v2827, %v2542
    %v2829 = vadd.f32 %v2828, %v2546
    %v2830 = vadd.f32 %v2829, %v2550
    %v2831 = vadd.f32 %v2830, %v2554
    %v2832 = vadd.f32 %v2831, %v2558
    %v2833 = vadd.f32 %v2832, %v2562
    %v2834 = vrot.slane %v2833, 4
    %v2835 = vadd.f32 %v2833, %v2834
    %v2836 = vrot.slane %v2835, 2
    %v2837 = vadd.f32 %v2835, %v2836
    %v2838 = vrot.slane %v2837, 1
    %v2839 = vadd.f32 %v2837, %v2838
    %v2840 = vadd.f32 %v2563, %v2567
    %v2841 = vadd.f32 %v2840, %v2571
    %v2842 = vadd.f32 %v2841, %v2575
    %v2843 = vadd.f32 %v2842, %v2579
    %v2844 = vadd.f32 %v2843, %v2583
    %v2845 = vadd.f32 %v2844, %v2587
    %v2846 = vadd.f32 %v2845, %v2591
    %v2847 = vadd.f32 %v2846, %v2595
    %v2848 = vadd.f32 %v2847, %v2599
    %v2849 = vadd.f32 %v2848, %v2603
    %v2850 = vadd.f32 %v2849, %v2607
    %v2851 = vadd.f32 %v2850, %v2611
    %v2852 = vadd.f32 %v2851, %v2615
    %v2853 = vadd.f32 %v2852, %v2619
    %v2854 = vadd.f32 %v2853, %v2623
    %v2855 = vadd.f32 %v2854, %v2627
    %v2856 = vadd.f32 %v2855, %v2631
    %v2857 = vadd.f32 %v2856, %v2635
    %v2858 = vadd.f32 %v2857, %v2639
    %v2859 = vadd.f32 %v2858, %v2643
    %v2860 = vadd.f32 %v2859, %v2647
    %v2861 = vadd.f32 %v2860, %v2651
    %v2862 = vadd.f32 %v2861, %v2655
    %v2863 = vadd.f32 %v2862, %v2659
    %v2864 = vadd.f32 %v2863, %v2663
    %v2865 = vadd.f32 %v2864, %v2667
    %v2866 = vadd.f32 %v2865, %v2671
    %v2867 = vadd.f32 %v2866, %v2675
    %v2868 = vadd.f32 %v2867, %v2679
    %v2869 = vadd.f32 %v2868, %v2683
    %v2870 = vadd.f32 %v2869, %v2687
    %v2871 = vrot.slane %v2870, 4
    %v2872 = vadd.f32 %v2870, %v2871
    %v2873 = vrot.slane %v2872, 2
    %v2874 = vadd.f32 %v2872, %v2873
    %v2875 = vrot.slane %v2874, 1
    %v2876 = vadd.f32 %v2874, %v2875
    %v2877 = vadd.f32 %v2564, %v2568
    %v2878 = vadd.f32 %v2877, %v2572
    %v2879 = vadd.f32 %v2878, %v2576
    %v2880 = vadd.f32 %v2879, %v2580
    %v2881 = vadd.f32 %v2880, %v2584
    %v2882 = vadd.f32 %v2881, %v2588
    %v2883 = vadd.f32 %v2882, %v2592
    %v2884 = vadd.f32 %v2883, %v2596
    %v2885 = vadd.f32 %v2884, %v2600
    %v2886 = vadd.f32 %v2885, %v2604
    %v2887 = vadd.f32 %v2886, %v2608
    %v2888 = vadd.f32 %v2887, %v2612
    %v2889 = vadd.f32 %v2888, %v2616
    %v2890 = vadd.f32 %v2889, %v2620
    %v2891 = vadd.f32 %v2890, %v2624
    %v2892 = vadd.f32 %v2891, %v2628
    %v2893 = vadd.f32 %v2892, %v2632
    %v2894 = vadd.f32 %v2893, %v2636
    %v2895 = vadd.f32 %v2894, %v2640
    %v2896 = vadd.f32 %v2895, %v2644
    %v2897 = vadd.f32 %v2896, %v2648
    %v2898 = vadd.f32 %v2897, %v2652
    %v2899 = vadd.f32 %v2898, %v2656
    %v2900 = vadd.f32 %v2899, %v2660
    %v2901 = vadd.f32 %v2900, %v2664
    %v2902 = vadd.f32 %v2901, %v2668
    %v2903 = vadd.f32 %v2902, %v2672
    %v2904 = vadd.f32 %v2903, %v2676
    %v2905 = vadd.f32 %v2904, %v2680
    %v2906 = vadd.f32 %v2905, %v2684
    %v2907 = vadd.f32 %v2906, %v2688
    %v2908 = vrot.slane %v2907, 4
    %v2909 = vadd.f32 %v2907, %v2908
    %v2910 = vrot.slane %v2909, 2
    %v2911 = vadd.f32 %v2909, %v2910
    %v2912 = vrot.slane %v2911, 1
    %v2913 = vadd.f32 %v2911, %v2912
    %v2914 = vadd.f32 %v2565, %v2569
    %v2915 = vadd.f32 %v2914, %v2573
    %v2916 = vadd.f32 %v2915, %v2577
    %v2917 = vadd.f32 %v2916, %v2581
    %v2918 = vadd.f32 %v2917, %v2585
    %v2919 = vadd.f32 %v2918, %v2589
    %v2920 = vadd.f32 %v2919, %v2593
    %v2921 = vadd.f32 %v2920, %v2597
    %v2922 = vadd.f32 %v2921, %v2601
    %v2923 = vadd.f32 %v2922, %v2605
    %v2924 = vadd.f32 %v2923, %v2609
    %v2925 = vadd.f32 %v2924, %v2613
    %v2926 = vadd.f32 %v2925, %v2617
    %v2927 = vadd.f32 %v2926, %v2621
    %v2928 = vadd.f32 %v2927, %v2625
    %v2929 = vadd.f32 %v2928, %v2629
    %v2930 = vadd.f32 %v2929, %v2633
    %v2931 = vadd.f32 %v2930, %v2637
    %v2932 = vadd.f32 %v2931, %v2641
    %v2933 = vadd.f32 %v2932, %v2645
    %v2934 = vadd.f32 %v2933, %v2649
    %v2935 = vadd.f32 %v2934, %v2653
    %v2936 = vadd.f32 %v2935, %v2657
    %v2937 = vadd.f32 %v2936, %v2661
    %v2938 = vadd.f32 %v2937, %v2665
    %v2939 = vadd.f32 %v2938, %v2669
    %v2940 = vadd.f32 %v2939, %v2673
    %v2941 = vadd.f32 %v2940, %v2677
    %v2942 = vadd.f32 %v2941, %v2681
    %v2943 = vadd.f32 %v2942, %v2685
    %v2944 = vadd.f32 %v2943, %v2689
    %v2945 = vrot.slane %v2944, 4
    %v2946 = vadd.f32 %v2944, %v2945
    %v2947 = vrot.slane %v2946, 2
    %v2948 = vadd.f32 %v2946, %v2947
    %v2949 = vrot.slane %v2948, 1
    %v2950 = vadd.f32 %v2948, %v2949
    %v2951 = vadd.f32 %v2566, %v2570
    %v2952 = vadd.f32 %v2951, %v2574
    %v2953 = vadd.f32 %v2952, %v2578
    %v2954 = vadd.f32 %v2953, %v2582
    %v2955 = vadd.f32 %v2954, %v2586
    %v2956 = vadd.f32 %v2955, %v2590
    %v2957 = vadd.f32 %v2956, %v2594
    %v2958 = vadd.f32 %v2957, %v2598
    %v2959 = vadd.f32 %v2958, %v2602
    %v2960 = vadd.f32 %v2959, %v2606
    %v2961 = vadd.f32 %v2960, %v2610
    %v2962 = vadd.f32 %v2961, %v2614
    %v2963 = vadd.f32 %v2962, %v2618
    %v2964 = vadd.f32 %v2963, %v2622
    %v2965 = vadd.f32 %v2964, %v2626
    %v2966 = vadd.f32 %v2965, %v2630
    %v2967 = vadd.f32 %v2966, %v2634
    %v2968 = vadd.f32 %v2967, %v2638
    %v2969 = vadd.f32 %v2968, %v2642
    %v2970 = vadd.f32 %v2969, %v2646
    %v2971 = vadd.f32 %v2970, %v2650
    %v2972 = vadd.f32 %v2971, %v2654
    %v2973 = vadd.f32 %v2972, %v2658
    %v2974 = vadd.f32 %v2973, %v2662
    %v2975 = vadd.f32 %v2974, %v2666
    %v2976 = vadd.f32 %v2975, %v2670
    %v2977 = vadd.f32 %v2976, %v2674
    %v2978 = vadd.f32 %v2977, %v2678
    %v2979 = vadd.f32 %v2978, %v2682
    %v2980 = vadd.f32 %v2979, %v2686
    %v2981 = vadd.f32 %v2980, %v2690
    %v2982 = vrot.slane %v2981, 4
    %v2983 = vadd.f32 %v2981, %v2982
    %v2984 = vrot.slane %v2983, 2
    %v2985 = vadd.f32 %v2983, %v2984
    %v2986 = vrot.slane %v2985, 1
    %v2987 = vadd.f32 %v2985, %v2986
    %v2996 = vrot.slane %v2765, 6
    %v2997 = vrot.slane %v2802, 4
    %v2998 = vrot.slane %v2839, 2
    %v2999 = vrot.slane %v2913, 6
    %v3000 = vrot.slane %v2950, 4
    %v3001 = vrot.slane %v2987, 2
    %vm3002 = vcmask 1041408
    %v3003 = vsel %vm3002, %v2728, %v2996
    %vm3004 = vcmask 1045508
    %v3005 = vsel %vm3004, %v2997, %v2998
    %vm3006 = vcmask 1043456
    %v3007 = vsel %vm3006, %v3003, %v3005
    %v3008 = vsel %vm3002, %v2876, %v2999
    %v3009 = vsel %vm3004, %v3000, %v3001
    %v3010 = vsel %vm3006, %v3008, %v3009
    %vm3011 = vcmask 1044484
    %v3012 = vsel %vm3011, %v3007, %v3007
    %vm3013 = vcmask 1046534
    %v3014 = vsel %vm3013, %v3007, %v3012
    %v3015 = vrot.slane %v3010, 7
    %vm3016 = vcmask 1041409
    %v3017 = vsel %vm3016, %v3015, %v3014
    %vm3018 = vcmask 1043459
    %v3019 = vsel %vm3018, %v3015, %v3017
    %vm3020 = vcmask 1045509
    %v3021 = vsel %vm3020, %v3015, %v3019
    %vm3022 = vcmask 1047559
    %v3023 = vsel %vm3022, %v3015, %v3021
    %v3025 = vadd.f32 %v2691, %v3023
    %3026 = vst [vmem:[#allocation2] sm:$0xff] %v3025
    // Predicated region
    $region66: #{visual_qa_forward.1} parent=1 // pred_check
      %p3027 = pneg %p52
    $region67: #{visual_qa_forward.1} parent=1 // pred_check_branch
      %3029 = sbr.rel (%p3027) target = $region69
    $region68: #{visual_qa_forward.1} parent=1 // pred_region
      %v3030 = vld [vmem:[#allocation2] sm:$0xff]
      %v3031 = vmul.f32 %v3030, 0.00390625
      %3033 = vst [vmem:[#allocation1] ss:$4 sm:$0xff] %v3031
      %v3034 = vld.sshfl [vmem:[#allocation1] sm:$0xff pattern:$0x73625140]
      %v3035 = vld.sshfl [vmem:[#allocation1 + $0x8] sm:$0xff pattern:$0x73625140]
      %v3036 = vld.sshfl [vmem:[#allocation1 + $0x10] sm:$0xff pattern:$0x73625140]
      %v3037 = vld.sshfl [vmem:[#allocation1 + $0x18] sm:$0xff pattern:$0x73625140]
      %v3042 = vpack.c.bf16 %v3034, %v3034
      %v3043 = vpack.c.bf16 %v3035, %v3035
      %v3044 = vpack.c.bf16 %v3036, %v3036
      %v3045 = vpack.c.bf16 %v3037, %v3037
      %v3046 = vld [vmem:[%s3] sm:$0xf]
      %v3047 = vld [vmem:[%s3 + $0x4] sm:$0xf]
      %v3048 = vld [vmem:[%s3 + $0x8] sm:$0xf]
      %v3049 = vld [vmem:[%s3 + $0xc] sm:$0xf]
      %v3050 = vld [vmem:[%s3 + $0x10] sm:$0xf]
      %v3051 = vld [vmem:[%s3 + $0x14] sm:$0xf]
      %v3052 = vld [vmem:[%s3 + $0x18] sm:$0xf]
      %v3053 = vld [vmem:[%s3 + $0x1c] sm:$0xf]
      %v3054 = vld [vmem:[%s3 + $0x20] sm:$0xf]
      %v3055 = vld [vmem:[%s3 + $0x24] sm:$0xf]
      %v3056 = vld [vmem:[%s3 + $0x28] sm:$0xf]
      %v3057 = vld [vmem:[%s3 + $0x2c] sm:$0xf]
      %v3058 = vld [vmem:[%s3 + $0x30] sm:$0xf]
      %v3059 = vld [vmem:[%s3 + $0x34] sm:$0xf]
      %v3060 = vld [vmem:[%s3 + $0x38] sm:$0xf]
      %v3061 = vld [vmem:[%s3 + $0x3c] sm:$0xf]
      %v3062 = vld [vmem:[%s3 + $0x40] sm:$0xf]
      %v3063 = vld [vmem:[%s3 + $0x44] sm:$0xf]
      %v3064 = vld [vmem:[%s3 + $0x48] sm:$0xf]
      %v3065 = vld [vmem:[%s3 + $0x4c] sm:$0xf]
      %v3066 = vld [vmem:[%s3 + $0x50] sm:$0xf]
      %v3067 = vld [vmem:[%s3 + $0x54] sm:$0xf]
      %v3068 = vld [vmem:[%s3 + $0x58] sm:$0xf]
      %v3069 = vld [vmem:[%s3 + $0x5c] sm:$0xf]
      %v3070 = vld [vmem:[%s3 + $0x60] sm:$0xf]
      %v3071 = vld [vmem:[%s3 + $0x64] sm:$0xf]
      %v3072 = vld [vmem:[%s3 + $0x68] sm:$0xf]
      %v3073 = vld [vmem:[%s3 + $0x6c] sm:$0xf]
      %v3074 = vld [vmem:[%s3 + $0x70] sm:$0xf]
      %v3075 = vld [vmem:[%s3 + $0x74] sm:$0xf]
      %v3076 = vld [vmem:[%s3 + $0x78] sm:$0xf]
      %v3077 = vld [vmem:[%s3 + $0x7c] sm:$0xf]
      %v3078 = vld [vmem:[%s3 + $0x80] sm:$0xf]
      %v3079 = vld [vmem:[%s3 + $0x84] sm:$0xf]
      %v3080 = vld [vmem:[%s3 + $0x88] sm:$0xf]
      %v3081 = vld [vmem:[%s3 + $0x8c] sm:$0xf]
      %v3082 = vld [vmem:[%s3 + $0x90] sm:$0xf]
      %v3083 = vld [vmem:[%s3 + $0x94] sm:$0xf]
      %v3084 = vld [vmem:[%s3 + $0x98] sm:$0xf]
      %v3085 = vld [vmem:[%s3 + $0x9c] sm:$0xf]
      %v3086 = vld [vmem:[%s3 + $0xa0] sm:$0xf]
      %v3087 = vld [vmem:[%s3 + $0xa4] sm:$0xf]
      %v3088 = vld [vmem:[%s3 + $0xa8] sm:$0xf]
      %v3089 = vld [vmem:[%s3 + $0xac] sm:$0xf]
      %v3090 = vld [vmem:[%s3 + $0xb0] sm:$0xf]
      %v3091 = vld [vmem:[%s3 + $0xb4] sm:$0xf]
      %v3092 = vld [vmem:[%s3 + $0xb8] sm:$0xf]
      %v3093 = vld [vmem:[%s3 + $0xbc] sm:$0xf]
      %v3094 = vld [vmem:[%s3 + $0xc0] sm:$0xf]
      %v3095 = vld [vmem:[%s3 + $0xc4] sm:$0xf]
      %v3096 = vld [vmem:[%s3 + $0xc8] sm:$0xf]
      %v3097 = vld [vmem:[%s3 + $0xcc] sm:$0xf]
      %v3098 = vld [vmem:[%s3 + $0xd0] sm:$0xf]
      %v3099 = vld [vmem:[%s3 + $0xd4] sm:$0xf]
      %v3100 = vld [vmem:[%s3 + $0xd8] sm:$0xf]
      %v3101 = vld [vmem:[%s3 + $0xdc] sm:$0xf]
      %v3102 = vld [vmem:[%s3 + $0xe0] sm:$0xf]
      %v3103 = vld [vmem:[%s3 + $0xe4] sm:$0xf]
      %v3104 = vld [vmem:[%s3 + $0xe8] sm:$0xf]
      %v3105 = vld [vmem:[%s3 + $0xec] sm:$0xf]
      %v3106 = vld [vmem:[%s3 + $0xf0] sm:$0xf]
      %v3107 = vld [vmem:[%s3 + $0xf4] sm:$0xf]
      %v3108 = vld [vmem:[%s3 + $0xf8] sm:$0xf]
      %v3109 = vld [vmem:[%s3 + $0xfc] sm:$0xf]
      %v3110 = vld [vmem:[%s4] sm:$0x1]
      %v3112 = vperm.slane %v3110, 0
      %v3178 = vunpack.c.l.b16 %v3046
      %v3179 = vunpack.c.l.b16 %v3047
      %v3180 = vunpack.c.l.b16 %v3048
      %v3181 = vunpack.c.l.b16 %v3049
      %v3182 = vunpack.c.l.b16 %v3050
      %v3183 = vunpack.c.l.b16 %v3051
      %v3184 = vunpack.c.l.b16 %v3052
      %v3185 = vunpack.c.l.b16 %v3053
      %v3186 = vunpack.c.l.b16 %v3054
      %v3187 = vunpack.c.l.b16 %v3055
      %v3188 = vunpack.c.l.b16 %v3056
      %v3189 = vunpack.c.l.b16 %v3057
      %v3190 = vunpack.c.l.b16 %v3058
      %v3191 = vunpack.c.l.b16 %v3059
      %v3192 = vunpack.c.l.b16 %v3060
      %v3193 = vunpack.c.l.b16 %v3061
      %v3194 = vunpack.c.l.b16 %v3062
      %v3195 = vunpack.c.l.b16 %v3063
      %v3196 = vunpack.c.l.b16 %v3064
      %v3197 = vunpack.c.l.b16 %v3065
      %v3198 = vunpack.c.l.b16 %v3066
      %v3199 = vunpack.c.l.b16 %v3067
      %v3200 = vunpack.c.l.b16 %v3068
      %v3201 = vunpack.c.l.b16 %v3069
      %v3202 = vunpack.c.l.b16 %v3070
      %v3203 = vunpack.c.l.b16 %v3071
      %v3204 = vunpack.c.l.b16 %v3072
      %v3205 = vunpack.c.l.b16 %v3073
      %v3206 = vunpack.c.l.b16 %v3074
      %v3207 = vunpack.c.l.b16 %v3075
      %v3208 = vunpack.c.l.b16 %v3076
      %v3209 = vunpack.c.l.b16 %v3077
      %v3210 = vunpack.c.l.b16 %v3078
      %v3211 = vunpack.c.l.b16 %v3079
      %v3212 = vunpack.c.l.b16 %v3080
      %v3213 = vunpack.c.l.b16 %v3081
      %v3214 = vunpack.c.l.b16 %v3082
      %v3215 = vunpack.c.l.b16 %v3083
      %v3216 = vunpack.c.l.b16 %v3084
      %v3217 = vunpack.c.l.b16 %v3085
      %v3218 = vunpack.c.l.b16 %v3086
      %v3219 = vunpack.c.l.b16 %v3087
      %v3220 = vunpack.c.l.b16 %v3088
      %v3221 = vunpack.c.l.b16 %v3089
      %v3222 = vunpack.c.l.b16 %v3090
      %v3223 = vunpack.c.l.b16 %v3091
      %v3224 = vunpack.c.l.b16 %v3092
      %v3225 = vunpack.c.l.b16 %v3093
      %v3226 = vunpack.c.l.b16 %v3094
      %v3227 = vunpack.c.l.b16 %v3095
      %v3228 = vunpack.c.l.b16 %v3096
      %v3229 = vunpack.c.l.b16 %v3097
      %v3230 = vunpack.c.l.b16 %v3098
      %v3231 = vunpack.c.l.b16 %v3099
      %v3232 = vunpack.c.l.b16 %v3100
      %v3233 = vunpack.c.l.b16 %v3101
      %v3234 = vunpack.c.l.b16 %v3102
      %v3235 = vunpack.c.l.b16 %v3103
      %v3236 = vunpack.c.l.b16 %v3104
      %v3237 = vunpack.c.l.b16 %v3105
      %v3238 = vunpack.c.l.b16 %v3106
      %v3239 = vunpack.c.l.b16 %v3107
      %v3240 = vunpack.c.l.b16 %v3108
      %v3241 = vunpack.c.l.b16 %v3109
      %v3242 = vpack.c.b16 %v3179, %v3178
      %v3243 = vpack.c.b16 %v3181, %v3180
      %v3244 = vpack.c.b16 %v3183, %v3182
      %v3245 = vpack.c.b16 %v3185, %v3184
      %v3246 = vpack.c.b16 %v3187, %v3186
      %v3247 = vpack.c.b16 %v3189, %v3188
      %v3248 = vpack.c.b16 %v3191, %v3190
      %v3249 = vpack.c.b16 %v3193, %v3192
      %v3250 = vpack.c.b16 %v3195, %v3194
      %v3251 = vpack.c.b16 %v3197, %v3196
      %v3252 = vpack.c.b16 %v3199, %v3198
      %v3253 = vpack.c.b16 %v3201, %v3200
      %v3254 = vpack.c.b16 %v3203, %v3202
      %v3255 = vpack.c.b16 %v3205, %v3204
      %v3256 = vpack.c.b16 %v3207, %v3206
      %v3257 = vpack.c.b16 %v3209, %v3208
      %v3258 = vpack.c.b16 %v3211, %v3210
      %v3259 = vpack.c.b16 %v3213, %v3212
      %v3260 = vpack.c.b16 %v3215, %v3214
      %v3261 = vpack.c.b16 %v3217, %v3216
      %v3262 = vpack.c.b16 %v3219, %v3218
      %v3263 = vpack.c.b16 %v3221, %v3220
      %v3264 = vpack.c.b16 %v3223, %v3222
      %v3265 = vpack.c.b16 %v3225, %v3224
      %v3266 = vpack.c.b16 %v3227, %v3226
      %v3267 = vpack.c.b16 %v3229, %v3228
      %v3268 = vpack.c.b16 %v3231, %v3230
      %v3269 = vpack.c.b16 %v3233, %v3232
      %v3270 = vpack.c.b16 %v3235, %v3234
      %v3271 = vpack.c.b16 %v3237, %v3236
      %v3272 = vpack.c.b16 %v3239, %v3238
      %v3273 = vpack.c.b16 %v3241, %v3240
      %3306 = vmatpush.bf16.msra.mxu0 %v3249
      %3307 = vmatpush.bf16.msra.mxu0 %v3248
      %3308 = vmatpush.bf16.msra.mxu0 %v3247
      %3309 = vmatpush.bf16.msra.mxu0 %v3246
      %3310 = vmatpush.bf16.msra.mxu0 %v3245
      %3311 = vmatpush.bf16.msra.mxu0 %v3244
      %3312 = vmatpush.bf16.msra.mxu0 %v3243
      %3313 = vmatpush.bf16.msra.mxu0 %v3242
      %3314 = vmatmul.bf16.gmra.mxu0 %v3042
      %v3315 = vpop.f32.mrf.mxu0
      %v3316 = vadd.f32 %v3112, %v3315
      %v3317 = vpop.f32.mrf.mxu0
      %3318 = vdwg.mxu0
      %3319 = vmatpush.bf16.msra.mxu0 %v3257
      %3320 = vmatpush.bf16.msra.mxu0 %v3256
      %3321 = vmatpush.bf16.msra.mxu0 %v3255
      %3322 = vmatpush.bf16.msra.mxu0 %v3254
      %3323 = vmatpush.bf16.msra.mxu0 %v3253
      %3324 = vmatpush.bf16.msra.mxu0 %v3252
      %3325 = vmatpush.bf16.msra.mxu0 %v3251
      %3326 = vmatpush.bf16.msra.mxu0 %v3250
      %3327 = vmatmul.bf16.gmra.mxu0 %v3043
      %v3328 = vpop.f32.mrf.mxu0
      %v3329 = vadd.f32 %v3316, %v3328
      %v3330 = vpop.f32.mrf.mxu0
      %3331 = vdwg.mxu0
      %3332 = vmatpush.bf16.msra.mxu0 %v3265
      %3333 = vmatpush.bf16.msra.mxu0 %v3264
      %3334 = vmatpush.bf16.msra.mxu0 %v3263
      %3335 = vmatpush.bf16.msra.mxu0 %v3262
      %3336 = vmatpush.bf16.msra.mxu0 %v3261
      %3337 = vmatpush.bf16.msra.mxu0 %v3260
      %3338 = vmatpush.bf16.msra.mxu0 %v3259
      %3339 = vmatpush.bf16.msra.mxu0 %v3258
      %3340 = vmatmul.bf16.gmra.mxu0 %v3044
      %v3341 = vpop.f32.mrf.mxu0
      %v3342 = vadd.f32 %v3329, %v3341
      %v3343 = vpop.f32.mrf.mxu0
      %3344 = vdwg.mxu0
      %3345 = vmatpush.bf16.msra.mxu0 %v3273
      %3346 = vmatpush.bf16.msra.mxu0 %v3272
      %3347 = vmatpush.bf16.msra.mxu0 %v3271
      %3348 = vmatpush.bf16.msra.mxu0 %v3270
      %3349 = vmatpush.bf16.msra.mxu0 %v3269
      %3350 = vmatpush.bf16.msra.mxu0 %v3268
      %3351 = vmatpush.bf16.msra.mxu0 %v3267
      %3352 = vmatpush.bf16.msra.mxu0 %v3266
      %3353 = vmatmul.bf16.gmra.mxu0 %v3045
      %v3354 = vpop.f32.mrf.mxu0
      %v3355 = vadd.f32 %v3342, %v3354
      %v3356 = vpop.f32.mrf.mxu0
      %3357 = vdwg.mxu0
      %v3358 = vmul.f32 %v3355, %v3355
      %v3359 = vsel %vm3002, %v3358, 0.0
      %3360 = vadd.xlane.f32.xlu0 %v3359
      %v3361 = vpop.xlane.xlu0 %3360
      %v3362 = vadd.f32 %v3361, 1e-12
      %v3363 = vrsqrt.pop %v3362
      %v3364 = vmul.f32 %v3363, %v3362
      %v3365 = vmul.f32 %v3364, %v3363
      %v3366 = vmul.f32 0.5, %v3365
      %v3367 = vsub.f32 1.5, %v3366
      %v3368 = vmul.f32 %v3363, %v3367
      %vm3369 = vweird.f32 %v3362
      %vm3370 = vweird.f32 %v3363
      %vm3371 = vmor %vm3369, %vm3370
      %v3372 = vsel %vm3371, %v3363, %v3368
      %v3373 = vmul.f32 %v3355, %v3372
      %v3374 = vld [vmem:[#allocation3] sm:$0x3]
      %v3375 = vmul.f32 %v3373, %v3374
      %v3376 = vtanh.pop %v3375
      %v3377 = vpack.c.bf16 %v3376, %v3376
      %v3378 = vld [vmem:[%s11] sm:$0xf]
      %v3379 = vld [vmem:[%s11 + $0x4] sm:$0xf]
      %v3380 = vld [vmem:[%s11 + $0x8] sm:$0xf]
      %v3381 = vld [vmem:[%s11 + $0xc] sm:$0xf]
      %v3382 = vld [vmem:[%s11 + $0x10] sm:$0xf]
      %v3383 = vld [vmem:[%s11 + $0x14] sm:$0xf]
      %v3384 = vld [vmem:[%s11 + $0x18] sm:$0xf]
      %v3385 = vld [vmem:[%s11 + $0x1c] sm:$0xf]
      %v3386 = vld [vmem:[%s11 + $0x20] sm:$0xf]
      %v3387 = vld [vmem:[%s11 + $0x24] sm:$0xf]
      %v3388 = vld [vmem:[%s11 + $0x28] sm:$0xf]
      %v3389 = vld [vmem:[%s11 + $0x2c] sm:$0xf]
      %v3390 = vld [vmem:[%s11 + $0x30] sm:$0xf]
      %v3391 = vld [vmem:[%s11 + $0x34] sm:$0xf]
      %v3392 = vld [vmem:[%s11 + $0x38] sm:$0xf]
      %v3393 = vld [vmem:[%s11 + $0x3c] sm:$0xf]
      %v3394 = vld [vmem:[%s12] sm:$0x1]
      %v3396 = vperm.slane %v3394, 0
      %v3414 = vunpack.c.l.b16 %v3378
      %v3415 = vunpack.c.l.b16 %v3379
      %v3416 = vunpack.c.l.b16 %v3380
      %v3417 = vunpack.c.l.b16 %v3381
      %v3418 = vunpack.c.l.b16 %v3382
      %v3419 = vunpack.c.l.b16 %v3383
      %v3420 = vunpack.c.l.b16 %v3384
      %v3421 = vunpack.c.l.b16 %v3385
      %v3422 = vunpack.c.l.b16 %v3386
      %v3423 = vunpack.c.l.b16 %v3387
      %v3424 = vunpack.c.l.b16 %v3388
      %v3425 = vunpack.c.l.b16 %v3389
      %v3426 = vunpack.c.l.b16 %v3390
      %v3427 = vunpack.c.l.b16 %v3391
      %v3428 = vunpack.c.l.b16 %v3392
      %v3429 = vunpack.c.l.b16 %v3393
      %v3430 = vpack.c.b16 %v3415, %v3414
      %v3431 = vpack.c.b16 %v3417, %v3416
      %v3432 = vpack.c.b16 %v3419, %v3418
      %v3433 = vpack.c.b16 %v3421, %v3420
      %v3434 = vpack.c.b16 %v3423, %v3422
      %v3435 = vpack.c.b16 %v3425, %v3424
      %v3436 = vpack.c.b16 %v3427, %v3426
      %v3437 = vpack.c.b16 %v3429, %v3428
      %3446 = vmatpush.bf16.msra.mxu0 %v3437
      %3447 = vmatpush.bf16.msra.mxu0 %v3436
      %3448 = vmatpush.bf16.msra.mxu0 %v3435
      %3449 = vmatpush.bf16.msra.mxu0 %v3434
      %3450 = vmatpush.bf16.msra.mxu0 %v3433
      %3451 = vmatpush.bf16.msra.mxu0 %v3432
      %3452 = vmatpush.bf16.msra.mxu0 %v3431
      %3453 = vmatpush.bf16.msra.mxu0 %v3430
      %3454 = vmatmul.bf16.gmra.mxu0 %v3377
      %v3455 = vpop.f32.mrf.mxu0
      %v3456 = vadd.f32 %v3396, %v3455
      %v3457 = vpop.f32.mrf.mxu0
      %3458 = vdwg.mxu0
      %v3459 = vtanh.pop %v3456
      %v3460 = vpack.c.bf16 %v3459, %v3459
      %v3461 = vld [vmem:[%s13] sm:$0xf]
      %v3462 = vld [vmem:[%s13 + $0x4] sm:$0xf]
      %v3463 = vld [vmem:[%s13 + $0x8] sm:$0xf]
      %v3464 = vld [vmem:[%s13 + $0xc] sm:$0xf]
      %v3465 = vld [vmem:[%s13 + $0x10] sm:$0xf]
      %v3466 = vld [vmem:[%s13 + $0x14] sm:$0xf]
      %v3467 = vld [vmem:[%s13 + $0x18] sm:$0xf]
      %v3468 = vld [vmem:[%s13 + $0x1c] sm:$0xf]
      %v3469 = vld [vmem:[%s13 + $0x20] sm:$0xf]
      %v3470 = vld [vmem:[%s13 + $0x24] sm:$0xf]
      %v3471 = vld [vmem:[%s13 + $0x28] sm:$0xf]
      %v3472 = vld [vmem:[%s13 + $0x2c] sm:$0xf]
      %v3473 = vld [vmem:[%s13 + $0x30] sm:$0xf]
      %v3474 = vld [vmem:[%s13 + $0x34] sm:$0xf]
      %v3475 = vld [vmem:[%s13 + $0x38] sm:$0xf]
      %v3476 = vld [vmem:[%s13 + $0x3c] sm:$0xf]
      %v3477 = vld [vmem:[%s14] sm:$0x1]
      %v3479 = vperm.slane %v3477, 0
      %v3497 = vunpack.c.l.b16 %v3461
      %v3498 = vunpack.c.l.b16 %v3462
      %v3499 = vunpack.c.l.b16 %v3463
      %v3500 = vunpack.c.l.b16 %v3464
      %v3501 = vunpack.c.l.b16 %v3465
      %v3502 = vunpack.c.l.b16 %v3466
      %v3503 = vunpack.c.l.b16 %v3467
      %v3504 = vunpack.c.l.b16 %v3468
      %v3505 = vunpack.c.l.b16 %v3469
      %v3506 = vunpack.c.l.b16 %v3470
      %v3507 = vunpack.c.l.b16 %v3471
      %v3508 = vunpack.c.l.b16 %v3472
      %v3509 = vunpack.c.l.b16 %v3473
      %v3510 = vunpack.c.l.b16 %v3474
      %v3511 = vunpack.c.l.b16 %v3475
      %v3512 = vunpack.c.l.b16 %v3476
      %v3513 = vpack.c.b16 %v3498, %v3497
      %v3514 = vpack.c.b16 %v3500, %v3499
      %v3515 = vpack.c.b16 %v3502, %v3501
      %v3516 = vpack.c.b16 %v3504, %v3503
      %v3517 = vpack.c.b16 %v3506, %v3505
      %v3518 = vpack.c.b16 %v3508, %v3507
      %v3519 = vpack.c.b16 %v3510, %v3509
      %v3520 = vpack.c.b16 %v3512, %v3511
      %3529 = vmatpush.bf16.msra.mxu0 %v3520
      %3530 = vmatpush.bf16.msra.mxu0 %v3519
      %3531 = vmatpush.bf16.msra.mxu0 %v3518
      %3532 = vmatpush.bf16.msra.mxu0 %v3517
      %3533 = vmatpush.bf16.msra.mxu0 %v3516
      %3534 = vmatpush.bf16.msra.mxu0 %v3515
      %3535 = vmatpush.bf16.msra.mxu0 %v3514
      %3536 = vmatpush.bf16.msra.mxu0 %v3513
      %3537 = vmatmul.bf16.gmra.mxu0 %v3460
      %v3538 = vpop.f32.mrf.mxu0
      %v3539 = vadd.f32 %v3479, %v3538
      %v3540 = vpop.f32.mrf.mxu0
      %3541 = vdwg.mxu0
      %3542 = vst [vmem:[#allocation4] sm:$0x3] %v3539
    $region69: #{visual_qa_forward.1} parent=1 // pred_fallthru
      _
    // Predicated region
    $region70: #{visual_qa_forward.1} parent=1 // pred_check
      _
    $region71: #{visual_qa_forward.1} parent=1 // pred_check_branch
      %3544 = sbr.rel (0) target = $region73
    $region72: #{visual_qa_forward.1} parent=1 // pred_region
      %3546 = vsyncadd [#allocation5], 0
      %s3548 = sshll.u32 [#allocation4], 4
      %s3549 = int_to_ptr.vmem [resolvable:$true] %s3548
      %s3550 = sshll.u32 %s15, 4
      %s3551 = int_to_ptr.hbm [resolvable:$true] %s3550
      %3553 = dma.vmem_to_hbm [thread:$0]  %s3549, 32, %s3551, [#allocation5]
    $region73: #{visual_qa_forward.1} parent=1 // pred_fallthru
      _
    // Predicated region
    $region74: #{visual_qa_forward.1} parent=1 // pred_check
      _
    $region75: #{visual_qa_forward.1} parent=1 // pred_check_branch
      %3555 = sbr.rel (0) target = $region77
    $region76: #{visual_qa_forward.1} parent=1 // pred_region
      %3557 = dma.done [#allocation5], 32
    $region77: #{visual_qa_forward.1} parent=1 // pred_fallthru
      _
    %3558 = vsyncpa [#allocation5], 1

</llo_original>
